<compile_context>
chip_gen: v7x
topology: tpu7x:2x2x1
jax: 0.10.0
libtpu: 0.0.40
codegen_flags: <defaults>
</compile_context>

<pallas_src>
import jax
import jax.numpy as jnp
from jax import lax
from jax.experimental import pallas as pl
from jax.experimental.pallas import tpu as pltpu

HIDDEN = [128, 256, 512, 1024, 28 * 28]
OUT_DIM = HIDDEN[-1]        # 784
OUT_PAD = 1024              # lane-dense padded output width (multiple of 128/256)
BN_EPS = 1e-5
NEG_SLOPE = 0.2


def _leaky_relu(x):
    return jnp.where(x >= 0, x, NEG_SLOPE * x)


def _round_up(x, m):
    return (x + m - 1) // m * m


# --------------------------------------------------------------------------
# Kernel: 5 matmuls (bf16 MXU inputs, f32 accumulation) + activations.
# BatchNorm is already folded into w2/b2, w3/b3, w4/b4 by the wrapper.
# --------------------------------------------------------------------------
def generator_kernel(z_ref,
                     w1_ref, b1_ref,
                     w2_ref, b2_ref,
                     w3_ref, b3_ref,
                     w4_ref, b4_ref,
                     w5_ref, b5_ref,
                     o_ref):
    # Linear(latent, 128) + LeakyReLU
    x = jnp.dot(z_ref[...].astype(jnp.bfloat16), w1_ref[...],
                preferred_element_type=jnp.float32) + b1_ref[...]
    x = _leaky_relu(x)

    # Linear(128, 256) [BN folded] + LeakyReLU  (Dropout = identity in eval)
    x = jnp.dot(x.astype(jnp.bfloat16), w2_ref[...],
                preferred_element_type=jnp.float32) + b2_ref[...]
    x = _leaky_relu(x)
    # TODO(synk): training-mode stochastic Dropout not implemented (identity in eval).

    # Linear(256, 512) [BN folded] + LeakyReLU
    x = jnp.dot(x.astype(jnp.bfloat16), w3_ref[...],
                preferred_element_type=jnp.float32) + b3_ref[...]
    x = _leaky_relu(x)

    # Linear(512, 1024) [BN folded] + LeakyReLU
    x = jnp.dot(x.astype(jnp.bfloat16), w4_ref[...],
                preferred_element_type=jnp.float32) + b4_ref[...]
    x = _leaky_relu(x)

    # Linear(1024, 784 padded to 1024) + Tanh
    x = jnp.dot(x.astype(jnp.bfloat16), w5_ref[...],
                preferred_element_type=jnp.float32) + b5_ref[...]
    o_ref[...] = jnp.tanh(x)


# --------------------------------------------------------------------------
# Parameter preparation (wrapper side): BN fold + output padding + bf16 cast.
# --------------------------------------------------------------------------
def _fold_bn_into_linear(w, b, gamma, beta, mean, var, eps=BN_EPS):
    s = gamma * lax.rsqrt(var + eps)          # (1, C_out)
    return w * s, (b - mean) * s + beta


def prepare_kernel_params(params, bns):
    (w1, b1), (w2, b2), (w3, b3), (w4, b4), (w5, b5) = params
    (g2, bt2, m2, v2), (g3, bt3, m3, v3), (g4, bt4, m4, v4) = bns
    w2, b2 = _fold_bn_into_linear(w2, b2, g2, bt2, m2, v2)
    w3, b3 = _fold_bn_into_linear(w3, b3, g3, bt3, m3, v3)
    w4, b4 = _fold_bn_into_linear(w4, b4, g4, bt4, m4, v4)
    # Pad final layer 784 -> OUT_PAD columns (zeros -> tanh(0)=0, sliced off later).
    w5 = jnp.pad(w5, ((0, 0), (0, OUT_PAD - OUT_DIM)))
    b5 = jnp.pad(b5, ((0, 0), (0, OUT_PAD - OUT_DIM)))
    weights = [w.astype(jnp.bfloat16) for w in (w1, w2, w3, w4, w5)]
    biases = [b.astype(jnp.float32) for b in (b1, b2, b3, b4, b5)]
    return weights, biases


# --------------------------------------------------------------------------
# Forward wrapper.
# --------------------------------------------------------------------------
def generator_forward(z, params, bns, *, tile_b=256):
    weights, biases = prepare_kernel_params(params, bns)

    B, latent = z.shape
    tb = min(tile_b, _round_up(B, 8))          # batch tile (sublane aligned)
    B_pad = _round_up(B, tb)
    z = z.astype(jnp.float32)
    if B_pad != B:
        z = jnp.pad(z, ((0, B_pad - B), (0, 0)))

    grid = (B_pad // tb,)

    def resident_spec(arr):
        # Full-array block, constant index map -> stays VMEM-resident across
        # batch tiles (no re-DMA per grid step).
        return pl.BlockSpec(arr.shape, lambda i: (0, 0))

    in_specs = [pl.BlockSpec((tb, latent), lambda i: (i, 0))]
    args = [z]
    for w, b in zip(weights, biases):
        in_specs += [resident_spec(w), resident_spec(b)]
        args += [w, b]

    dims = [latent] + HIDDEN[:-1] + [OUT_PAD]
    flops = 2 * B_pad * sum(a * b for a, b in zip(dims[:-1], dims[1:]))
    bytes_accessed = (sum(w.size * 2 for w in weights)
                      + sum(b.size * 4 for b in biases)
                      + B_pad * (latent + OUT_PAD) * 4)
    cost = pl.CostEstimate(flops=flops,
                           transcendentals=B_pad * OUT_PAD,
                           bytes_accessed=bytes_accessed)

    out = pl.pallas_call(
        generator_kernel,
        out_shape=jax.ShapeDtypeStruct((B_pad, OUT_PAD), jnp.float32),
        grid=grid,
        in_specs=in_specs,
        out_specs=pl.BlockSpec((tb, OUT_PAD), lambda i: (i, 0)),
        compiler_params=pltpu.CompilerParams(
            dimension_semantics=("parallel",),
            vmem_limit_bytes=32 << 20),
        cost_estimate=cost,
    )(*args)

    return out[:B, :OUT_DIM]


# --------------------------------------------------------------------------
# Parameter init (PyTorch-default-like) and references.
# --------------------------------------------------------------------------
def init_params(key, latent_dim):
    dims = [latent_dim] + HIDDEN
    params = []
    keys = jax.random.split(key, 2 * len(HIDDEN))
    for i in range(len(HIDDEN)):
        fan_in, fan_out = dims[i], dims[i + 1]
        bound = 1.0 / jnp.sqrt(fan_in)
        w = jax.random.uniform(keys[2 * i], (fan_in, fan_out),
                               minval=-bound, maxval=bound, dtype=jnp.float32)
        b = jax.random.uniform(keys[2 * i + 1], (1, fan_out),
                               minval=-bound, maxval=bound, dtype=jnp.float32)
        params.append((w, b))

    def bn_params(c):
        return (jnp.ones((1, c), jnp.float32),    # gamma
                jnp.zeros((1, c), jnp.float32),   # beta
                jnp.zeros((1, c), jnp.float32),   # running mean
                jnp.ones((1, c), jnp.float32))    # running var

    bns = [bn_params(HIDDEN[1]), bn_params(HIDDEN[2]), bn_params(HIDDEN[3])]
    return params, bns


def reference_forward(z, params, bns):
    """Exact eval-mode reference of the PyTorch module (pure f32)."""
    (w1, b1), (w2, b2), (w3, b3), (w4, b4), (w5, b5) = params
    (g2, bt2, m2, v2), (g3, bt3, m3, v3), (g4, bt4, m4, v4) = bns

    def bn(x, g, b, m, v):
        return (x - m) * lax.rsqrt(v + BN_EPS) * g + b

    x = _leaky_relu(z @ w1 + b1)
    x = _leaky_relu(bn(x @ w2 + b2, g2, bt2, m2, v2))
    x = _leaky_relu(bn(x @ w3 + b3, g3, bt3, m3, v3))
    x = _leaky_relu(bn(x @ w4 + b4, g4, bt4, m4, v4))
    return jnp.tanh(x @ w5 + b5)


def reference_forward_folded(z, params, bns):
    """Reference using the same BN-fold + bf16-weight quantization as the kernel."""
    weights, biases = prepare_kernel_params(params, bns)
    x = z.astype(jnp.float32)
    for idx, (w, b) in enumerate(zip(weights, biases)):
        x = jnp.dot(x.astype(jnp.bfloat16), w,
                    preferred_element_type=jnp.float32) + b
        x = jnp.tanh(x) if idx == len(weights) - 1 else _leaky_relu(x)
    return x[:, :OUT_DIM]


if __name__ == "__main__":
    latent_dim = 64
    batch = 8

    key = jax.random.PRNGKey(0)
    k_z, k_p = jax.random.split(key)
    z = jax.random.normal(k_z, (batch, latent_dim), dtype=jnp.float32)
    params, bns = init_params(k_p, latent_dim)

    out = jax.block_until_ready(generator_forward(z, params, bns))
    assert out.shape == (batch, OUT_DIM)

    # Tight check vs a reference doing the same folded/bf16-weight math.
    ref_bf16 = reference_forward_folded(z, params, bns)
    assert jnp.allclose(out, ref_bf16, atol=2e-3, rtol=2e-3), \
        float(jnp.max(jnp.abs(out - ref_bf16)))

    # Sanity check vs the exact f32 eval-mode module (bf16 weight quantization slack).
    ref_f32 = reference_forward(z, params, bns)
    assert jnp.allclose(out, ref_f32, atol=1e-1, rtol=1e-1), \
        float(jnp.max(jnp.abs(out - ref_f32)))

    print("KERNEL_OK")
</pallas_src>

<mosaic_0001>
module attributes {stable_mosaic.version = 11 : i64} {
  func.func @generator_kernel(%arg0: i32, %arg1: memref<8x64xf32, #tpu.memory_space<vmem>>, %arg2: memref<64x128xbf16, #tpu.memory_space<vmem>>, %arg3: memref<1x128xf32, #tpu.memory_space<vmem>>, %arg4: memref<128x256xbf16, #tpu.memory_space<vmem>>, %arg5: memref<1x256xf32, #tpu.memory_space<vmem>>, %arg6: memref<256x512xbf16, #tpu.memory_space<vmem>>, %arg7: memref<1x512xf32, #tpu.memory_space<vmem>>, %arg8: memref<512x1024xbf16, #tpu.memory_space<vmem>>, %arg9: memref<1x1024xf32, #tpu.memory_space<vmem>>, %arg10: memref<1024x1024xbf16, #tpu.memory_space<vmem>>, %arg11: memref<1x1024xf32, #tpu.memory_space<vmem>>, %arg12: memref<8x1024xf32, #tpu.memory_space<vmem>>) attributes {dimension_semantics = [#tpu.dimension_semantics<parallel>], iteration_bounds = array<i64: 1>, scalar_prefetch = 0 : i64, scratch_operands = 0 : i64, tpu.core_type = #tpu.core_type<tc>, window_params = [{transform_indices = @transform_0, window_bounds = array<i64: 8, 64>}, {pipeline_mode = #tpu.pipeline_mode<synchronous>, transform_indices = @transform_1, window_bounds = array<i64: 64, 128>}, {pipeline_mode = #tpu.pipeline_mode<synchronous>, transform_indices = @transform_2, window_bounds = array<i64: 1, 128>}, {pipeline_mode = #tpu.pipeline_mode<synchronous>, transform_indices = @transform_3, window_bounds = array<i64: 128, 256>}, {pipeline_mode = #tpu.pipeline_mode<synchronous>, transform_indices = @transform_4, window_bounds = array<i64: 1, 256>}, {pipeline_mode = #tpu.pipeline_mode<synchronous>, transform_indices = @transform_5, window_bounds = array<i64: 256, 512>}, {pipeline_mode = #tpu.pipeline_mode<synchronous>, transform_indices = @transform_6, window_bounds = array<i64: 1, 512>}, {pipeline_mode = #tpu.pipeline_mode<synchronous>, transform_indices = @transform_7, window_bounds = array<i64: 512, 1024>}, {pipeline_mode = #tpu.pipeline_mode<synchronous>, transform_indices = @transform_8, window_bounds = array<i64: 1, 1024>}, {pipeline_mode = #tpu.pipeline_mode<synchronous>, transform_indices = @transform_9, window_bounds = array<i64: 1024, 1024>}, {pipeline_mode = #tpu.pipeline_mode<synchronous>, transform_indices = @transform_10, window_bounds = array<i64: 1, 1024>}, {transform_indices = @transform_11, window_bounds = array<i64: 8, 1024>}]} {
    %c0 = arith.constant 0 : index
    %c0_0 = arith.constant 0 : index
    %0 = vector.load %arg1[%c0, %c0_0] : memref<8x64xf32, #tpu.memory_space<vmem>>, vector<8x64xf32>
    %1 = arith.truncf %0 : vector<8x64xf32> to vector<8x64xbf16>
    %c0_1 = arith.constant 0 : index
    %c0_2 = arith.constant 0 : index
    %2 = vector.load %arg2[%c0_1, %c0_2] : memref<64x128xbf16, #tpu.memory_space<vmem>>, vector<64x128xbf16>
    %cst = arith.constant dense<0.000000e+00> : vector<8x128xf32>
    %3 = tpu.matmul %1, %2, %cst {dimension_numbers = #tpu.dot_dimension_numbers<[1], [0], [0], [1], [0, 0, 1, 1], [], []>} : vector<8x64xbf16>, vector<64x128xbf16>, vector<8x128xf32> -> vector<8x128xf32>
    %c0_3 = arith.constant 0 : index
    %c0_4 = arith.constant 0 : index
    %4 = vector.load %arg3[%c0_3, %c0_4] : memref<1x128xf32, #tpu.memory_space<vmem>>, vector<1x128xf32>
    %5 = vector.broadcast %4 : vector<1x128xf32> to vector<8x128xf32>
    %6 = arith.addf %3, %5 : vector<8x128xf32>
    %cst_5 = arith.constant 0.000000e+00 : f32
    %7 = vector.broadcast %cst_5 : f32 to vector<8x128xf32>
    %8 = arith.cmpf oge, %6, %7 : vector<8x128xf32>
    %cst_6 = arith.constant 2.000000e-01 : f32
    %9 = vector.broadcast %cst_6 : f32 to vector<8x128xf32>
    %10 = arith.mulf %9, %6 : vector<8x128xf32>
    %11 = arith.select %8, %6, %10 : vector<8x128xi1>, vector<8x128xf32>
    %12 = arith.truncf %11 : vector<8x128xf32> to vector<8x128xbf16>
    %c0_7 = arith.constant 0 : index
    %c0_8 = arith.constant 0 : index
    %13 = vector.load %arg4[%c0_7, %c0_8] : memref<128x256xbf16, #tpu.memory_space<vmem>>, vector<128x256xbf16>
    %cst_9 = arith.constant dense<0.000000e+00> : vector<8x256xf32>
    %14 = tpu.matmul %12, %13, %cst_9 {dimension_numbers = #tpu.dot_dimension_numbers<[1], [0], [0], [1], [0, 0, 1, 1], [], []>} : vector<8x128xbf16>, vector<128x256xbf16>, vector<8x256xf32> -> vector<8x256xf32>
    %c0_10 = arith.constant 0 : index
    %c0_11 = arith.constant 0 : index
    %15 = vector.load %arg5[%c0_10, %c0_11] : memref<1x256xf32, #tpu.memory_space<vmem>>, vector<1x256xf32>
    %16 = vector.broadcast %15 : vector<1x256xf32> to vector<8x256xf32>
    %17 = arith.addf %14, %16 : vector<8x256xf32>
    %cst_12 = arith.constant 0.000000e+00 : f32
    %18 = vector.broadcast %cst_12 : f32 to vector<8x256xf32>
    %19 = arith.cmpf oge, %17, %18 : vector<8x256xf32>
    %cst_13 = arith.constant 2.000000e-01 : f32
    %20 = vector.broadcast %cst_13 : f32 to vector<8x256xf32>
    %21 = arith.mulf %20, %17 : vector<8x256xf32>
    %22 = arith.select %19, %17, %21 : vector<8x256xi1>, vector<8x256xf32>
    %23 = arith.truncf %22 : vector<8x256xf32> to vector<8x256xbf16>
    %c0_14 = arith.constant 0 : index
    %c0_15 = arith.constant 0 : index
    %24 = vector.load %arg6[%c0_14, %c0_15] : memref<256x512xbf16, #tpu.memory_space<vmem>>, vector<256x512xbf16>
    %cst_16 = arith.constant dense<0.000000e+00> : vector<8x512xf32>
    %25 = tpu.matmul %23, %24, %cst_16 {dimension_numbers = #tpu.dot_dimension_numbers<[1], [0], [0], [1], [0, 0, 1, 1], [], []>} : vector<8x256xbf16>, vector<256x512xbf16>, vector<8x512xf32> -> vector<8x512xf32>
    %c0_17 = arith.constant 0 : index
    %c0_18 = arith.constant 0 : index
    %26 = vector.load %arg7[%c0_17, %c0_18] : memref<1x512xf32, #tpu.memory_space<vmem>>, vector<1x512xf32>
    %27 = vector.broadcast %26 : vector<1x512xf32> to vector<8x512xf32>
    %28 = arith.addf %25, %27 : vector<8x512xf32>
    %cst_19 = arith.constant 0.000000e+00 : f32
    %29 = vector.broadcast %cst_19 : f32 to vector<8x512xf32>
    %30 = arith.cmpf oge, %28, %29 : vector<8x512xf32>
    %cst_20 = arith.constant 2.000000e-01 : f32
    %31 = vector.broadcast %cst_20 : f32 to vector<8x512xf32>
    %32 = arith.mulf %31, %28 : vector<8x512xf32>
    %33 = arith.select %30, %28, %32 : vector<8x512xi1>, vector<8x512xf32>
    %34 = arith.truncf %33 : vector<8x512xf32> to vector<8x512xbf16>
    %c0_21 = arith.constant 0 : index
    %c0_22 = arith.constant 0 : index
    %35 = vector.load %arg8[%c0_21, %c0_22] : memref<512x1024xbf16, #tpu.memory_space<vmem>>, vector<512x1024xbf16>
    %cst_23 = arith.constant dense<0.000000e+00> : vector<8x1024xf32>
    %36 = tpu.matmul %34, %35, %cst_23 {dimension_numbers = #tpu.dot_dimension_numbers<[1], [0], [0], [1], [0, 0, 1, 1], [], []>} : vector<8x512xbf16>, vector<512x1024xbf16>, vector<8x1024xf32> -> vector<8x1024xf32>
    %c0_24 = arith.constant 0 : index
    %c0_25 = arith.constant 0 : index
    %37 = vector.load %arg9[%c0_24, %c0_25] : memref<1x1024xf32, #tpu.memory_space<vmem>>, vector<1x1024xf32>
    %38 = vector.broadcast %37 : vector<1x1024xf32> to vector<8x1024xf32>
    %39 = arith.addf %36, %38 : vector<8x1024xf32>
    %cst_26 = arith.constant 0.000000e+00 : f32
    %40 = vector.broadcast %cst_26 : f32 to vector<8x1024xf32>
    %41 = arith.cmpf oge, %39, %40 : vector<8x1024xf32>
    %cst_27 = arith.constant 2.000000e-01 : f32
    %42 = vector.broadcast %cst_27 : f32 to vector<8x1024xf32>
    %43 = arith.mulf %42, %39 : vector<8x1024xf32>
    %44 = arith.select %41, %39, %43 : vector<8x1024xi1>, vector<8x1024xf32>
    %45 = arith.truncf %44 : vector<8x1024xf32> to vector<8x1024xbf16>
    %c0_28 = arith.constant 0 : index
    %c0_29 = arith.constant 0 : index
    %46 = vector.load %arg10[%c0_28, %c0_29] : memref<1024x1024xbf16, #tpu.memory_space<vmem>>, vector<1024x1024xbf16>
    %cst_30 = arith.constant dense<0.000000e+00> : vector<8x1024xf32>
    %47 = tpu.matmul %45, %46, %cst_30 {dimension_numbers = #tpu.dot_dimension_numbers<[1], [0], [0], [1], [0, 0, 1, 1], [], []>} : vector<8x1024xbf16>, vector<1024x1024xbf16>, vector<8x1024xf32> -> vector<8x1024xf32>
    %c0_31 = arith.constant 0 : index
    %c0_32 = arith.constant 0 : index
    %48 = vector.load %arg11[%c0_31, %c0_32] : memref<1x1024xf32, #tpu.memory_space<vmem>>, vector<1x1024xf32>
    %49 = vector.broadcast %48 : vector<1x1024xf32> to vector<8x1024xf32>
    %50 = arith.addf %47, %49 : vector<8x1024xf32>
    %51 = math.tanh %50 : vector<8x1024xf32>
    %c0_33 = arith.constant 0 : index
    %c0_34 = arith.constant 0 : index
    %52 = vector.load %arg12[%c0_33, %c0_34] : memref<8x1024xf32, #tpu.memory_space<vmem>>, vector<8x1024xf32>
    tpu.vector_store %arg12[%c0_33, %c0_34], %51 {strides = array<i32>} : memref<8x1024xf32, #tpu.memory_space<vmem>>, vector<8x1024xf32>,
    return
  }
  func.func @transform_0(%arg0: i32) -> (i32, i32) {
    %c0_i32 = arith.constant 0 : i32
    %c0_i32_0 = arith.constant 0 : i32
    return %arg0, %c0_i32 : i32, i32
  }
  func.func @transform_1(%arg0: i32) -> (i32, i32) {
    %c0_i32 = arith.constant 0 : i32
    %c0_i32_0 = arith.constant 0 : i32
    %c0_i32_1 = arith.constant 0 : i32
    return %c0_i32, %c0_i32_0 : i32, i32
  }
  func.func @transform_2(%arg0: i32) -> (i32, i32) {
    %c0_i32 = arith.constant 0 : i32
    %c0_i32_0 = arith.constant 0 : i32
    %c0_i32_1 = arith.constant 0 : i32
    return %c0_i32, %c0_i32_0 : i32, i32
  }
  func.func @transform_3(%arg0: i32) -> (i32, i32) {
    %c0_i32 = arith.constant 0 : i32
    %c0_i32_0 = arith.constant 0 : i32
    %c0_i32_1 = arith.constant 0 : i32
    return %c0_i32, %c0_i32_0 : i32, i32
  }
  func.func @transform_4(%arg0: i32) -> (i32, i32) {
    %c0_i32 = arith.constant 0 : i32
    %c0_i32_0 = arith.constant 0 : i32
    %c0_i32_1 = arith.constant 0 : i32
    return %c0_i32, %c0_i32_0 : i32, i32
  }
  func.func @transform_5(%arg0: i32) -> (i32, i32) {
    %c0_i32 = arith.constant 0 : i32
    %c0_i32_0 = arith.constant 0 : i32
    %c0_i32_1 = arith.constant 0 : i32
    return %c0_i32, %c0_i32_0 : i32, i32
  }
  func.func @transform_6(%arg0: i32) -> (i32, i32) {
    %c0_i32 = arith.constant 0 : i32
    %c0_i32_0 = arith.constant 0 : i32
    %c0_i32_1 = arith.constant 0 : i32
    return %c0_i32, %c0_i32_0 : i32, i32
  }
  func.func @transform_7(%arg0: i32) -> (i32, i32) {
    %c0_i32 = arith.constant 0 : i32
    %c0_i32_0 = arith.constant 0 : i32
    %c0_i32_1 = arith.constant 0 : i32
    return %c0_i32, %c0_i32_0 : i32, i32
  }
  func.func @transform_8(%arg0: i32) -> (i32, i32) {
    %c0_i32 = arith.constant 0 : i32
    %c0_i32_0 = arith.constant 0 : i32
    %c0_i32_1 = arith.constant 0 : i32
    return %c0_i32, %c0_i32_0 : i32, i32
  }
  func.func @transform_9(%arg0: i32) -> (i32, i32) {
    %c0_i32 = arith.constant 0 : i32
    %c0_i32_0 = arith.constant 0 : i32
    %c0_i32_1 = arith.constant 0 : i32
    return %c0_i32, %c0_i32_0 : i32, i32
  }
  func.func @transform_10(%arg0: i32) -> (i32, i32) {
    %c0_i32 = arith.constant 0 : i32
    %c0_i32_0 = arith.constant 0 : i32
    %c0_i32_1 = arith.constant 0 : i32
    return %c0_i32, %c0_i32_0 : i32, i32
  }
  func.func @transform_11(%arg0: i32) -> (i32, i32) {
    %c0_i32 = arith.constant 0 : i32
    %c0_i32_0 = arith.constant 0 : i32
    return %arg0, %c0_i32 : i32, i32
  }
}

</mosaic_0001>

<llo_original>
// kernel: tpu_custom_call.1
$region0: #{tpu_custom_call.1}
  #allocation0 [shape = 'u32[]', space=smem, size = 0x4, offset = 0x4, fixed_abs, tag = 'smem constant byte address 0x4 - core index']
  #allocation1 [shape = 'u32[144,128]{1,0:T(1,128)}', space=vmem, size = 0x12000, scoped, tag = 'internal scratch']
  %s0 = inlined_call_operand.hbm [shape: f32[8,64], index: 0, kind: input, shape index: {}]
  %s1 = inlined_call_operand.hbm [shape: bf16[64,128], index: 1, kind: input, shape index: {}]
  %s2 = inlined_call_operand.hbm [shape: f32[1,128], index: 2, kind: input, shape index: {}]
  %s3 = inlined_call_operand.hbm [shape: bf16[128,256], index: 3, kind: input, shape index: {}]
  %s4 = inlined_call_operand.hbm [shape: f32[1,256], index: 4, kind: input, shape index: {}]
  %s5 = inlined_call_operand.hbm [shape: bf16[256,512], index: 5, kind: input, shape index: {}]
  %s6 = inlined_call_operand.hbm [shape: f32[1,512], index: 6, kind: input, shape index: {}]
  %s7 = inlined_call_operand.hbm [shape: bf16[512,1024], index: 7, kind: input, shape index: {}]
  %s8 = inlined_call_operand.hbm [shape: f32[1,1024], index: 8, kind: input, shape index: {}]
  %s9 = inlined_call_operand.hbm [shape: bf16[1024,1024], index: 9, kind: input, shape index: {}]
  %s10 = inlined_call_operand.hbm [shape: f32[1,1024], index: 10, kind: input, shape index: {}]
  %s11 = inlined_call_operand.hbm [shape: f32[8,1024], index: 11, kind: output, shape index: {}]
  %s12 = sld [smem:[#allocation0]]
  $region98: #{tpu_custom_call.1} parent=0
    _
  %s14 = ssub.s32 1, %s12
  %s15 = scalar_select 0, %s14, %s12
  $region1: #{tpu_custom_call.1} parent=0
    #allocation2 [shape = 'u8[4096]{0}', space=vmem, size = 0x1000, scoped, tag = 'input window, operand 0, single buffered']
    #allocation3 [shape = 's32[1]{0}', space=sflag, size = 0x4, scoped, tag = 'scoped memory for tpu_custom_call.1']
    #allocation4 [shape = 's32[1]{0}', space=sflag, size = 0x4, scoped, tag = 'scoped memory for tpu_custom_call.1']
    #allocation5 [shape = 'u8[16384]{0}', space=vmem, size = 0x4000, scoped, tag = 'input window, operand 1, single buffered']
    #allocation6 [shape = 's32[1]{0}', space=sflag, size = 0x4, scoped, tag = 'scoped memory for tpu_custom_call.1']
    #allocation7 [shape = 'u8[512]{0}', space=vmem, size = 0x400, scoped, tag = 'input window, operand 2, single buffered']
    #allocation8 [shape = 'u8[65536]{0}', space=vmem, size = 0x10000, scoped, tag = 'input window, operand 3, single buffered']
    #allocation9 [shape = 's32[1]{0}', space=sflag, size = 0x4, scoped, tag = 'scoped memory for tpu_custom_call.1']
    #allocation10 [shape = 'u8[1024]{0}', space=vmem, size = 0x400, scoped, tag = 'input window, operand 4, single buffered']
    #allocation11 [shape = 'u8[262144]{0}', space=vmem, size = 0x40000, scoped, tag = 'input window, operand 5, single buffered']
    #allocation12 [shape = 's32[1]{0}', space=sflag, size = 0x4, scoped, tag = 'scoped memory for tpu_custom_call.1']
    #allocation13 [shape = 'u8[2048]{0}', space=vmem, size = 0x800, scoped, tag = 'input window, operand 6, single buffered']
    #allocation14 [shape = 'u8[1048576]{0}', space=vmem, size = 0x100000, scoped, tag = 'input window, operand 7, single buffered']
    #allocation15 [shape = 's32[1]{0}', space=sflag, size = 0x4, scoped, tag = 'scoped memory for tpu_custom_call.1']
    #allocation16 [shape = 'u8[4096]{0}', space=vmem, size = 0x1000, scoped, tag = 'input window, operand 8, single buffered']
    #allocation17 [shape = 'u8[2097152]{0}', space=vmem, size = 0x200000, scoped, tag = 'input window, operand 9, single buffered']
    #allocation18 [shape = 's32[1]{0}', space=sflag, size = 0x4, scoped, tag = 'scoped memory for tpu_custom_call.1']
    #allocation19 [shape = 'u8[4096]{0}', space=vmem, size = 0x1000, scoped, tag = 'input window, operand 10, single buffered']
    #allocation20 [shape = 'u8[32768]{0}', space=vmem, size = 0x8000, scoped, tag = 'output window, operand 0, single buffered']
    %16 = vsyncpa [#allocation3], 0
    %17 = vsyncpa [#allocation6], 0
    %18 = vsyncpa [#allocation9], 0
    %19 = vsyncpa [#allocation12], 0
    %20 = vsyncpa [#allocation15], 0
    %21 = vsyncpa [#allocation18], 0
    %22 = vsyncpa [#allocation4], 0
    // Predicated region
    $region2: #{tpu_custom_call.1} parent=1 // pred_check
      _
    $region3: #{tpu_custom_call.1} parent=1 // pred_check_branch
      %24 = sbr.rel (0) target = $region5
    $region4: #{tpu_custom_call.1} parent=1 // pred_region
      %s26 = ssub.s32 128, 128
      %27 = vsyncadd [#allocation3], %s26
      %s29 = sshll.u32 [#allocation2], 4
      %s30 = int_to_ptr.vmem [resolvable:$true] %s29
      %32 = dma.hbm_to_vmem [thread:$0]  %s0, 128, %s30, [#allocation3]
    $region5: #{tpu_custom_call.1} parent=1 // pred_fallthru
      _
    // Predicated region
    $region6: #{tpu_custom_call.1} parent=1 // pred_check
      _
    $region7: #{tpu_custom_call.1} parent=1 // pred_check_branch
      %34 = sbr.rel (0) target = $region9
    $region8: #{tpu_custom_call.1} parent=1 // pred_region
      %s36 = ssub.s32 512, 512
      %37 = vsyncadd [#allocation6], %s36
      %s38 = sshll.u32 [#allocation5], 4
      %s39 = int_to_ptr.vmem [resolvable:$true] %s38
      %44 = dma.hbm_to_vmem [thread:$0]  %s1, 512, %s39, [#allocation6], 64, 64, 4
    $region9: #{tpu_custom_call.1} parent=1 // pred_fallthru
      _
    // Predicated region
    $region10: #{tpu_custom_call.1} parent=1 // pred_check
      _
    $region11: #{tpu_custom_call.1} parent=1 // pred_check_branch
      %46 = sbr.rel (0) target = $region13
    $region12: #{tpu_custom_call.1} parent=1 // pred_region
      %s48 = ssub.s32 16, 16
      %49 = vsyncadd [#allocation6], %s48
      %s51 = sshll.u32 [#allocation7], 4
      %s52 = int_to_ptr.vmem [resolvable:$true] %s51
      %54 = dma.hbm_to_vmem [thread:$0]  %s2, 16, %s52, [#allocation6]
    $region13: #{tpu_custom_call.1} parent=1 // pred_fallthru
      _
    // Predicated region
    $region14: #{tpu_custom_call.1} parent=1 // pred_check
      _
    $region15: #{tpu_custom_call.1} parent=1 // pred_check_branch
      %56 = sbr.rel (0) target = $region17
    $region16: #{tpu_custom_call.1} parent=1 // pred_region
      %s58 = ssub.s32 2048, 2048
      %59 = vsyncadd [#allocation9], %s58
      %s60 = sshll.u32 [#allocation8], 4
      %s61 = int_to_ptr.vmem [resolvable:$true] %s60
      %66 = dma.hbm_to_vmem [thread:$0]  %s3, 2048, %s61, [#allocation9], 128, 128, 8
    $region17: #{tpu_custom_call.1} parent=1 // pred_fallthru
      _
    // Predicated region
    $region18: #{tpu_custom_call.1} parent=1 // pred_check
      _
    $region19: #{tpu_custom_call.1} parent=1 // pred_check_branch
      %68 = sbr.rel (0) target = $region21
    $region20: #{tpu_custom_call.1} parent=1 // pred_region
      %s70 = ssub.s32 32, 32
      %71 = vsyncadd [#allocation9], %s70
      %s73 = sshll.u32 [#allocation10], 4
      %s74 = int_to_ptr.vmem [resolvable:$true] %s73
      %76 = dma.hbm_to_vmem [thread:$0]  %s4, 32, %s74, [#allocation9]
    $region21: #{tpu_custom_call.1} parent=1 // pred_fallthru
      _
    // Predicated region
    $region22: #{tpu_custom_call.1} parent=1 // pred_check
      _
    $region23: #{tpu_custom_call.1} parent=1 // pred_check_branch
      %78 = sbr.rel (0) target = $region25
    $region24: #{tpu_custom_call.1} parent=1 // pred_region
      %s80 = ssub.s32 8192, 8192
      %81 = vsyncadd [#allocation12], %s80
      %s82 = sshll.u32 [#allocation11], 4
      %s83 = int_to_ptr.vmem [resolvable:$true] %s82
      %88 = dma.hbm_to_vmem [thread:$0]  %s5, 8192, %s83, [#allocation12], 256, 256, 16
    $region25: #{tpu_custom_call.1} parent=1 // pred_fallthru
      _
    // Predicated region
    $region26: #{tpu_custom_call.1} parent=1 // pred_check
      _
    $region27: #{tpu_custom_call.1} parent=1 // pred_check_branch
      %90 = sbr.rel (0) target = $region29
    $region28: #{tpu_custom_call.1} parent=1 // pred_region
      %s92 = ssub.s32 64, 64
      %93 = vsyncadd [#allocation12], %s92
      %s95 = sshll.u32 [#allocation13], 4
      %s96 = int_to_ptr.vmem [resolvable:$true] %s95
      %98 = dma.hbm_to_vmem [thread:$0]  %s6, 64, %s96, [#allocation12]
    $region29: #{tpu_custom_call.1} parent=1 // pred_fallthru
      _
    // Predicated region
    $region30: #{tpu_custom_call.1} parent=1 // pred_check
      _
    $region31: #{tpu_custom_call.1} parent=1 // pred_check_branch
      %100 = sbr.rel (0) target = $region33
    $region32: #{tpu_custom_call.1} parent=1 // pred_region
      %s102 = ssub.s32 32768, 32768
      %103 = vsyncadd [#allocation15], %s102
      %s104 = sshll.u32 [#allocation14], 4
      %s105 = int_to_ptr.vmem [resolvable:$true] %s104
      %110 = dma.hbm_to_vmem [thread:$0]  %s7, 32768, %s105, [#allocation15], 512, 512, 32
    $region33: #{tpu_custom_call.1} parent=1 // pred_fallthru
      _
    // Predicated region
    $region34: #{tpu_custom_call.1} parent=1 // pred_check
      _
    $region35: #{tpu_custom_call.1} parent=1 // pred_check_branch
      %112 = sbr.rel (0) target = $region37
    $region36: #{tpu_custom_call.1} parent=1 // pred_region
      %s114 = ssub.s32 128, 128
      %115 = vsyncadd [#allocation15], %s114
      %s117 = sshll.u32 [#allocation16], 4
      %s118 = int_to_ptr.vmem [resolvable:$true] %s117
      %120 = dma.hbm_to_vmem [thread:$0]  %s8, 128, %s118, [#allocation15]
    $region37: #{tpu_custom_call.1} parent=1 // pred_fallthru
      _
    // Predicated region
    $region38: #{tpu_custom_call.1} parent=1 // pred_check
      _
    $region39: #{tpu_custom_call.1} parent=1 // pred_check_branch
      %122 = sbr.rel (0) target = $region41
    $region40: #{tpu_custom_call.1} parent=1 // pred_region
      %s124 = ssub.s32 65536, 65536
      %125 = vsyncadd [#allocation18], %s124
      %s126 = sshll.u32 [#allocation17], 4
      %s127 = int_to_ptr.vmem [resolvable:$true] %s126
      %132 = dma.hbm_to_vmem [thread:$0]  %s9, 65536, %s127, [#allocation18], 512, 512, 32
    $region41: #{tpu_custom_call.1} parent=1 // pred_fallthru
      _
    // Predicated region
    $region42: #{tpu_custom_call.1} parent=1 // pred_check
      _
    $region43: #{tpu_custom_call.1} parent=1 // pred_check_branch
      %134 = sbr.rel (0) target = $region45
    $region44: #{tpu_custom_call.1} parent=1 // pred_region
      %s136 = ssub.s32 128, 128
      %137 = vsyncadd [#allocation18], %s136
      %s139 = sshll.u32 [#allocation19], 4
      %s140 = int_to_ptr.vmem [resolvable:$true] %s139
      %142 = dma.hbm_to_vmem [thread:$0]  %s10, 128, %s140, [#allocation18]
    $region45: #{tpu_custom_call.1} parent=1 // pred_fallthru
      _
    // Predicated region
    $region46: #{tpu_custom_call.1} parent=1 // pred_check
      _
    $region47: #{tpu_custom_call.1} parent=1 // pred_check_branch
      %144 = sbr.rel (0) target = $region49
    $region48: #{tpu_custom_call.1} parent=1 // pred_region
      %145 = dma.done [#allocation3], 128
    $region49: #{tpu_custom_call.1} parent=1 // pred_fallthru
      _
    // Predicated region
    $region50: #{tpu_custom_call.1} parent=1 // pred_check
      _
    $region51: #{tpu_custom_call.1} parent=1 // pred_check_branch
      %147 = sbr.rel (0) target = $region53
    $region52: #{tpu_custom_call.1} parent=1 // pred_region
      %148 = dma.done [#allocation6], 512
    $region53: #{tpu_custom_call.1} parent=1 // pred_fallthru
      _
    // Predicated region
    $region54: #{tpu_custom_call.1} parent=1 // pred_check
      _
    $region55: #{tpu_custom_call.1} parent=1 // pred_check_branch
      %150 = sbr.rel (0) target = $region57
    $region56: #{tpu_custom_call.1} parent=1 // pred_region
      %151 = dma.done [#allocation6], 16
    $region57: #{tpu_custom_call.1} parent=1 // pred_fallthru
      _
    // Predicated region
    $region58: #{tpu_custom_call.1} parent=1 // pred_check
      _
    $region59: #{tpu_custom_call.1} parent=1 // pred_check_branch
      %153 = sbr.rel (0) target = $region61
    $region60: #{tpu_custom_call.1} parent=1 // pred_region
      %154 = dma.done [#allocation9], 2048
    $region61: #{tpu_custom_call.1} parent=1 // pred_fallthru
      _
    // Predicated region
    $region62: #{tpu_custom_call.1} parent=1 // pred_check
      _
    $region63: #{tpu_custom_call.1} parent=1 // pred_check_branch
      %156 = sbr.rel (0) target = $region65
    $region64: #{tpu_custom_call.1} parent=1 // pred_region
      %157 = dma.done [#allocation9], 32
    $region65: #{tpu_custom_call.1} parent=1 // pred_fallthru
      _
    // Predicated region
    $region66: #{tpu_custom_call.1} parent=1 // pred_check
      _
    $region67: #{tpu_custom_call.1} parent=1 // pred_check_branch
      %159 = sbr.rel (0) target = $region69
    $region68: #{tpu_custom_call.1} parent=1 // pred_region
      %160 = dma.done [#allocation12], 8192
    $region69: #{tpu_custom_call.1} parent=1 // pred_fallthru
      _
    // Predicated region
    $region70: #{tpu_custom_call.1} parent=1 // pred_check
      _
    $region71: #{tpu_custom_call.1} parent=1 // pred_check_branch
      %162 = sbr.rel (0) target = $region73
    $region72: #{tpu_custom_call.1} parent=1 // pred_region
      %163 = dma.done [#allocation12], 64
    $region73: #{tpu_custom_call.1} parent=1 // pred_fallthru
      _
    // Predicated region
    $region74: #{tpu_custom_call.1} parent=1 // pred_check
      _
    $region75: #{tpu_custom_call.1} parent=1 // pred_check_branch
      %165 = sbr.rel (0) target = $region77
    $region76: #{tpu_custom_call.1} parent=1 // pred_region
      %166 = dma.done [#allocation15], 32768
    $region77: #{tpu_custom_call.1} parent=1 // pred_fallthru
      _
    // Predicated region
    $region78: #{tpu_custom_call.1} parent=1 // pred_check
      _
    $region79: #{tpu_custom_call.1} parent=1 // pred_check_branch
      %168 = sbr.rel (0) target = $region81
    $region80: #{tpu_custom_call.1} parent=1 // pred_region
      %169 = dma.done [#allocation15], 128
    $region81: #{tpu_custom_call.1} parent=1 // pred_fallthru
      _
    // Predicated region
    $region82: #{tpu_custom_call.1} parent=1 // pred_check
      _
    $region83: #{tpu_custom_call.1} parent=1 // pred_check_branch
      %171 = sbr.rel (0) target = $region85
    $region84: #{tpu_custom_call.1} parent=1 // pred_region
      %172 = dma.done [#allocation18], 65536
    $region85: #{tpu_custom_call.1} parent=1 // pred_fallthru
      _
    // Predicated region
    $region86: #{tpu_custom_call.1} parent=1 // pred_check
      _
    $region87: #{tpu_custom_call.1} parent=1 // pred_check_branch
      %174 = sbr.rel (0) target = $region89
    $region88: #{tpu_custom_call.1} parent=1 // pred_region
      %175 = dma.done [#allocation18], 128
    $region89: #{tpu_custom_call.1} parent=1 // pred_fallthru
      _
    %v177 = vld [vmem:[#allocation2] sm:$0xff]
    %v178 = vpack.c.bf16 %v177, %v177
    %v179 = vld [vmem:[#allocation5] sm:$0xf]
    %v180 = vld [vmem:[#allocation5 + $0x4] sm:$0xf]
    %v181 = vld [vmem:[#allocation5 + $0x8] sm:$0xf]
    %v182 = vld [vmem:[#allocation5 + $0xc] sm:$0xf]
    %v183 = vld [vmem:[#allocation5 + $0x10] sm:$0xf]
    %v184 = vld [vmem:[#allocation5 + $0x14] sm:$0xf]
    %v185 = vld [vmem:[#allocation5 + $0x18] sm:$0xf]
    %v186 = vld [vmem:[#allocation5 + $0x1c] sm:$0xf]
    %v187 = vld [vmem:[#allocation7] sm:$0x1]
    %v189 = vlaneseq
    %v190 = vshrl.u32 %v189, 7
    %v191 = vsub.s32 0, %v190
    %v192 = vrot.slane %v187, %v191
    %v202 = vunpack.c.l.b16 %v179
    %v203 = vunpack.c.l.b16 %v180
    %v204 = vunpack.c.l.b16 %v181
    %v205 = vunpack.c.l.b16 %v182
    %v206 = vunpack.c.l.b16 %v183
    %v207 = vunpack.c.l.b16 %v184
    %v208 = vunpack.c.l.b16 %v185
    %v209 = vunpack.c.l.b16 %v186
    %v210 = vpack.c.b16 %v203, %v202
    %v211 = vpack.c.b16 %v205, %v204
    %v212 = vpack.c.b16 %v207, %v206
    %v213 = vpack.c.b16 %v209, %v208
    %vm218 = vcmask 523264
    %v220 = vsel %vm218, %v178, 0
    %222 = vmatprep.subr.bf16.mxu0 0
    %223 = vmatpush1.bf16.msra.mxu0 %v210
    %224 = vmatprep.subr.bf16.mxu0 0
    %225 = vmatpush1.bf16.msra.mxu0 %v211
    %226 = vmatprep.subr.bf16.mxu0 0
    %227 = vmatpush1.bf16.msra.mxu0 %v212
    %228 = vmatprep.subr.bf16.mxu0 0
    %229 = vmatpush1.bf16.msra.mxu0 %v213
    %230 = vmatprep.subr.bf16.mxu0 0
    %231 = vmatpush1.bf16.msra.mxu0 0
    %232 = vmatprep.subr.bf16.mxu0 0
    %233 = vmatpush1.bf16.msra.mxu0 0
    %234 = vmatprep.subr.bf16.mxu0 0
    %235 = vmatpush1.bf16.msra.mxu0 0
    %236 = vmatprep.subr.bf16.mxu0 0
    %237 = vmatpush1.bf16.msra.mxu0 0
    %238 = vmatprep.subr.bf16.mxu0 0
    %239 = vmatpush1.bf16.msra.mxu0 0
    %240 = vmatprep.subr.bf16.mxu0 0
    %241 = vmatpush1.bf16.msra.mxu0 0
    %242 = vmatprep.subr.bf16.mxu0 0
    %243 = vmatpush1.bf16.msra.mxu0 0
    %244 = vmatprep.subr.bf16.mxu0 0
    %245 = vmatpush1.bf16.msra.mxu0 0
    %246 = vmatprep.subr.bf16.mxu0 0
    %247 = vmatpush1.bf16.msra.mxu0 0
    %248 = vmatprep.subr.bf16.mxu0 0
    %249 = vmatpush1.bf16.msra.mxu0 0
    %250 = vmatprep.subr.bf16.mxu0 0
    %251 = vmatpush1.bf16.msra.mxu0 0
    %252 = vmatprep.subr.bf16.mxu0 0
    %253 = vmatpush1.bf16.msra.mxu0 0
    %254 = vmatprep.mubr.bf16.mxu0 0
    %255 = vmatmul.mubr.bf16.gmra.mrb[0].mxu0 %v220
    %v256 = vpop.f32.mrb[0].mxu0
    %v257 = vadd.f32 %v192, %v256
    %v258 = vpop.f32.mrb[0].mxu0
    %v259 = vpop.f32.mrb[0].mxu0
    %v260 = vpop.f32.mrb[0].mxu0
    %261 = vdwg.mxu0
    %vm262 = vcmp.ge.f32.partialorder %v257, 0.0
    %v263 = vmul.f32 %v257, 0.2
    %v264 = vsel %vm262, %v257, %v263
    %v265 = vpack.c.bf16 %v264, %v264
    %v266 = vld [vmem:[#allocation8] sm:$0xff]
    %v267 = vld [vmem:[#allocation8 + $0x8] sm:$0xff]
    %v268 = vld [vmem:[#allocation8 + $0x10] sm:$0xff]
    %v269 = vld [vmem:[#allocation8 + $0x18] sm:$0xff]
    %v270 = vld [vmem:[#allocation8 + $0x20] sm:$0xff]
    %v271 = vld [vmem:[#allocation8 + $0x28] sm:$0xff]
    %v272 = vld [vmem:[#allocation8 + $0x30] sm:$0xff]
    %v273 = vld [vmem:[#allocation8 + $0x38] sm:$0xff]
    %v274 = vld [vmem:[#allocation8 + $0x40] sm:$0xff]
    %v275 = vld [vmem:[#allocation8 + $0x48] sm:$0xff]
    %v276 = vld [vmem:[#allocation8 + $0x50] sm:$0xff]
    %v277 = vld [vmem:[#allocation8 + $0x58] sm:$0xff]
    %v278 = vld [vmem:[#allocation8 + $0x60] sm:$0xff]
    %v279 = vld [vmem:[#allocation8 + $0x68] sm:$0xff]
    %v280 = vld [vmem:[#allocation8 + $0x70] sm:$0xff]
    %v281 = vld [vmem:[#allocation8 + $0x78] sm:$0xff]
    %v282 = vld [vmem:[#allocation10] sm:$0x3]
    %v284 = vlaneseq
    %v285 = vshrl.u32 %v284, 7
    %v286 = vsub.s32 0, %v285
    %v287 = vrot.slane %v282, %v286
    %v288 = vlaneseq
    %v289 = vshrl.u32 %v288, 7
    %v290 = vsub.s32 1, %v289
    %v291 = vrot.slane %v282, %v290
    %v310 = vunpack.c.l.b16 %v266
    %v311 = vunpack.c.h.b16 %v266
    %v312 = vunpack.c.l.b16 %v267
    %v313 = vunpack.c.h.b16 %v267
    %v314 = vunpack.c.l.b16 %v268
    %v315 = vunpack.c.h.b16 %v268
    %v316 = vunpack.c.l.b16 %v269
    %v317 = vunpack.c.h.b16 %v269
    %v318 = vunpack.c.l.b16 %v270
    %v319 = vunpack.c.h.b16 %v270
    %v320 = vunpack.c.l.b16 %v271
    %v321 = vunpack.c.h.b16 %v271
    %v322 = vunpack.c.l.b16 %v272
    %v323 = vunpack.c.h.b16 %v272
    %v324 = vunpack.c.l.b16 %v273
    %v325 = vunpack.c.h.b16 %v273
    %v326 = vunpack.c.l.b16 %v274
    %v327 = vunpack.c.h.b16 %v274
    %v328 = vunpack.c.l.b16 %v275
    %v329 = vunpack.c.h.b16 %v275
    %v330 = vunpack.c.l.b16 %v276
    %v331 = vunpack.c.h.b16 %v276
    %v332 = vunpack.c.l.b16 %v277
    %v333 = vunpack.c.h.b16 %v277
    %v334 = vunpack.c.l.b16 %v278
    %v335 = vunpack.c.h.b16 %v278
    %v336 = vunpack.c.l.b16 %v279
    %v337 = vunpack.c.h.b16 %v279
    %v338 = vunpack.c.l.b16 %v280
    %v339 = vunpack.c.h.b16 %v280
    %v340 = vunpack.c.l.b16 %v281
    %v341 = vunpack.c.h.b16 %v281
    %v342 = vpack.c.b16 %v312, %v310
    %v343 = vpack.c.b16 %v313, %v311
    %v344 = vpack.c.b16 %v316, %v314
    %v345 = vpack.c.b16 %v317, %v315
    %v346 = vpack.c.b16 %v320, %v318
    %v347 = vpack.c.b16 %v321, %v319
    %v348 = vpack.c.b16 %v324, %v322
    %v349 = vpack.c.b16 %v325, %v323
    %v350 = vpack.c.b16 %v328, %v326
    %v351 = vpack.c.b16 %v329, %v327
    %v352 = vpack.c.b16 %v332, %v330
    %v353 = vpack.c.b16 %v333, %v331
    %v354 = vpack.c.b16 %v336, %v334
    %v355 = vpack.c.b16 %v337, %v335
    %v356 = vpack.c.b16 %v340, %v338
    %v357 = vpack.c.b16 %v341, %v339
    %374 = vmatprep.subr.bf16.mxu0 %v343
    %375 = vmatpush1.bf16.msra.mxu0 %v342
    %376 = vmatprep.subr.bf16.mxu0 %v345
    %377 = vmatpush1.bf16.msra.mxu0 %v344
    %378 = vmatprep.subr.bf16.mxu0 %v347
    %379 = vmatpush1.bf16.msra.mxu0 %v346
    %380 = vmatprep.subr.bf16.mxu0 %v349
    %381 = vmatpush1.bf16.msra.mxu0 %v348
    %382 = vmatprep.subr.bf16.mxu0 %v351
    %383 = vmatpush1.bf16.msra.mxu0 %v350
    %384 = vmatprep.subr.bf16.mxu0 %v353
    %385 = vmatpush1.bf16.msra.mxu0 %v352
    %386 = vmatprep.subr.bf16.mxu0 %v355
    %387 = vmatpush1.bf16.msra.mxu0 %v354
    %388 = vmatprep.subr.bf16.mxu0 %v357
    %389 = vmatpush1.bf16.msra.mxu0 %v356
    %390 = vmatprep.subr.bf16.mxu0 0
    %391 = vmatpush1.bf16.msra.mxu0 0
    %392 = vmatprep.subr.bf16.mxu0 0
    %393 = vmatpush1.bf16.msra.mxu0 0
    %394 = vmatprep.subr.bf16.mxu0 0
    %395 = vmatpush1.bf16.msra.mxu0 0
    %396 = vmatprep.subr.bf16.mxu0 0
    %397 = vmatpush1.bf16.msra.mxu0 0
    %398 = vmatprep.subr.bf16.mxu0 0
    %399 = vmatpush1.bf16.msra.mxu0 0
    %400 = vmatprep.subr.bf16.mxu0 0
    %401 = vmatpush1.bf16.msra.mxu0 0
    %402 = vmatprep.subr.bf16.mxu0 0
    %403 = vmatpush1.bf16.msra.mxu0 0
    %404 = vmatprep.subr.bf16.mxu0 0
    %405 = vmatpush1.bf16.msra.mxu0 0
    %406 = vmatprep.mubr.bf16.mxu0 0
    %407 = vmatmul.mubr.bf16.gmra.mrb[0].mxu0 %v265
    %v408 = vpop.f32.mrb[0].mxu0
    %v409 = vadd.f32 %v287, %v408
    %v410 = vpop.f32.mrb[0].mxu0
    %v411 = vadd.f32 %v291, %v410
    %v412 = vpop.f32.mrb[0].mxu0
    %v413 = vpop.f32.mrb[0].mxu0
    %414 = vdwg.mxu0
    %vm415 = vcmp.ge.f32.partialorder %v409, 0.0
    %vm416 = vcmp.ge.f32.partialorder %v411, 0.0
    %v417 = vmul.f32 %v409, 0.2
    %v418 = vmul.f32 %v411, 0.2
    %v419 = vsel %vm415, %v409, %v417
    %v420 = vsel %vm416, %v411, %v418
    %v421 = vpack.c.bf16 %v419, %v419
    %v422 = vpack.c.bf16 %v420, %v420
    %v423 = vld [vmem:[#allocation11] sm:$0xff]
    %v424 = vld [vmem:[#allocation11 + $0x8] sm:$0xff]
    %v425 = vld [vmem:[#allocation11 + $0x10] sm:$0xff]
    %v426 = vld [vmem:[#allocation11 + $0x18] sm:$0xff]
    %v427 = vld [vmem:[#allocation11 + $0x20] sm:$0xff]
    %v428 = vld [vmem:[#allocation11 + $0x28] sm:$0xff]
    %v429 = vld [vmem:[#allocation11 + $0x30] sm:$0xff]
    %v430 = vld [vmem:[#allocation11 + $0x38] sm:$0xff]
    %v431 = vld [vmem:[#allocation11 + $0x40] sm:$0xff]
    %v432 = vld [vmem:[#allocation11 + $0x48] sm:$0xff]
    %v433 = vld [vmem:[#allocation11 + $0x50] sm:$0xff]
    %v434 = vld [vmem:[#allocation11 + $0x58] sm:$0xff]
    %v435 = vld [vmem:[#allocation11 + $0x60] sm:$0xff]
    %v436 = vld [vmem:[#allocation11 + $0x68] sm:$0xff]
    %v437 = vld [vmem:[#allocation11 + $0x70] sm:$0xff]
    %v438 = vld [vmem:[#allocation11 + $0x78] sm:$0xff]
    %v439 = vld [vmem:[#allocation11 + $0x80] sm:$0xff]
    %v440 = vld [vmem:[#allocation11 + $0x88] sm:$0xff]
    %v441 = vld [vmem:[#allocation11 + $0x90] sm:$0xff]
    %v442 = vld [vmem:[#allocation11 + $0x98] sm:$0xff]
    %v443 = vld [vmem:[#allocation11 + $0xa0] sm:$0xff]
    %v444 = vld [vmem:[#allocation11 + $0xa8] sm:$0xff]
    %v445 = vld [vmem:[#allocation11 + $0xb0] sm:$0xff]
    %v446 = vld [vmem:[#allocation11 + $0xb8] sm:$0xff]
    %v447 = vld [vmem:[#allocation11 + $0xc0] sm:$0xff]
    %v448 = vld [vmem:[#allocation11 + $0xc8] sm:$0xff]
    %v449 = vld [vmem:[#allocation11 + $0xd0] sm:$0xff]
    %v450 = vld [vmem:[#allocation11 + $0xd8] sm:$0xff]
    %v451 = vld [vmem:[#allocation11 + $0xe0] sm:$0xff]
    %v452 = vld [vmem:[#allocation11 + $0xe8] sm:$0xff]
    %v453 = vld [vmem:[#allocation11 + $0xf0] sm:$0xff]
    %v454 = vld [vmem:[#allocation11 + $0xf8] sm:$0xff]
    %v455 = vld [vmem:[#allocation11 + $0x100] sm:$0xff]
    %v456 = vld [vmem:[#allocation11 + $0x108] sm:$0xff]
    %v457 = vld [vmem:[#allocation11 + $0x110] sm:$0xff]
    %v458 = vld [vmem:[#allocation11 + $0x118] sm:$0xff]
    %v459 = vld [vmem:[#allocation11 + $0x120] sm:$0xff]
    %v460 = vld [vmem:[#allocation11 + $0x128] sm:$0xff]
    %v461 = vld [vmem:[#allocation11 + $0x130] sm:$0xff]
    %v462 = vld [vmem:[#allocation11 + $0x138] sm:$0xff]
    %v463 = vld [vmem:[#allocation11 + $0x140] sm:$0xff]
    %v464 = vld [vmem:[#allocation11 + $0x148] sm:$0xff]
    %v465 = vld [vmem:[#allocation11 + $0x150] sm:$0xff]
    %v466 = vld [vmem:[#allocation11 + $0x158] sm:$0xff]
    %v467 = vld [vmem:[#allocation11 + $0x160] sm:$0xff]
    %v468 = vld [vmem:[#allocation11 + $0x168] sm:$0xff]
    %v469 = vld [vmem:[#allocation11 + $0x170] sm:$0xff]
    %v470 = vld [vmem:[#allocation11 + $0x178] sm:$0xff]
    %v471 = vld [vmem:[#allocation11 + $0x180] sm:$0xff]
    %v472 = vld [vmem:[#allocation11 + $0x188] sm:$0xff]
    %v473 = vld [vmem:[#allocation11 + $0x190] sm:$0xff]
    %v474 = vld [vmem:[#allocation11 + $0x198] sm:$0xff]
    %v475 = vld [vmem:[#allocation11 + $0x1a0] sm:$0xff]
    %v476 = vld [vmem:[#allocation11 + $0x1a8] sm:$0xff]
    %v477 = vld [vmem:[#allocation11 + $0x1b0] sm:$0xff]
    %v478 = vld [vmem:[#allocation11 + $0x1b8] sm:$0xff]
    %v479 = vld [vmem:[#allocation11 + $0x1c0] sm:$0xff]
    %v480 = vld [vmem:[#allocation11 + $0x1c8] sm:$0xff]
    %v481 = vld [vmem:[#allocation11 + $0x1d0] sm:$0xff]
    %v482 = vld [vmem:[#allocation11 + $0x1d8] sm:$0xff]
    %v483 = vld [vmem:[#allocation11 + $0x1e0] sm:$0xff]
    %v484 = vld [vmem:[#allocation11 + $0x1e8] sm:$0xff]
    %v485 = vld [vmem:[#allocation11 + $0x1f0] sm:$0xff]
    %v486 = vld [vmem:[#allocation11 + $0x1f8] sm:$0xff]
    %v487 = vld [vmem:[#allocation13] sm:$0xf]
    %v489 = vlaneseq
    %v490 = vshrl.u32 %v489, 7
    %v491 = vsub.s32 0, %v490
    %v492 = vrot.slane %v487, %v491
    %v493 = vlaneseq
    %v494 = vshrl.u32 %v493, 7
    %v495 = vsub.s32 1, %v494
    %v496 = vrot.slane %v487, %v495
    %v497 = vlaneseq
    %v498 = vshrl.u32 %v497, 7
    %v499 = vsub.s32 2, %v498
    %v500 = vrot.slane %v487, %v499
    %v501 = vlaneseq
    %v502 = vshrl.u32 %v501, 7
    %v503 = vsub.s32 3, %v502
    %v504 = vrot.slane %v487, %v503
    %v573 = vunpack.c.l.b16 %v423
    %v574 = vunpack.c.h.b16 %v423
    %v575 = vunpack.c.l.b16 %v424
    %v576 = vunpack.c.h.b16 %v424
    %v577 = vunpack.c.l.b16 %v425
    %v578 = vunpack.c.h.b16 %v425
    %v579 = vunpack.c.l.b16 %v426
    %v580 = vunpack.c.h.b16 %v426
    %v581 = vunpack.c.l.b16 %v427
    %v582 = vunpack.c.h.b16 %v427
    %v583 = vunpack.c.l.b16 %v428
    %v584 = vunpack.c.h.b16 %v428
    %v585 = vunpack.c.l.b16 %v429
    %v586 = vunpack.c.h.b16 %v429
    %v587 = vunpack.c.l.b16 %v430
    %v588 = vunpack.c.h.b16 %v430
    %v589 = vunpack.c.l.b16 %v431
    %v590 = vunpack.c.h.b16 %v431
    %v591 = vunpack.c.l.b16 %v432
    %v592 = vunpack.c.h.b16 %v432
    %v593 = vunpack.c.l.b16 %v433
    %v594 = vunpack.c.h.b16 %v433
    %v595 = vunpack.c.l.b16 %v434
    %v596 = vunpack.c.h.b16 %v434
    %v597 = vunpack.c.l.b16 %v435
    %v598 = vunpack.c.h.b16 %v435
    %v599 = vunpack.c.l.b16 %v436
    %v600 = vunpack.c.h.b16 %v436
    %v601 = vunpack.c.l.b16 %v437
    %v602 = vunpack.c.h.b16 %v437
    %v603 = vunpack.c.l.b16 %v438
    %v604 = vunpack.c.h.b16 %v438
    %v605 = vunpack.c.l.b16 %v439
    %v606 = vunpack.c.h.b16 %v439
    %v607 = vunpack.c.l.b16 %v440
    %v608 = vunpack.c.h.b16 %v440
    %v609 = vunpack.c.l.b16 %v441
    %v610 = vunpack.c.h.b16 %v441
    %v611 = vunpack.c.l.b16 %v442
    %v612 = vunpack.c.h.b16 %v442
    %v613 = vunpack.c.l.b16 %v443
    %v614 = vunpack.c.h.b16 %v443
    %v615 = vunpack.c.l.b16 %v444
    %v616 = vunpack.c.h.b16 %v444
    %v617 = vunpack.c.l.b16 %v445
    %v618 = vunpack.c.h.b16 %v445
    %v619 = vunpack.c.l.b16 %v446
    %v620 = vunpack.c.h.b16 %v446
    %v621 = vunpack.c.l.b16 %v447
    %v622 = vunpack.c.h.b16 %v447
    %v623 = vunpack.c.l.b16 %v448
    %v624 = vunpack.c.h.b16 %v448
    %v625 = vunpack.c.l.b16 %v449
    %v626 = vunpack.c.h.b16 %v449
    %v627 = vunpack.c.l.b16 %v450
    %v628 = vunpack.c.h.b16 %v450
    %v629 = vunpack.c.l.b16 %v451
    %v630 = vunpack.c.h.b16 %v451
    %v631 = vunpack.c.l.b16 %v452
    %v632 = vunpack.c.h.b16 %v452
    %v633 = vunpack.c.l.b16 %v453
    %v634 = vunpack.c.h.b16 %v453
    %v635 = vunpack.c.l.b16 %v454
    %v636 = vunpack.c.h.b16 %v454
    %v637 = vunpack.c.l.b16 %v455
    %v638 = vunpack.c.h.b16 %v455
    %v639 = vunpack.c.l.b16 %v456
    %v640 = vunpack.c.h.b16 %v456
    %v641 = vunpack.c.l.b16 %v457
    %v642 = vunpack.c.h.b16 %v457
    %v643 = vunpack.c.l.b16 %v458
    %v644 = vunpack.c.h.b16 %v458
    %v645 = vunpack.c.l.b16 %v459
    %v646 = vunpack.c.h.b16 %v459
    %v647 = vunpack.c.l.b16 %v460
    %v648 = vunpack.c.h.b16 %v460
    %v649 = vunpack.c.l.b16 %v461
    %v650 = vunpack.c.h.b16 %v461
    %v651 = vunpack.c.l.b16 %v462
    %v652 = vunpack.c.h.b16 %v462
    %v653 = vunpack.c.l.b16 %v463
    %v654 = vunpack.c.h.b16 %v463
    %v655 = vunpack.c.l.b16 %v464
    %v656 = vunpack.c.h.b16 %v464
    %v657 = vunpack.c.l.b16 %v465
    %v658 = vunpack.c.h.b16 %v465
    %v659 = vunpack.c.l.b16 %v466
    %v660 = vunpack.c.h.b16 %v466
    %v661 = vunpack.c.l.b16 %v467
    %v662 = vunpack.c.h.b16 %v467
    %v663 = vunpack.c.l.b16 %v468
    %v664 = vunpack.c.h.b16 %v468
    %v665 = vunpack.c.l.b16 %v469
    %v666 = vunpack.c.h.b16 %v469
    %v667 = vunpack.c.l.b16 %v470
    %v668 = vunpack.c.h.b16 %v470
    %v669 = vunpack.c.l.b16 %v471
    %v670 = vunpack.c.h.b16 %v471
    %v671 = vunpack.c.l.b16 %v472
    %v672 = vunpack.c.h.b16 %v472
    %v673 = vunpack.c.l.b16 %v473
    %v674 = vunpack.c.h.b16 %v473
    %v675 = vunpack.c.l.b16 %v474
    %v676 = vunpack.c.h.b16 %v474
    %v677 = vunpack.c.l.b16 %v475
    %v678 = vunpack.c.h.b16 %v475
    %v679 = vunpack.c.l.b16 %v476
    %v680 = vunpack.c.h.b16 %v476
    %v681 = vunpack.c.l.b16 %v477
    %v682 = vunpack.c.h.b16 %v477
    %v683 = vunpack.c.l.b16 %v478
    %v684 = vunpack.c.h.b16 %v478
    %v685 = vunpack.c.l.b16 %v479
    %v686 = vunpack.c.h.b16 %v479
    %v687 = vunpack.c.l.b16 %v480
    %v688 = vunpack.c.h.b16 %v480
    %v689 = vunpack.c.l.b16 %v481
    %v690 = vunpack.c.h.b16 %v481
    %v691 = vunpack.c.l.b16 %v482
    %v692 = vunpack.c.h.b16 %v482
    %v693 = vunpack.c.l.b16 %v483
    %v694 = vunpack.c.h.b16 %v483
    %v695 = vunpack.c.l.b16 %v484
    %v696 = vunpack.c.h.b16 %v484
    %v697 = vunpack.c.l.b16 %v485
    %v698 = vunpack.c.h.b16 %v485
    %v699 = vunpack.c.l.b16 %v486
    %v700 = vunpack.c.h.b16 %v486
    %v701 = vpack.c.b16 %v577, %v573
    %v702 = vpack.c.b16 %v578, %v574
    %v703 = vpack.c.b16 %v579, %v575
    %v704 = vpack.c.b16 %v580, %v576
    %v705 = vpack.c.b16 %v585, %v581
    %v706 = vpack.c.b16 %v586, %v582
    %v707 = vpack.c.b16 %v587, %v583
    %v708 = vpack.c.b16 %v588, %v584
    %v709 = vpack.c.b16 %v593, %v589
    %v710 = vpack.c.b16 %v594, %v590
    %v711 = vpack.c.b16 %v595, %v591
    %v712 = vpack.c.b16 %v596, %v592
    %v713 = vpack.c.b16 %v601, %v597
    %v714 = vpack.c.b16 %v602, %v598
    %v715 = vpack.c.b16 %v603, %v599
    %v716 = vpack.c.b16 %v604, %v600
    %v717 = vpack.c.b16 %v609, %v605
    %v718 = vpack.c.b16 %v610, %v606
    %v719 = vpack.c.b16 %v611, %v607
    %v720 = vpack.c.b16 %v612, %v608
    %v721 = vpack.c.b16 %v617, %v613
    %v722 = vpack.c.b16 %v618, %v614
    %v723 = vpack.c.b16 %v619, %v615
    %v724 = vpack.c.b16 %v620, %v616
    %v725 = vpack.c.b16 %v625, %v621
    %v726 = vpack.c.b16 %v626, %v622
    %v727 = vpack.c.b16 %v627, %v623
    %v728 = vpack.c.b16 %v628, %v624
    %v729 = vpack.c.b16 %v633, %v629
    %v730 = vpack.c.b16 %v634, %v630
    %v731 = vpack.c.b16 %v635, %v631
    %v732 = vpack.c.b16 %v636, %v632
    %v733 = vpack.c.b16 %v641, %v637
    %v734 = vpack.c.b16 %v642, %v638
    %v735 = vpack.c.b16 %v643, %v639
    %v736 = vpack.c.b16 %v644, %v640
    %v737 = vpack.c.b16 %v649, %v645
    %v738 = vpack.c.b16 %v650, %v646
    %v739 = vpack.c.b16 %v651, %v647
    %v740 = vpack.c.b16 %v652, %v648
    %v741 = vpack.c.b16 %v657, %v653
    %v742 = vpack.c.b16 %v658, %v654
    %v743 = vpack.c.b16 %v659, %v655
    %v744 = vpack.c.b16 %v660, %v656
    %v745 = vpack.c.b16 %v665, %v661
    %v746 = vpack.c.b16 %v666, %v662
    %v747 = vpack.c.b16 %v667, %v663
    %v748 = vpack.c.b16 %v668, %v664
    %v749 = vpack.c.b16 %v673, %v669
    %v750 = vpack.c.b16 %v674, %v670
    %v751 = vpack.c.b16 %v675, %v671
    %v752 = vpack.c.b16 %v676, %v672
    %v753 = vpack.c.b16 %v681, %v677
    %v754 = vpack.c.b16 %v682, %v678
    %v755 = vpack.c.b16 %v683, %v679
    %v756 = vpack.c.b16 %v684, %v680
    %v757 = vpack.c.b16 %v689, %v685
    %v758 = vpack.c.b16 %v690, %v686
    %v759 = vpack.c.b16 %v691, %v687
    %v760 = vpack.c.b16 %v692, %v688
    %v761 = vpack.c.b16 %v697, %v693
    %v762 = vpack.c.b16 %v698, %v694
    %v763 = vpack.c.b16 %v699, %v695
    %v764 = vpack.c.b16 %v700, %v696
    %829 = vmatprep.subr.bf16.mxu0 %v702
    %830 = vmatpush1.bf16.msra.mxu0 %v701
    %831 = vmatprep.subr.bf16.mxu0 %v706
    %832 = vmatpush1.bf16.msra.mxu0 %v705
    %833 = vmatprep.subr.bf16.mxu0 %v710
    %834 = vmatpush1.bf16.msra.mxu0 %v709
    %835 = vmatprep.subr.bf16.mxu0 %v714
    %836 = vmatpush1.bf16.msra.mxu0 %v713
    %837 = vmatprep.subr.bf16.mxu0 %v718
    %838 = vmatpush1.bf16.msra.mxu0 %v717
    %839 = vmatprep.subr.bf16.mxu0 %v722
    %840 = vmatpush1.bf16.msra.mxu0 %v721
    %841 = vmatprep.subr.bf16.mxu0 %v726
    %842 = vmatpush1.bf16.msra.mxu0 %v725
    %843 = vmatprep.subr.bf16.mxu0 %v730
    %844 = vmatpush1.bf16.msra.mxu0 %v729
    %845 = vmatprep.subr.bf16.mxu0 %v734
    %846 = vmatpush1.bf16.msra.mxu0 %v733
    %847 = vmatprep.subr.bf16.mxu0 %v738
    %848 = vmatpush1.bf16.msra.mxu0 %v737
    %849 = vmatprep.subr.bf16.mxu0 %v742
    %850 = vmatpush1.bf16.msra.mxu0 %v741
    %851 = vmatprep.subr.bf16.mxu0 %v746
    %852 = vmatpush1.bf16.msra.mxu0 %v745
    %853 = vmatprep.subr.bf16.mxu0 %v750
    %854 = vmatpush1.bf16.msra.mxu0 %v749
    %855 = vmatprep.subr.bf16.mxu0 %v754
    %856 = vmatpush1.bf16.msra.mxu0 %v753
    %857 = vmatprep.subr.bf16.mxu0 %v758
    %858 = vmatpush1.bf16.msra.mxu0 %v757
    %859 = vmatprep.subr.bf16.mxu0 %v762
    %860 = vmatpush1.bf16.msra.mxu0 %v761
    %861 = vmatprep.mubr.bf16.mxu0 %v422
    %862 = vmatmul.mubr.bf16.gmra.mrb[0].mxu0 %v421
    %v863 = vpop.f32.mrb[0].mxu0
    %v864 = vadd.f32 %v492, %v863
    %v865 = vpop.f32.mrb[0].mxu0
    %v866 = vadd.f32 %v496, %v865
    %v867 = vpop.f32.mrb[0].mxu0
    %v868 = vpop.f32.mrb[0].mxu0
    %869 = vdwg.mxu0
    %870 = vmatprep.subr.bf16.mxu0 %v704
    %871 = vmatpush1.bf16.msra.mxu0 %v703
    %872 = vmatprep.subr.bf16.mxu0 %v708
    %873 = vmatpush1.bf16.msra.mxu0 %v707
    %874 = vmatprep.subr.bf16.mxu0 %v712
    %875 = vmatpush1.bf16.msra.mxu0 %v711
    %876 = vmatprep.subr.bf16.mxu0 %v716
    %877 = vmatpush1.bf16.msra.mxu0 %v715
    %878 = vmatprep.subr.bf16.mxu0 %v720
    %879 = vmatpush1.bf16.msra.mxu0 %v719
    %880 = vmatprep.subr.bf16.mxu0 %v724
    %881 = vmatpush1.bf16.msra.mxu0 %v723
    %882 = vmatprep.subr.bf16.mxu0 %v728
    %883 = vmatpush1.bf16.msra.mxu0 %v727
    %884 = vmatprep.subr.bf16.mxu0 %v732
    %885 = vmatpush1.bf16.msra.mxu0 %v731
    %886 = vmatprep.subr.bf16.mxu0 %v736
    %887 = vmatpush1.bf16.msra.mxu0 %v735
    %888 = vmatprep.subr.bf16.mxu0 %v740
    %889 = vmatpush1.bf16.msra.mxu0 %v739
    %890 = vmatprep.subr.bf16.mxu0 %v744
    %891 = vmatpush1.bf16.msra.mxu0 %v743
    %892 = vmatprep.subr.bf16.mxu0 %v748
    %893 = vmatpush1.bf16.msra.mxu0 %v747
    %894 = vmatprep.subr.bf16.mxu0 %v752
    %895 = vmatpush1.bf16.msra.mxu0 %v751
    %896 = vmatprep.subr.bf16.mxu0 %v756
    %897 = vmatpush1.bf16.msra.mxu0 %v755
    %898 = vmatprep.subr.bf16.mxu0 %v760
    %899 = vmatpush1.bf16.msra.mxu0 %v759
    %900 = vmatprep.subr.bf16.mxu0 %v764
    %901 = vmatpush1.bf16.msra.mxu0 %v763
    %902 = vmatprep.mubr.bf16.mxu0 %v422
    %903 = vmatmul.mubr.bf16.gmra.mrb[0].mxu0 %v421
    %v904 = vpop.f32.mrb[0].mxu0
    %v905 = vadd.f32 %v500, %v904
    %v906 = vpop.f32.mrb[0].mxu0
    %v907 = vadd.f32 %v504, %v906
    %v908 = vpop.f32.mrb[0].mxu0
    %v909 = vpop.f32.mrb[0].mxu0
    %910 = vdwg.mxu0
    %vm911 = vcmp.ge.f32.partialorder %v864, 0.0
    %vm912 = vcmp.ge.f32.partialorder %v866, 0.0
    %vm913 = vcmp.ge.f32.partialorder %v905, 0.0
    %vm914 = vcmp.ge.f32.partialorder %v907, 0.0
    %v915 = vmul.f32 %v864, 0.2
    %v916 = vmul.f32 %v866, 0.2
    %v917 = vmul.f32 %v905, 0.2
    %v918 = vmul.f32 %v907, 0.2
    %v919 = vsel %vm911, %v864, %v915
    %v920 = vsel %vm912, %v866, %v916
    %v921 = vsel %vm913, %v905, %v917
    %v922 = vsel %vm914, %v907, %v918
    %v923 = vpack.c.bf16 %v919, %v919
    %v924 = vpack.c.bf16 %v920, %v920
    %v925 = vpack.c.bf16 %v921, %v921
    %v926 = vpack.c.bf16 %v922, %v922
    %v927 = vld [vmem:[#allocation14] sm:$0xff]
    %v928 = vld [vmem:[#allocation14 + $0x8] sm:$0xff]
    %v929 = vld [vmem:[#allocation14 + $0x10] sm:$0xff]
    %v930 = vld [vmem:[#allocation14 + $0x18] sm:$0xff]
    %v931 = vld [vmem:[#allocation14 + $0x20] sm:$0xff]
    %v932 = vld [vmem:[#allocation14 + $0x28] sm:$0xff]
    %v933 = vld [vmem:[#allocation14 + $0x30] sm:$0xff]
    %v934 = vld [vmem:[#allocation14 + $0x38] sm:$0xff]
    %v935 = vld [vmem:[#allocation14 + $0x40] sm:$0xff]
    %v936 = vld [vmem:[#allocation14 + $0x48] sm:$0xff]
    %v937 = vld [vmem:[#allocation14 + $0x50] sm:$0xff]
    %v938 = vld [vmem:[#allocation14 + $0x58] sm:$0xff]
    %v939 = vld [vmem:[#allocation14 + $0x60] sm:$0xff]
    %v940 = vld [vmem:[#allocation14 + $0x68] sm:$0xff]
    %v941 = vld [vmem:[#allocation14 + $0x70] sm:$0xff]
    %v942 = vld [vmem:[#allocation14 + $0x78] sm:$0xff]
    %v943 = vld [vmem:[#allocation14 + $0x80] sm:$0xff]
    %v944 = vld [vmem:[#allocation14 + $0x88] sm:$0xff]
    %v945 = vld [vmem:[#allocation14 + $0x90] sm:$0xff]
    %v946 = vld [vmem:[#allocation14 + $0x98] sm:$0xff]
    %v947 = vld [vmem:[#allocation14 + $0xa0] sm:$0xff]
    %v948 = vld [vmem:[#allocation14 + $0xa8] sm:$0xff]
    %v949 = vld [vmem:[#allocation14 + $0xb0] sm:$0xff]
    %v950 = vld [vmem:[#allocation14 + $0xb8] sm:$0xff]
    %v951 = vld [vmem:[#allocation14 + $0xc0] sm:$0xff]
    %v952 = vld [vmem:[#allocation14 + $0xc8] sm:$0xff]
    %v953 = vld [vmem:[#allocation14 + $0xd0] sm:$0xff]
    %v954 = vld [vmem:[#allocation14 + $0xd8] sm:$0xff]
    %v955 = vld [vmem:[#allocation14 + $0xe0] sm:$0xff]
    %v956 = vld [vmem:[#allocation14 + $0xe8] sm:$0xff]
    %v957 = vld [vmem:[#allocation14 + $0xf0] sm:$0xff]
    %v958 = vld [vmem:[#allocation14 + $0xf8] sm:$0xff]
    %v959 = vld [vmem:[#allocation14 + $0x100] sm:$0xff]
    %v960 = vld [vmem:[#allocation14 + $0x108] sm:$0xff]
    %v961 = vld [vmem:[#allocation14 + $0x110] sm:$0xff]
    %v962 = vld [vmem:[#allocation14 + $0x118] sm:$0xff]
    %v963 = vld [vmem:[#allocation14 + $0x120] sm:$0xff]
    %v964 = vld [vmem:[#allocation14 + $0x128] sm:$0xff]
    %v965 = vld [vmem:[#allocation14 + $0x130] sm:$0xff]
    %v966 = vld [vmem:[#allocation14 + $0x138] sm:$0xff]
    %v967 = vld [vmem:[#allocation14 + $0x140] sm:$0xff]
    %v968 = vld [vmem:[#allocation14 + $0x148] sm:$0xff]
    %v969 = vld [vmem:[#allocation14 + $0x150] sm:$0xff]
    %v970 = vld [vmem:[#allocation14 + $0x158] sm:$0xff]
    %v971 = vld [vmem:[#allocation14 + $0x160] sm:$0xff]
    %v972 = vld [vmem:[#allocation14 + $0x168] sm:$0xff]
    %v973 = vld [vmem:[#allocation14 + $0x170] sm:$0xff]
    %v974 = vld [vmem:[#allocation14 + $0x178] sm:$0xff]
    %v975 = vld [vmem:[#allocation14 + $0x180] sm:$0xff]
    %v976 = vld [vmem:[#allocation14 + $0x188] sm:$0xff]
    %v977 = vld [vmem:[#allocation14 + $0x190] sm:$0xff]
    %v978 = vld [vmem:[#allocation14 + $0x198] sm:$0xff]
    %v979 = vld [vmem:[#allocation14 + $0x1a0] sm:$0xff]
    %v980 = vld [vmem:[#allocation14 + $0x1a8] sm:$0xff]
    %v981 = vld [vmem:[#allocation14 + $0x1b0] sm:$0xff]
    %v982 = vld [vmem:[#allocation14 + $0x1b8] sm:$0xff]
    %v983 = vld [vmem:[#allocation14 + $0x1c0] sm:$0xff]
    %v984 = vld [vmem:[#allocation14 + $0x1c8] sm:$0xff]
    %v985 = vld [vmem:[#allocation14 + $0x1d0] sm:$0xff]
    %v986 = vld [vmem:[#allocation14 + $0x1d8] sm:$0xff]
    %v987 = vld [vmem:[#allocation14 + $0x1e0] sm:$0xff]
    %v988 = vld [vmem:[#allocation14 + $0x1e8] sm:$0xff]
    %v989 = vld [vmem:[#allocation14 + $0x1f0] sm:$0xff]
    %v990 = vld [vmem:[#allocation14 + $0x1f8] sm:$0xff]
    %v991 = vld [vmem:[#allocation14 + $0x200] sm:$0xff]
    %v992 = vld [vmem:[#allocation14 + $0x208] sm:$0xff]
    %v993 = vld [vmem:[#allocation14 + $0x210] sm:$0xff]
    %v994 = vld [vmem:[#allocation14 + $0x218] sm:$0xff]
    %v995 = vld [vmem:[#allocation14 + $0x220] sm:$0xff]
    %v996 = vld [vmem:[#allocation14 + $0x228] sm:$0xff]
    %v997 = vld [vmem:[#allocation14 + $0x230] sm:$0xff]
    %v998 = vld [vmem:[#allocation14 + $0x238] sm:$0xff]
    %v999 = vld [vmem:[#allocation14 + $0x240] sm:$0xff]
    %v1000 = vld [vmem:[#allocation14 + $0x248] sm:$0xff]
    %v1001 = vld [vmem:[#allocation14 + $0x250] sm:$0xff]
    %v1002 = vld [vmem:[#allocation14 + $0x258] sm:$0xff]
    %v1003 = vld [vmem:[#allocation14 + $0x260] sm:$0xff]
    %v1004 = vld [vmem:[#allocation14 + $0x268] sm:$0xff]
    %v1005 = vld [vmem:[#allocation14 + $0x270] sm:$0xff]
    %v1006 = vld [vmem:[#allocation14 + $0x278] sm:$0xff]
    %v1007 = vld [vmem:[#allocation14 + $0x280] sm:$0xff]
    %v1008 = vld [vmem:[#allocation14 + $0x288] sm:$0xff]
    %v1009 = vld [vmem:[#allocation14 + $0x290] sm:$0xff]
    %v1010 = vld [vmem:[#allocation14 + $0x298] sm:$0xff]
    %v1011 = vld [vmem:[#allocation14 + $0x2a0] sm:$0xff]
    %v1012 = vld [vmem:[#allocation14 + $0x2a8] sm:$0xff]
    %v1013 = vld [vmem:[#allocation14 + $0x2b0] sm:$0xff]
    %v1014 = vld [vmem:[#allocation14 + $0x2b8] sm:$0xff]
    %v1015 = vld [vmem:[#allocation14 + $0x2c0] sm:$0xff]
    %v1016 = vld [vmem:[#allocation14 + $0x2c8] sm:$0xff]
    %v1017 = vld [vmem:[#allocation14 + $0x2d0] sm:$0xff]
    %v1018 = vld [vmem:[#allocation14 + $0x2d8] sm:$0xff]
    %v1019 = vld [vmem:[#allocation14 + $0x2e0] sm:$0xff]
    %v1020 = vld [vmem:[#allocation14 + $0x2e8] sm:$0xff]
    %v1021 = vld [vmem:[#allocation14 + $0x2f0] sm:$0xff]
    %v1022 = vld [vmem:[#allocation14 + $0x2f8] sm:$0xff]
    %v1023 = vld [vmem:[#allocation14 + $0x300] sm:$0xff]
    %v1024 = vld [vmem:[#allocation14 + $0x308] sm:$0xff]
    %v1025 = vld [vmem:[#allocation14 + $0x310] sm:$0xff]
    %v1026 = vld [vmem:[#allocation14 + $0x318] sm:$0xff]
    %v1027 = vld [vmem:[#allocation14 + $0x320] sm:$0xff]
    %v1028 = vld [vmem:[#allocation14 + $0x328] sm:$0xff]
    %v1029 = vld [vmem:[#allocation14 + $0x330] sm:$0xff]
    %v1030 = vld [vmem:[#allocation14 + $0x338] sm:$0xff]
    %v1031 = vld [vmem:[#allocation14 + $0x340] sm:$0xff]
    %v1032 = vld [vmem:[#allocation14 + $0x348] sm:$0xff]
    %v1033 = vld [vmem:[#allocation14 + $0x350] sm:$0xff]
    %v1034 = vld [vmem:[#allocation14 + $0x358] sm:$0xff]
    %v1035 = vld [vmem:[#allocation14 + $0x360] sm:$0xff]
    %v1036 = vld [vmem:[#allocation14 + $0x368] sm:$0xff]
    %v1037 = vld [vmem:[#allocation14 + $0x370] sm:$0xff]
    %v1038 = vld [vmem:[#allocation14 + $0x378] sm:$0xff]
    %v1039 = vld [vmem:[#allocation14 + $0x380] sm:$0xff]
    %v1040 = vld [vmem:[#allocation14 + $0x388] sm:$0xff]
    %v1041 = vld [vmem:[#allocation14 + $0x390] sm:$0xff]
    %v1042 = vld [vmem:[#allocation14 + $0x398] sm:$0xff]
    %v1043 = vld [vmem:[#allocation14 + $0x3a0] sm:$0xff]
    %v1044 = vld [vmem:[#allocation14 + $0x3a8] sm:$0xff]
    %v1045 = vld [vmem:[#allocation14 + $0x3b0] sm:$0xff]
    %v1046 = vld [vmem:[#allocation14 + $0x3b8] sm:$0xff]
    %v1047 = vld [vmem:[#allocation14 + $0x3c0] sm:$0xff]
    %v1048 = vld [vmem:[#allocation14 + $0x3c8] sm:$0xff]
    %v1049 = vld [vmem:[#allocation14 + $0x3d0] sm:$0xff]
    %v1050 = vld [vmem:[#allocation14 + $0x3d8] sm:$0xff]
    %v1051 = vld [vmem:[#allocation14 + $0x3e0] sm:$0xff]
    %v1052 = vld [vmem:[#allocation14 + $0x3e8] sm:$0xff]
    %v1053 = vld [vmem:[#allocation14 + $0x3f0] sm:$0xff]
    %v1054 = vld [vmem:[#allocation14 + $0x3f8] sm:$0xff]
    %v1055 = vld [vmem:[#allocation14 + $0x400] sm:$0xff]
    %v1056 = vld [vmem:[#allocation14 + $0x408] sm:$0xff]
    %v1057 = vld [vmem:[#allocation14 + $0x410] sm:$0xff]
    %v1058 = vld [vmem:[#allocation14 + $0x418] sm:$0xff]
    %v1059 = vld [vmem:[#allocation14 + $0x420] sm:$0xff]
    %v1060 = vld [vmem:[#allocation14 + $0x428] sm:$0xff]
    %v1061 = vld [vmem:[#allocation14 + $0x430] sm:$0xff]
    %v1062 = vld [vmem:[#allocation14 + $0x438] sm:$0xff]
    %v1063 = vld [vmem:[#allocation14 + $0x440] sm:$0xff]
    %v1064 = vld [vmem:[#allocation14 + $0x448] sm:$0xff]
    %v1065 = vld [vmem:[#allocation14 + $0x450] sm:$0xff]
    %v1066 = vld [vmem:[#allocation14 + $0x458] sm:$0xff]
    %v1067 = vld [vmem:[#allocation14 + $0x460] sm:$0xff]
    %v1068 = vld [vmem:[#allocation14 + $0x468] sm:$0xff]
    %v1069 = vld [vmem:[#allocation14 + $0x470] sm:$0xff]
    %v1070 = vld [vmem:[#allocation14 + $0x478] sm:$0xff]
    %v1071 = vld [vmem:[#allocation14 + $0x480] sm:$0xff]
    %v1072 = vld [vmem:[#allocation14 + $0x488] sm:$0xff]
    %v1073 = vld [vmem:[#allocation14 + $0x490] sm:$0xff]
    %v1074 = vld [vmem:[#allocation14 + $0x498] sm:$0xff]
    %v1075 = vld [vmem:[#allocation14 + $0x4a0] sm:$0xff]
    %v1076 = vld [vmem:[#allocation14 + $0x4a8] sm:$0xff]
    %v1077 = vld [vmem:[#allocation14 + $0x4b0] sm:$0xff]
    %v1078 = vld [vmem:[#allocation14 + $0x4b8] sm:$0xff]
    %v1079 = vld [vmem:[#allocation14 + $0x4c0] sm:$0xff]
    %v1080 = vld [vmem:[#allocation14 + $0x4c8] sm:$0xff]
    %v1081 = vld [vmem:[#allocation14 + $0x4d0] sm:$0xff]
    %v1082 = vld [vmem:[#allocation14 + $0x4d8] sm:$0xff]
    %v1083 = vld [vmem:[#allocation14 + $0x4e0] sm:$0xff]
    %v1084 = vld [vmem:[#allocation14 + $0x4e8] sm:$0xff]
    %v1085 = vld [vmem:[#allocation14 + $0x4f0] sm:$0xff]
    %v1086 = vld [vmem:[#allocation14 + $0x4f8] sm:$0xff]
    %v1087 = vld [vmem:[#allocation14 + $0x500] sm:$0xff]
    %v1088 = vld [vmem:[#allocation14 + $0x508] sm:$0xff]
    %v1089 = vld [vmem:[#allocation14 + $0x510] sm:$0xff]
    %v1090 = vld [vmem:[#allocation14 + $0x518] sm:$0xff]
    %v1091 = vld [vmem:[#allocation14 + $0x520] sm:$0xff]
    %v1092 = vld [vmem:[#allocation14 + $0x528] sm:$0xff]
    %v1093 = vld [vmem:[#allocation14 + $0x530] sm:$0xff]
    %v1094 = vld [vmem:[#allocation14 + $0x538] sm:$0xff]
    %v1095 = vld [vmem:[#allocation14 + $0x540] sm:$0xff]
    %v1096 = vld [vmem:[#allocation14 + $0x548] sm:$0xff]
    %v1097 = vld [vmem:[#allocation14 + $0x550] sm:$0xff]
    %v1098 = vld [vmem:[#allocation14 + $0x558] sm:$0xff]
    %v1099 = vld [vmem:[#allocation14 + $0x560] sm:$0xff]
    %v1100 = vld [vmem:[#allocation14 + $0x568] sm:$0xff]
    %v1101 = vld [vmem:[#allocation14 + $0x570] sm:$0xff]
    %v1102 = vld [vmem:[#allocation14 + $0x578] sm:$0xff]
    %v1103 = vld [vmem:[#allocation14 + $0x580] sm:$0xff]
    %v1104 = vld [vmem:[#allocation14 + $0x588] sm:$0xff]
    %v1105 = vld [vmem:[#allocation14 + $0x590] sm:$0xff]
    %v1106 = vld [vmem:[#allocation14 + $0x598] sm:$0xff]
    %v1107 = vld [vmem:[#allocation14 + $0x5a0] sm:$0xff]
    %v1108 = vld [vmem:[#allocation14 + $0x5a8] sm:$0xff]
    %v1109 = vld [vmem:[#allocation14 + $0x5b0] sm:$0xff]
    %v1110 = vld [vmem:[#allocation14 + $0x5b8] sm:$0xff]
    %v1111 = vld [vmem:[#allocation14 + $0x5c0] sm:$0xff]
    %v1112 = vld [vmem:[#allocation14 + $0x5c8] sm:$0xff]
    %v1113 = vld [vmem:[#allocation14 + $0x5d0] sm:$0xff]
    %v1114 = vld [vmem:[#allocation14 + $0x5d8] sm:$0xff]
    %v1115 = vld [vmem:[#allocation14 + $0x5e0] sm:$0xff]
    %v1116 = vld [vmem:[#allocation14 + $0x5e8] sm:$0xff]
    %v1117 = vld [vmem:[#allocation14 + $0x5f0] sm:$0xff]
    %v1118 = vld [vmem:[#allocation14 + $0x5f8] sm:$0xff]
    %v1119 = vld [vmem:[#allocation14 + $0x600] sm:$0xff]
    %v1120 = vld [vmem:[#allocation14 + $0x608] sm:$0xff]
    %v1121 = vld [vmem:[#allocation14 + $0x610] sm:$0xff]
    %v1122 = vld [vmem:[#allocation14 + $0x618] sm:$0xff]
    %v1123 = vld [vmem:[#allocation14 + $0x620] sm:$0xff]
    %v1124 = vld [vmem:[#allocation14 + $0x628] sm:$0xff]
    %v1125 = vld [vmem:[#allocation14 + $0x630] sm:$0xff]
    %v1126 = vld [vmem:[#allocation14 + $0x638] sm:$0xff]
    %v1127 = vld [vmem:[#allocation14 + $0x640] sm:$0xff]
    %v1128 = vld [vmem:[#allocation14 + $0x648] sm:$0xff]
    %v1129 = vld [vmem:[#allocation14 + $0x650] sm:$0xff]
    %v1130 = vld [vmem:[#allocation14 + $0x658] sm:$0xff]
    %v1131 = vld [vmem:[#allocation14 + $0x660] sm:$0xff]
    %v1132 = vld [vmem:[#allocation14 + $0x668] sm:$0xff]
    %v1133 = vld [vmem:[#allocation14 + $0x670] sm:$0xff]
    %v1134 = vld [vmem:[#allocation14 + $0x678] sm:$0xff]
    %v1135 = vld [vmem:[#allocation14 + $0x680] sm:$0xff]
    %v1136 = vld [vmem:[#allocation14 + $0x688] sm:$0xff]
    %v1137 = vld [vmem:[#allocation14 + $0x690] sm:$0xff]
    %v1138 = vld [vmem:[#allocation14 + $0x698] sm:$0xff]
    %v1139 = vld [vmem:[#allocation14 + $0x6a0] sm:$0xff]
    %v1140 = vld [vmem:[#allocation14 + $0x6a8] sm:$0xff]
    %v1141 = vld [vmem:[#allocation14 + $0x6b0] sm:$0xff]
    %v1142 = vld [vmem:[#allocation14 + $0x6b8] sm:$0xff]
    %v1143 = vld [vmem:[#allocation14 + $0x6c0] sm:$0xff]
    %v1144 = vld [vmem:[#allocation14 + $0x6c8] sm:$0xff]
    %v1145 = vld [vmem:[#allocation14 + $0x6d0] sm:$0xff]
    %v1146 = vld [vmem:[#allocation14 + $0x6d8] sm:$0xff]
    %v1147 = vld [vmem:[#allocation14 + $0x6e0] sm:$0xff]
    %v1148 = vld [vmem:[#allocation14 + $0x6e8] sm:$0xff]
    %v1149 = vld [vmem:[#allocation14 + $0x6f0] sm:$0xff]
    %v1150 = vld [vmem:[#allocation14 + $0x6f8] sm:$0xff]
    %v1151 = vld [vmem:[#allocation14 + $0x700] sm:$0xff]
    %v1152 = vld [vmem:[#allocation14 + $0x708] sm:$0xff]
    %v1153 = vld [vmem:[#allocation14 + $0x710] sm:$0xff]
    %v1154 = vld [vmem:[#allocation14 + $0x718] sm:$0xff]
    %v1155 = vld [vmem:[#allocation14 + $0x720] sm:$0xff]
    %v1156 = vld [vmem:[#allocation14 + $0x728] sm:$0xff]
    %v1157 = vld [vmem:[#allocation14 + $0x730] sm:$0xff]
    %v1158 = vld [vmem:[#allocation14 + $0x738] sm:$0xff]
    %v1159 = vld [vmem:[#allocation14 + $0x740] sm:$0xff]
    %v1160 = vld [vmem:[#allocation14 + $0x748] sm:$0xff]
    %v1161 = vld [vmem:[#allocation14 + $0x750] sm:$0xff]
    %v1162 = vld [vmem:[#allocation14 + $0x758] sm:$0xff]
    %v1163 = vld [vmem:[#allocation14 + $0x760] sm:$0xff]
    %v1164 = vld [vmem:[#allocation14 + $0x768] sm:$0xff]
    %v1165 = vld [vmem:[#allocation14 + $0x770] sm:$0xff]
    %v1166 = vld [vmem:[#allocation14 + $0x778] sm:$0xff]
    %v1167 = vld [vmem:[#allocation14 + $0x780] sm:$0xff]
    %v1168 = vld [vmem:[#allocation14 + $0x788] sm:$0xff]
    %v1169 = vld [vmem:[#allocation14 + $0x790] sm:$0xff]
    %v1170 = vld [vmem:[#allocation14 + $0x798] sm:$0xff]
    %v1171 = vld [vmem:[#allocation14 + $0x7a0] sm:$0xff]
    %v1172 = vld [vmem:[#allocation14 + $0x7a8] sm:$0xff]
    %v1173 = vld [vmem:[#allocation14 + $0x7b0] sm:$0xff]
    %v1174 = vld [vmem:[#allocation14 + $0x7b8] sm:$0xff]
    %v1175 = vld [vmem:[#allocation14 + $0x7c0] sm:$0xff]
    %v1176 = vld [vmem:[#allocation14 + $0x7c8] sm:$0xff]
    %v1177 = vld [vmem:[#allocation14 + $0x7d0] sm:$0xff]
    %v1178 = vld [vmem:[#allocation14 + $0x7d8] sm:$0xff]
    %v1179 = vld [vmem:[#allocation14 + $0x7e0] sm:$0xff]
    %v1180 = vld [vmem:[#allocation14 + $0x7e8] sm:$0xff]
    %v1181 = vld [vmem:[#allocation14 + $0x7f0] sm:$0xff]
    %v1182 = vld [vmem:[#allocation14 + $0x7f8] sm:$0xff]
    %v1183 = vld [vmem:[#allocation16] sm:$0xff]
    %v1185 = vlaneseq
    %v1186 = vshrl.u32 %v1185, 7
    %v1187 = vsub.s32 0, %v1186
    %v1188 = vrot.slane %v1183, %v1187
    %v1189 = vlaneseq
    %v1190 = vshrl.u32 %v1189, 7
    %v1191 = vsub.s32 1, %v1190
    %v1192 = vrot.slane %v1183, %v1191
    %v1193 = vlaneseq
    %v1194 = vshrl.u32 %v1193, 7
    %v1195 = vsub.s32 2, %v1194
    %v1196 = vrot.slane %v1183, %v1195
    %v1197 = vlaneseq
    %v1198 = vshrl.u32 %v1197, 7
    %v1199 = vsub.s32 3, %v1198
    %v1200 = vrot.slane %v1183, %v1199
    %v1201 = vlaneseq
    %v1202 = vshrl.u32 %v1201, 7
    %v1203 = vsub.s32 4, %v1202
    %v1204 = vrot.slane %v1183, %v1203
    %v1205 = vlaneseq
    %v1206 = vshrl.u32 %v1205, 7
    %v1207 = vsub.s32 5, %v1206
    %v1208 = vrot.slane %v1183, %v1207
    %v1209 = vlaneseq
    %v1210 = vshrl.u32 %v1209, 7
    %v1211 = vsub.s32 6, %v1210
    %v1212 = vrot.slane %v1183, %v1211
    %v1213 = vlaneseq
    %v1214 = vshrl.u32 %v1213, 7
    %v1215 = vsub.s32 7, %v1214
    %v1216 = vrot.slane %v1183, %v1215
    %v1481 = vunpack.c.l.b16 %v927
    %v1482 = vunpack.c.h.b16 %v927
    %v1483 = vunpack.c.l.b16 %v928
    %v1484 = vunpack.c.h.b16 %v928
    %v1485 = vunpack.c.l.b16 %v929
    %v1486 = vunpack.c.h.b16 %v929
    %v1487 = vunpack.c.l.b16 %v930
    %v1488 = vunpack.c.h.b16 %v930
    %v1489 = vunpack.c.l.b16 %v931
    %v1490 = vunpack.c.h.b16 %v931
    %v1491 = vunpack.c.l.b16 %v932
    %v1492 = vunpack.c.h.b16 %v932
    %v1493 = vunpack.c.l.b16 %v933
    %v1494 = vunpack.c.h.b16 %v933
    %v1495 = vunpack.c.l.b16 %v934
    %v1496 = vunpack.c.h.b16 %v934
    %v1497 = vunpack.c.l.b16 %v935
    %v1498 = vunpack.c.h.b16 %v935
    %v1499 = vunpack.c.l.b16 %v936
    %v1500 = vunpack.c.h.b16 %v936
    %v1501 = vunpack.c.l.b16 %v937
    %v1502 = vunpack.c.h.b16 %v937
    %v1503 = vunpack.c.l.b16 %v938
    %v1504 = vunpack.c.h.b16 %v938
    %v1505 = vunpack.c.l.b16 %v939
    %v1506 = vunpack.c.h.b16 %v939
    %v1507 = vunpack.c.l.b16 %v940
    %v1508 = vunpack.c.h.b16 %v940
    %v1509 = vunpack.c.l.b16 %v941
    %v1510 = vunpack.c.h.b16 %v941
    %v1511 = vunpack.c.l.b16 %v942
    %v1512 = vunpack.c.h.b16 %v942
    %v1513 = vunpack.c.l.b16 %v943
    %v1514 = vunpack.c.h.b16 %v943
    %v1515 = vunpack.c.l.b16 %v944
    %v1516 = vunpack.c.h.b16 %v944
    %v1517 = vunpack.c.l.b16 %v945
    %v1518 = vunpack.c.h.b16 %v945
    %v1519 = vunpack.c.l.b16 %v946
    %v1520 = vunpack.c.h.b16 %v946
    %v1521 = vunpack.c.l.b16 %v947
    %v1522 = vunpack.c.h.b16 %v947
    %v1523 = vunpack.c.l.b16 %v948
    %v1524 = vunpack.c.h.b16 %v948
    %v1525 = vunpack.c.l.b16 %v949
    %v1526 = vunpack.c.h.b16 %v949
    %v1527 = vunpack.c.l.b16 %v950
    %v1528 = vunpack.c.h.b16 %v950
    %v1529 = vunpack.c.l.b16 %v951
    %v1530 = vunpack.c.h.b16 %v951
    %v1531 = vunpack.c.l.b16 %v952
    %v1532 = vunpack.c.h.b16 %v952
    %v1533 = vunpack.c.l.b16 %v953
    %v1534 = vunpack.c.h.b16 %v953
    %v1535 = vunpack.c.l.b16 %v954
    %v1536 = vunpack.c.h.b16 %v954
    %v1537 = vunpack.c.l.b16 %v955
    %v1538 = vunpack.c.h.b16 %v955
    %v1539 = vunpack.c.l.b16 %v956
    %v1540 = vunpack.c.h.b16 %v956
    %v1541 = vunpack.c.l.b16 %v957
    %v1542 = vunpack.c.h.b16 %v957
    %v1543 = vunpack.c.l.b16 %v958
    %v1544 = vunpack.c.h.b16 %v958
    %v1545 = vunpack.c.l.b16 %v959
    %v1546 = vunpack.c.h.b16 %v959
    %v1547 = vunpack.c.l.b16 %v960
    %v1548 = vunpack.c.h.b16 %v960
    %v1549 = vunpack.c.l.b16 %v961
    %v1550 = vunpack.c.h.b16 %v961
    %v1551 = vunpack.c.l.b16 %v962
    %v1552 = vunpack.c.h.b16 %v962
    %v1553 = vunpack.c.l.b16 %v963
    %v1554 = vunpack.c.h.b16 %v963
    %v1555 = vunpack.c.l.b16 %v964
    %v1556 = vunpack.c.h.b16 %v964
    %v1557 = vunpack.c.l.b16 %v965
    %v1558 = vunpack.c.h.b16 %v965
    %v1559 = vunpack.c.l.b16 %v966
    %v1560 = vunpack.c.h.b16 %v966
    %v1561 = vunpack.c.l.b16 %v967
    %v1562 = vunpack.c.h.b16 %v967
    %v1563 = vunpack.c.l.b16 %v968
    %v1564 = vunpack.c.h.b16 %v968
    %v1565 = vunpack.c.l.b16 %v969
    %v1566 = vunpack.c.h.b16 %v969
    %v1567 = vunpack.c.l.b16 %v970
    %v1568 = vunpack.c.h.b16 %v970
    %v1569 = vunpack.c.l.b16 %v971
    %v1570 = vunpack.c.h.b16 %v971
    %v1571 = vunpack.c.l.b16 %v972
    %v1572 = vunpack.c.h.b16 %v972
    %v1573 = vunpack.c.l.b16 %v973
    %v1574 = vunpack.c.h.b16 %v973
    %v1575 = vunpack.c.l.b16 %v974
    %v1576 = vunpack.c.h.b16 %v974
    %v1577 = vunpack.c.l.b16 %v975
    %v1578 = vunpack.c.h.b16 %v975
    %v1579 = vunpack.c.l.b16 %v976
    %v1580 = vunpack.c.h.b16 %v976
    %v1581 = vunpack.c.l.b16 %v977
    %v1582 = vunpack.c.h.b16 %v977
    %v1583 = vunpack.c.l.b16 %v978
    %v1584 = vunpack.c.h.b16 %v978
    %v1585 = vunpack.c.l.b16 %v979
    %v1586 = vunpack.c.h.b16 %v979
    %v1587 = vunpack.c.l.b16 %v980
    %v1588 = vunpack.c.h.b16 %v980
    %v1589 = vunpack.c.l.b16 %v981
    %v1590 = vunpack.c.h.b16 %v981
    %v1591 = vunpack.c.l.b16 %v982
    %v1592 = vunpack.c.h.b16 %v982
    %v1593 = vunpack.c.l.b16 %v983
    %v1594 = vunpack.c.h.b16 %v983
    %v1595 = vunpack.c.l.b16 %v984
    %v1596 = vunpack.c.h.b16 %v984
    %v1597 = vunpack.c.l.b16 %v985
    %v1598 = vunpack.c.h.b16 %v985
    %v1599 = vunpack.c.l.b16 %v986
    %v1600 = vunpack.c.h.b16 %v986
    %v1601 = vunpack.c.l.b16 %v987
    %v1602 = vunpack.c.h.b16 %v987
    %v1603 = vunpack.c.l.b16 %v988
    %v1604 = vunpack.c.h.b16 %v988
    %v1605 = vunpack.c.l.b16 %v989
    %v1606 = vunpack.c.h.b16 %v989
    %v1607 = vunpack.c.l.b16 %v990
    %v1608 = vunpack.c.h.b16 %v990
    %v1609 = vunpack.c.l.b16 %v991
    %v1610 = vunpack.c.h.b16 %v991
    %v1611 = vunpack.c.l.b16 %v992
    %v1612 = vunpack.c.h.b16 %v992
    %v1613 = vunpack.c.l.b16 %v993
    %v1614 = vunpack.c.h.b16 %v993
    %v1615 = vunpack.c.l.b16 %v994
    %v1616 = vunpack.c.h.b16 %v994
    %v1617 = vunpack.c.l.b16 %v995
    %v1618 = vunpack.c.h.b16 %v995
    %v1619 = vunpack.c.l.b16 %v996
    %v1620 = vunpack.c.h.b16 %v996
    %v1621 = vunpack.c.l.b16 %v997
    %v1622 = vunpack.c.h.b16 %v997
    %v1623 = vunpack.c.l.b16 %v998
    %v1624 = vunpack.c.h.b16 %v998
    %v1625 = vunpack.c.l.b16 %v999
    %v1626 = vunpack.c.h.b16 %v999
    %v1627 = vunpack.c.l.b16 %v1000
    %v1628 = vunpack.c.h.b16 %v1000
    %v1629 = vunpack.c.l.b16 %v1001
    %v1630 = vunpack.c.h.b16 %v1001
    %v1631 = vunpack.c.l.b16 %v1002
    %v1632 = vunpack.c.h.b16 %v1002
    %v1633 = vunpack.c.l.b16 %v1003
    %v1634 = vunpack.c.h.b16 %v1003
    %v1635 = vunpack.c.l.b16 %v1004
    %v1636 = vunpack.c.h.b16 %v1004
    %v1637 = vunpack.c.l.b16 %v1005
    %v1638 = vunpack.c.h.b16 %v1005
    %v1639 = vunpack.c.l.b16 %v1006
    %v1640 = vunpack.c.h.b16 %v1006
    %v1641 = vunpack.c.l.b16 %v1007
    %v1642 = vunpack.c.h.b16 %v1007
    %v1643 = vunpack.c.l.b16 %v1008
    %v1644 = vunpack.c.h.b16 %v1008
    %v1645 = vunpack.c.l.b16 %v1009
    %v1646 = vunpack.c.h.b16 %v1009
    %v1647 = vunpack.c.l.b16 %v1010
    %v1648 = vunpack.c.h.b16 %v1010
    %v1649 = vunpack.c.l.b16 %v1011
    %v1650 = vunpack.c.h.b16 %v1011
    %v1651 = vunpack.c.l.b16 %v1012
    %v1652 = vunpack.c.h.b16 %v1012
    %v1653 = vunpack.c.l.b16 %v1013
    %v1654 = vunpack.c.h.b16 %v1013
    %v1655 = vunpack.c.l.b16 %v1014
    %v1656 = vunpack.c.h.b16 %v1014
    %v1657 = vunpack.c.l.b16 %v1015
    %v1658 = vunpack.c.h.b16 %v1015
    %v1659 = vunpack.c.l.b16 %v1016
    %v1660 = vunpack.c.h.b16 %v1016
    %v1661 = vunpack.c.l.b16 %v1017
    %v1662 = vunpack.c.h.b16 %v1017
    %v1663 = vunpack.c.l.b16 %v1018
    %v1664 = vunpack.c.h.b16 %v1018
    %v1665 = vunpack.c.l.b16 %v1019
    %v1666 = vunpack.c.h.b16 %v1019
    %v1667 = vunpack.c.l.b16 %v1020
    %v1668 = vunpack.c.h.b16 %v1020
    %v1669 = vunpack.c.l.b16 %v1021
    %v1670 = vunpack.c.h.b16 %v1021
    %v1671 = vunpack.c.l.b16 %v1022
    %v1672 = vunpack.c.h.b16 %v1022
    %v1673 = vunpack.c.l.b16 %v1023
    %v1674 = vunpack.c.h.b16 %v1023
    %v1675 = vunpack.c.l.b16 %v1024
    %v1676 = vunpack.c.h.b16 %v1024
    %v1677 = vunpack.c.l.b16 %v1025
    %v1678 = vunpack.c.h.b16 %v1025
    %v1679 = vunpack.c.l.b16 %v1026
    %v1680 = vunpack.c.h.b16 %v1026
    %v1681 = vunpack.c.l.b16 %v1027
    %v1682 = vunpack.c.h.b16 %v1027
    %v1683 = vunpack.c.l.b16 %v1028
    %v1684 = vunpack.c.h.b16 %v1028
    %v1685 = vunpack.c.l.b16 %v1029
    %v1686 = vunpack.c.h.b16 %v1029
    %v1687 = vunpack.c.l.b16 %v1030
    %v1688 = vunpack.c.h.b16 %v1030
    %v1689 = vunpack.c.l.b16 %v1031
    %v1690 = vunpack.c.h.b16 %v1031
    %v1691 = vunpack.c.l.b16 %v1032
    %v1692 = vunpack.c.h.b16 %v1032
    %v1693 = vunpack.c.l.b16 %v1033
    %v1694 = vunpack.c.h.b16 %v1033
    %v1695 = vunpack.c.l.b16 %v1034
    %v1696 = vunpack.c.h.b16 %v1034
    %v1697 = vunpack.c.l.b16 %v1035
    %v1698 = vunpack.c.h.b16 %v1035
    %v1699 = vunpack.c.l.b16 %v1036
    %v1700 = vunpack.c.h.b16 %v1036
    %v1701 = vunpack.c.l.b16 %v1037
    %v1702 = vunpack.c.h.b16 %v1037
    %v1703 = vunpack.c.l.b16 %v1038
    %v1704 = vunpack.c.h.b16 %v1038
    %v1705 = vunpack.c.l.b16 %v1039
    %v1706 = vunpack.c.h.b16 %v1039
    %v1707 = vunpack.c.l.b16 %v1040
    %v1708 = vunpack.c.h.b16 %v1040
    %v1709 = vunpack.c.l.b16 %v1041
    %v1710 = vunpack.c.h.b16 %v1041
    %v1711 = vunpack.c.l.b16 %v1042
    %v1712 = vunpack.c.h.b16 %v1042
    %v1713 = vunpack.c.l.b16 %v1043
    %v1714 = vunpack.c.h.b16 %v1043
    %v1715 = vunpack.c.l.b16 %v1044
    %v1716 = vunpack.c.h.b16 %v1044
    %v1717 = vunpack.c.l.b16 %v1045
    %v1718 = vunpack.c.h.b16 %v1045
    %v1719 = vunpack.c.l.b16 %v1046
    %v1720 = vunpack.c.h.b16 %v1046
    %v1721 = vunpack.c.l.b16 %v1047
    %v1722 = vunpack.c.h.b16 %v1047
    %v1723 = vunpack.c.l.b16 %v1048
    %v1724 = vunpack.c.h.b16 %v1048
    %v1725 = vunpack.c.l.b16 %v1049
    %v1726 = vunpack.c.h.b16 %v1049
    %v1727 = vunpack.c.l.b16 %v1050
    %v1728 = vunpack.c.h.b16 %v1050
    %v1729 = vunpack.c.l.b16 %v1051
    %v1730 = vunpack.c.h.b16 %v1051
    %v1731 = vunpack.c.l.b16 %v1052
    %v1732 = vunpack.c.h.b16 %v1052
    %v1733 = vunpack.c.l.b16 %v1053
    %v1734 = vunpack.c.h.b16 %v1053
    %v1735 = vunpack.c.l.b16 %v1054
    %v1736 = vunpack.c.h.b16 %v1054
    %v1737 = vunpack.c.l.b16 %v1055
    %v1738 = vunpack.c.h.b16 %v1055
    %v1739 = vunpack.c.l.b16 %v1056
    %v1740 = vunpack.c.h.b16 %v1056
    %v1741 = vunpack.c.l.b16 %v1057
    %v1742 = vunpack.c.h.b16 %v1057
    %v1743 = vunpack.c.l.b16 %v1058
    %v1744 = vunpack.c.h.b16 %v1058
    %v1745 = vunpack.c.l.b16 %v1059
    %v1746 = vunpack.c.h.b16 %v1059
    %v1747 = vunpack.c.l.b16 %v1060
    %v1748 = vunpack.c.h.b16 %v1060
    %v1749 = vunpack.c.l.b16 %v1061
    %v1750 = vunpack.c.h.b16 %v1061
    %v1751 = vunpack.c.l.b16 %v1062
    %v1752 = vunpack.c.h.b16 %v1062
    %v1753 = vunpack.c.l.b16 %v1063
    %v1754 = vunpack.c.h.b16 %v1063
    %v1755 = vunpack.c.l.b16 %v1064
    %v1756 = vunpack.c.h.b16 %v1064
    %v1757 = vunpack.c.l.b16 %v1065
    %v1758 = vunpack.c.h.b16 %v1065
    %v1759 = vunpack.c.l.b16 %v1066
    %v1760 = vunpack.c.h.b16 %v1066
    %v1761 = vunpack.c.l.b16 %v1067
    %v1762 = vunpack.c.h.b16 %v1067
    %v1763 = vunpack.c.l.b16 %v1068
    %v1764 = vunpack.c.h.b16 %v1068
    %v1765 = vunpack.c.l.b16 %v1069
    %v1766 = vunpack.c.h.b16 %v1069
    %v1767 = vunpack.c.l.b16 %v1070
    %v1768 = vunpack.c.h.b16 %v1070
    %v1769 = vunpack.c.l.b16 %v1071
    %v1770 = vunpack.c.h.b16 %v1071
    %v1771 = vunpack.c.l.b16 %v1072
    %v1772 = vunpack.c.h.b16 %v1072
    %v1773 = vunpack.c.l.b16 %v1073
    %v1774 = vunpack.c.h.b16 %v1073
    %v1775 = vunpack.c.l.b16 %v1074
    %v1776 = vunpack.c.h.b16 %v1074
    %v1777 = vunpack.c.l.b16 %v1075
    %v1778 = vunpack.c.h.b16 %v1075
    %v1779 = vunpack.c.l.b16 %v1076
    %v1780 = vunpack.c.h.b16 %v1076
    %v1781 = vunpack.c.l.b16 %v1077
    %v1782 = vunpack.c.h.b16 %v1077
    %v1783 = vunpack.c.l.b16 %v1078
    %v1784 = vunpack.c.h.b16 %v1078
    %v1785 = vunpack.c.l.b16 %v1079
    %v1786 = vunpack.c.h.b16 %v1079
    %v1787 = vunpack.c.l.b16 %v1080
    %v1788 = vunpack.c.h.b16 %v1080
    %v1789 = vunpack.c.l.b16 %v1081
    %v1790 = vunpack.c.h.b16 %v1081
    %v1791 = vunpack.c.l.b16 %v1082
    %v1792 = vunpack.c.h.b16 %v1082
    %v1793 = vunpack.c.l.b16 %v1083
    %v1794 = vunpack.c.h.b16 %v1083
    %v1795 = vunpack.c.l.b16 %v1084
    %v1796 = vunpack.c.h.b16 %v1084
    %v1797 = vunpack.c.l.b16 %v1085
    %v1798 = vunpack.c.h.b16 %v1085
    %v1799 = vunpack.c.l.b16 %v1086
    %v1800 = vunpack.c.h.b16 %v1086
    %v1801 = vunpack.c.l.b16 %v1087
    %v1802 = vunpack.c.h.b16 %v1087
    %v1803 = vunpack.c.l.b16 %v1088
    %v1804 = vunpack.c.h.b16 %v1088
    %v1805 = vunpack.c.l.b16 %v1089
    %v1806 = vunpack.c.h.b16 %v1089
    %v1807 = vunpack.c.l.b16 %v1090
    %v1808 = vunpack.c.h.b16 %v1090
    %v1809 = vunpack.c.l.b16 %v1091
    %v1810 = vunpack.c.h.b16 %v1091
    %v1811 = vunpack.c.l.b16 %v1092
    %v1812 = vunpack.c.h.b16 %v1092
    %v1813 = vunpack.c.l.b16 %v1093
    %v1814 = vunpack.c.h.b16 %v1093
    %v1815 = vunpack.c.l.b16 %v1094
    %v1816 = vunpack.c.h.b16 %v1094
    %v1817 = vunpack.c.l.b16 %v1095
    %v1818 = vunpack.c.h.b16 %v1095
    %v1819 = vunpack.c.l.b16 %v1096
    %v1820 = vunpack.c.h.b16 %v1096
    %v1821 = vunpack.c.l.b16 %v1097
    %v1822 = vunpack.c.h.b16 %v1097
    %v1823 = vunpack.c.l.b16 %v1098
    %v1824 = vunpack.c.h.b16 %v1098
    %v1825 = vunpack.c.l.b16 %v1099
    %v1826 = vunpack.c.h.b16 %v1099
    %v1827 = vunpack.c.l.b16 %v1100
    %v1828 = vunpack.c.h.b16 %v1100
    %v1829 = vunpack.c.l.b16 %v1101
    %v1830 = vunpack.c.h.b16 %v1101
    %v1831 = vunpack.c.l.b16 %v1102
    %v1832 = vunpack.c.h.b16 %v1102
    %v1833 = vunpack.c.l.b16 %v1103
    %v1834 = vunpack.c.h.b16 %v1103
    %v1835 = vunpack.c.l.b16 %v1104
    %v1836 = vunpack.c.h.b16 %v1104
    %v1837 = vunpack.c.l.b16 %v1105
    %v1838 = vunpack.c.h.b16 %v1105
    %v1839 = vunpack.c.l.b16 %v1106
    %v1840 = vunpack.c.h.b16 %v1106
    %v1841 = vunpack.c.l.b16 %v1107
    %v1842 = vunpack.c.h.b16 %v1107
    %v1843 = vunpack.c.l.b16 %v1108
    %v1844 = vunpack.c.h.b16 %v1108
    %v1845 = vunpack.c.l.b16 %v1109
    %v1846 = vunpack.c.h.b16 %v1109
    %v1847 = vunpack.c.l.b16 %v1110
    %v1848 = vunpack.c.h.b16 %v1110
    %v1849 = vunpack.c.l.b16 %v1111
    %v1850 = vunpack.c.h.b16 %v1111
    %v1851 = vunpack.c.l.b16 %v1112
    %v1852 = vunpack.c.h.b16 %v1112
    %v1853 = vunpack.c.l.b16 %v1113
    %v1854 = vunpack.c.h.b16 %v1113
    %v1855 = vunpack.c.l.b16 %v1114
    %v1856 = vunpack.c.h.b16 %v1114
    %v1857 = vunpack.c.l.b16 %v1115
    %v1858 = vunpack.c.h.b16 %v1115
    %v1859 = vunpack.c.l.b16 %v1116
    %v1860 = vunpack.c.h.b16 %v1116
    %v1861 = vunpack.c.l.b16 %v1117
    %v1862 = vunpack.c.h.b16 %v1117
    %v1863 = vunpack.c.l.b16 %v1118
    %v1864 = vunpack.c.h.b16 %v1118
    %v1865 = vunpack.c.l.b16 %v1119
    %v1866 = vunpack.c.h.b16 %v1119
    %v1867 = vunpack.c.l.b16 %v1120
    %v1868 = vunpack.c.h.b16 %v1120
    %v1869 = vunpack.c.l.b16 %v1121
    %v1870 = vunpack.c.h.b16 %v1121
    %v1871 = vunpack.c.l.b16 %v1122
    %v1872 = vunpack.c.h.b16 %v1122
    %v1873 = vunpack.c.l.b16 %v1123
    %v1874 = vunpack.c.h.b16 %v1123
    %v1875 = vunpack.c.l.b16 %v1124
    %v1876 = vunpack.c.h.b16 %v1124
    %v1877 = vunpack.c.l.b16 %v1125
    %v1878 = vunpack.c.h.b16 %v1125
    %v1879 = vunpack.c.l.b16 %v1126
    %v1880 = vunpack.c.h.b16 %v1126
    %v1881 = vunpack.c.l.b16 %v1127
    %v1882 = vunpack.c.h.b16 %v1127
    %v1883 = vunpack.c.l.b16 %v1128
    %v1884 = vunpack.c.h.b16 %v1128
    %v1885 = vunpack.c.l.b16 %v1129
    %v1886 = vunpack.c.h.b16 %v1129
    %v1887 = vunpack.c.l.b16 %v1130
    %v1888 = vunpack.c.h.b16 %v1130
    %v1889 = vunpack.c.l.b16 %v1131
    %v1890 = vunpack.c.h.b16 %v1131
    %v1891 = vunpack.c.l.b16 %v1132
    %v1892 = vunpack.c.h.b16 %v1132
    %v1893 = vunpack.c.l.b16 %v1133
    %v1894 = vunpack.c.h.b16 %v1133
    %v1895 = vunpack.c.l.b16 %v1134
    %v1896 = vunpack.c.h.b16 %v1134
    %v1897 = vunpack.c.l.b16 %v1135
    %v1898 = vunpack.c.h.b16 %v1135
    %v1899 = vunpack.c.l.b16 %v1136
    %v1900 = vunpack.c.h.b16 %v1136
    %v1901 = vunpack.c.l.b16 %v1137
    %v1902 = vunpack.c.h.b16 %v1137
    %v1903 = vunpack.c.l.b16 %v1138
    %v1904 = vunpack.c.h.b16 %v1138
    %v1905 = vunpack.c.l.b16 %v1139
    %v1906 = vunpack.c.h.b16 %v1139
    %v1907 = vunpack.c.l.b16 %v1140
    %v1908 = vunpack.c.h.b16 %v1140
    %v1909 = vunpack.c.l.b16 %v1141
    %v1910 = vunpack.c.h.b16 %v1141
    %v1911 = vunpack.c.l.b16 %v1142
    %v1912 = vunpack.c.h.b16 %v1142
    %v1913 = vunpack.c.l.b16 %v1143
    %v1914 = vunpack.c.h.b16 %v1143
    %v1915 = vunpack.c.l.b16 %v1144
    %v1916 = vunpack.c.h.b16 %v1144
    %v1917 = vunpack.c.l.b16 %v1145
    %v1918 = vunpack.c.h.b16 %v1145
    %v1919 = vunpack.c.l.b16 %v1146
    %v1920 = vunpack.c.h.b16 %v1146
    %v1921 = vunpack.c.l.b16 %v1147
    %v1922 = vunpack.c.h.b16 %v1147
    %v1923 = vunpack.c.l.b16 %v1148
    %v1924 = vunpack.c.h.b16 %v1148
    %v1925 = vunpack.c.l.b16 %v1149
    %v1926 = vunpack.c.h.b16 %v1149
    %v1927 = vunpack.c.l.b16 %v1150
    %v1928 = vunpack.c.h.b16 %v1150
    %v1929 = vunpack.c.l.b16 %v1151
    %v1930 = vunpack.c.h.b16 %v1151
    %v1931 = vunpack.c.l.b16 %v1152
    %v1932 = vunpack.c.h.b16 %v1152
    %v1933 = vunpack.c.l.b16 %v1153
    %v1934 = vunpack.c.h.b16 %v1153
    %v1935 = vunpack.c.l.b16 %v1154
    %v1936 = vunpack.c.h.b16 %v1154
    %v1937 = vunpack.c.l.b16 %v1155
    %v1938 = vunpack.c.h.b16 %v1155
    %v1939 = vunpack.c.l.b16 %v1156
    %v1940 = vunpack.c.h.b16 %v1156
    %v1941 = vunpack.c.l.b16 %v1157
    %v1942 = vunpack.c.h.b16 %v1157
    %v1943 = vunpack.c.l.b16 %v1158
    %v1944 = vunpack.c.h.b16 %v1158
    %v1945 = vunpack.c.l.b16 %v1159
    %v1946 = vunpack.c.h.b16 %v1159
    %v1947 = vunpack.c.l.b16 %v1160
    %v1948 = vunpack.c.h.b16 %v1160
    %v1949 = vunpack.c.l.b16 %v1161
    %v1950 = vunpack.c.h.b16 %v1161
    %v1951 = vunpack.c.l.b16 %v1162
    %v1952 = vunpack.c.h.b16 %v1162
    %v1953 = vunpack.c.l.b16 %v1163
    %v1954 = vunpack.c.h.b16 %v1163
    %v1955 = vunpack.c.l.b16 %v1164
    %v1956 = vunpack.c.h.b16 %v1164
    %v1957 = vunpack.c.l.b16 %v1165
    %v1958 = vunpack.c.h.b16 %v1165
    %v1959 = vunpack.c.l.b16 %v1166
    %v1960 = vunpack.c.h.b16 %v1166
    %v1961 = vunpack.c.l.b16 %v1167
    %v1962 = vunpack.c.h.b16 %v1167
    %v1963 = vunpack.c.l.b16 %v1168
    %v1964 = vunpack.c.h.b16 %v1168
    %v1965 = vunpack.c.l.b16 %v1169
    %v1966 = vunpack.c.h.b16 %v1169
    %v1967 = vunpack.c.l.b16 %v1170
    %v1968 = vunpack.c.h.b16 %v1170
    %v1969 = vunpack.c.l.b16 %v1171
    %v1970 = vunpack.c.h.b16 %v1171
    %v1971 = vunpack.c.l.b16 %v1172
    %v1972 = vunpack.c.h.b16 %v1172
    %v1973 = vunpack.c.l.b16 %v1173
    %v1974 = vunpack.c.h.b16 %v1173
    %v1975 = vunpack.c.l.b16 %v1174
    %v1976 = vunpack.c.h.b16 %v1174
    %v1977 = vunpack.c.l.b16 %v1175
    %v1978 = vunpack.c.h.b16 %v1175
    %v1979 = vunpack.c.l.b16 %v1176
    %v1980 = vunpack.c.h.b16 %v1176
    %v1981 = vunpack.c.l.b16 %v1177
    %v1982 = vunpack.c.h.b16 %v1177
    %v1983 = vunpack.c.l.b16 %v1178
    %v1984 = vunpack.c.h.b16 %v1178
    %v1985 = vunpack.c.l.b16 %v1179
    %v1986 = vunpack.c.h.b16 %v1179
    %v1987 = vunpack.c.l.b16 %v1180
    %v1988 = vunpack.c.h.b16 %v1180
    %v1989 = vunpack.c.l.b16 %v1181
    %v1990 = vunpack.c.h.b16 %v1181
    %v1991 = vunpack.c.l.b16 %v1182
    %v1992 = vunpack.c.h.b16 %v1182
    %v1993 = vpack.c.b16 %v1489, %v1481
    %v1994 = vpack.c.b16 %v1490, %v1482
    %v1995 = vpack.c.b16 %v1491, %v1483
    %v1996 = vpack.c.b16 %v1492, %v1484
    %v1997 = vpack.c.b16 %v1493, %v1485
    %v1998 = vpack.c.b16 %v1494, %v1486
    %v1999 = vpack.c.b16 %v1495, %v1487
    %v2000 = vpack.c.b16 %v1496, %v1488
    %v2001 = vpack.c.b16 %v1505, %v1497
    %v2002 = vpack.c.b16 %v1506, %v1498
    %v2003 = vpack.c.b16 %v1507, %v1499
    %v2004 = vpack.c.b16 %v1508, %v1500
    %v2005 = vpack.c.b16 %v1509, %v1501
    %v2006 = vpack.c.b16 %v1510, %v1502
    %v2007 = vpack.c.b16 %v1511, %v1503
    %v2008 = vpack.c.b16 %v1512, %v1504
    %v2009 = vpack.c.b16 %v1521, %v1513
    %v2010 = vpack.c.b16 %v1522, %v1514
    %v2011 = vpack.c.b16 %v1523, %v1515
    %v2012 = vpack.c.b16 %v1524, %v1516
    %v2013 = vpack.c.b16 %v1525, %v1517
    %v2014 = vpack.c.b16 %v1526, %v1518
    %v2015 = vpack.c.b16 %v1527, %v1519
    %v2016 = vpack.c.b16 %v1528, %v1520
    %v2017 = vpack.c.b16 %v1537, %v1529
    %v2018 = vpack.c.b16 %v1538, %v1530
    %v2019 = vpack.c.b16 %v1539, %v1531
    %v2020 = vpack.c.b16 %v1540, %v1532
    %v2021 = vpack.c.b16 %v1541, %v1533
    %v2022 = vpack.c.b16 %v1542, %v1534
    %v2023 = vpack.c.b16 %v1543, %v1535
    %v2024 = vpack.c.b16 %v1544, %v1536
    %v2025 = vpack.c.b16 %v1553, %v1545
    %v2026 = vpack.c.b16 %v1554, %v1546
    %v2027 = vpack.c.b16 %v1555, %v1547
    %v2028 = vpack.c.b16 %v1556, %v1548
    %v2029 = vpack.c.b16 %v1557, %v1549
    %v2030 = vpack.c.b16 %v1558, %v1550
    %v2031 = vpack.c.b16 %v1559, %v1551
    %v2032 = vpack.c.b16 %v1560, %v1552
    %v2033 = vpack.c.b16 %v1569, %v1561
    %v2034 = vpack.c.b16 %v1570, %v1562
    %v2035 = vpack.c.b16 %v1571, %v1563
    %v2036 = vpack.c.b16 %v1572, %v1564
    %v2037 = vpack.c.b16 %v1573, %v1565
    %v2038 = vpack.c.b16 %v1574, %v1566
    %v2039 = vpack.c.b16 %v1575, %v1567
    %v2040 = vpack.c.b16 %v1576, %v1568
    %v2041 = vpack.c.b16 %v1585, %v1577
    %v2042 = vpack.c.b16 %v1586, %v1578
    %v2043 = vpack.c.b16 %v1587, %v1579
    %v2044 = vpack.c.b16 %v1588, %v1580
    %v2045 = vpack.c.b16 %v1589, %v1581
    %v2046 = vpack.c.b16 %v1590, %v1582
    %v2047 = vpack.c.b16 %v1591, %v1583
    %v2048 = vpack.c.b16 %v1592, %v1584
    %v2049 = vpack.c.b16 %v1601, %v1593
    %v2050 = vpack.c.b16 %v1602, %v1594
    %v2051 = vpack.c.b16 %v1603, %v1595
    %v2052 = vpack.c.b16 %v1604, %v1596
    %v2053 = vpack.c.b16 %v1605, %v1597
    %v2054 = vpack.c.b16 %v1606, %v1598
    %v2055 = vpack.c.b16 %v1607, %v1599
    %v2056 = vpack.c.b16 %v1608, %v1600
    %v2057 = vpack.c.b16 %v1617, %v1609
    %v2058 = vpack.c.b16 %v1618, %v1610
    %v2059 = vpack.c.b16 %v1619, %v1611
    %v2060 = vpack.c.b16 %v1620, %v1612
    %v2061 = vpack.c.b16 %v1621, %v1613
    %v2062 = vpack.c.b16 %v1622, %v1614
    %v2063 = vpack.c.b16 %v1623, %v1615
    %v2064 = vpack.c.b16 %v1624, %v1616
    %v2065 = vpack.c.b16 %v1633, %v1625
    %v2066 = vpack.c.b16 %v1634, %v1626
    %v2067 = vpack.c.b16 %v1635, %v1627
    %v2068 = vpack.c.b16 %v1636, %v1628
    %v2069 = vpack.c.b16 %v1637, %v1629
    %v2070 = vpack.c.b16 %v1638, %v1630
    %v2071 = vpack.c.b16 %v1639, %v1631
    %v2072 = vpack.c.b16 %v1640, %v1632
    %v2073 = vpack.c.b16 %v1649, %v1641
    %v2074 = vpack.c.b16 %v1650, %v1642
    %v2075 = vpack.c.b16 %v1651, %v1643
    %v2076 = vpack.c.b16 %v1652, %v1644
    %v2077 = vpack.c.b16 %v1653, %v1645
    %v2078 = vpack.c.b16 %v1654, %v1646
    %v2079 = vpack.c.b16 %v1655, %v1647
    %v2080 = vpack.c.b16 %v1656, %v1648
    %v2081 = vpack.c.b16 %v1665, %v1657
    %v2082 = vpack.c.b16 %v1666, %v1658
    %v2083 = vpack.c.b16 %v1667, %v1659
    %v2084 = vpack.c.b16 %v1668, %v1660
    %v2085 = vpack.c.b16 %v1669, %v1661
    %v2086 = vpack.c.b16 %v1670, %v1662
    %v2087 = vpack.c.b16 %v1671, %v1663
    %v2088 = vpack.c.b16 %v1672, %v1664
    %v2089 = vpack.c.b16 %v1681, %v1673
    %v2090 = vpack.c.b16 %v1682, %v1674
    %v2091 = vpack.c.b16 %v1683, %v1675
    %v2092 = vpack.c.b16 %v1684, %v1676
    %v2093 = vpack.c.b16 %v1685, %v1677
    %v2094 = vpack.c.b16 %v1686, %v1678
    %v2095 = vpack.c.b16 %v1687, %v1679
    %v2096 = vpack.c.b16 %v1688, %v1680
    %v2097 = vpack.c.b16 %v1697, %v1689
    %v2098 = vpack.c.b16 %v1698, %v1690
    %v2099 = vpack.c.b16 %v1699, %v1691
    %v2100 = vpack.c.b16 %v1700, %v1692
    %v2101 = vpack.c.b16 %v1701, %v1693
    %v2102 = vpack.c.b16 %v1702, %v1694
    %v2103 = vpack.c.b16 %v1703, %v1695
    %v2104 = vpack.c.b16 %v1704, %v1696
    %v2105 = vpack.c.b16 %v1713, %v1705
    %v2106 = vpack.c.b16 %v1714, %v1706
    %v2107 = vpack.c.b16 %v1715, %v1707
    %v2108 = vpack.c.b16 %v1716, %v1708
    %v2109 = vpack.c.b16 %v1717, %v1709
    %v2110 = vpack.c.b16 %v1718, %v1710
    %v2111 = vpack.c.b16 %v1719, %v1711
    %v2112 = vpack.c.b16 %v1720, %v1712
    %v2113 = vpack.c.b16 %v1729, %v1721
    %v2114 = vpack.c.b16 %v1730, %v1722
    %v2115 = vpack.c.b16 %v1731, %v1723
    %v2116 = vpack.c.b16 %v1732, %v1724
    %v2117 = vpack.c.b16 %v1733, %v1725
    %v2118 = vpack.c.b16 %v1734, %v1726
    %v2119 = vpack.c.b16 %v1735, %v1727
    %v2120 = vpack.c.b16 %v1736, %v1728
    %v2121 = vpack.c.b16 %v1745, %v1737
    %v2122 = vpack.c.b16 %v1746, %v1738
    %v2123 = vpack.c.b16 %v1747, %v1739
    %v2124 = vpack.c.b16 %v1748, %v1740
    %v2125 = vpack.c.b16 %v1749, %v1741
    %v2126 = vpack.c.b16 %v1750, %v1742
    %v2127 = vpack.c.b16 %v1751, %v1743
    %v2128 = vpack.c.b16 %v1752, %v1744
    %v2129 = vpack.c.b16 %v1761, %v1753
    %v2130 = vpack.c.b16 %v1762, %v1754
    %v2131 = vpack.c.b16 %v1763, %v1755
    %v2132 = vpack.c.b16 %v1764, %v1756
    %v2133 = vpack.c.b16 %v1765, %v1757
    %v2134 = vpack.c.b16 %v1766, %v1758
    %v2135 = vpack.c.b16 %v1767, %v1759
    %v2136 = vpack.c.b16 %v1768, %v1760
    %v2137 = vpack.c.b16 %v1777, %v1769
    %v2138 = vpack.c.b16 %v1778, %v1770
    %v2139 = vpack.c.b16 %v1779, %v1771
    %v2140 = vpack.c.b16 %v1780, %v1772
    %v2141 = vpack.c.b16 %v1781, %v1773
    %v2142 = vpack.c.b16 %v1782, %v1774
    %v2143 = vpack.c.b16 %v1783, %v1775
    %v2144 = vpack.c.b16 %v1784, %v1776
    %v2145 = vpack.c.b16 %v1793, %v1785
    %v2146 = vpack.c.b16 %v1794, %v1786
    %v2147 = vpack.c.b16 %v1795, %v1787
    %v2148 = vpack.c.b16 %v1796, %v1788
    %v2149 = vpack.c.b16 %v1797, %v1789
    %v2150 = vpack.c.b16 %v1798, %v1790
    %v2151 = vpack.c.b16 %v1799, %v1791
    %v2152 = vpack.c.b16 %v1800, %v1792
    %v2153 = vpack.c.b16 %v1809, %v1801
    %v2154 = vpack.c.b16 %v1810, %v1802
    %v2155 = vpack.c.b16 %v1811, %v1803
    %v2156 = vpack.c.b16 %v1812, %v1804
    %v2157 = vpack.c.b16 %v1813, %v1805
    %v2158 = vpack.c.b16 %v1814, %v1806
    %v2159 = vpack.c.b16 %v1815, %v1807
    %v2160 = vpack.c.b16 %v1816, %v1808
    %v2161 = vpack.c.b16 %v1825, %v1817
    %v2162 = vpack.c.b16 %v1826, %v1818
    %v2163 = vpack.c.b16 %v1827, %v1819
    %v2164 = vpack.c.b16 %v1828, %v1820
    %v2165 = vpack.c.b16 %v1829, %v1821
    %v2166 = vpack.c.b16 %v1830, %v1822
    %v2167 = vpack.c.b16 %v1831, %v1823
    %v2168 = vpack.c.b16 %v1832, %v1824
    %v2169 = vpack.c.b16 %v1841, %v1833
    %v2170 = vpack.c.b16 %v1842, %v1834
    %v2171 = vpack.c.b16 %v1843, %v1835
    %v2172 = vpack.c.b16 %v1844, %v1836
    %v2173 = vpack.c.b16 %v1845, %v1837
    %v2174 = vpack.c.b16 %v1846, %v1838
    %v2175 = vpack.c.b16 %v1847, %v1839
    %v2176 = vpack.c.b16 %v1848, %v1840
    %v2177 = vpack.c.b16 %v1857, %v1849
    %v2178 = vpack.c.b16 %v1858, %v1850
    %v2179 = vpack.c.b16 %v1859, %v1851
    %v2180 = vpack.c.b16 %v1860, %v1852
    %v2181 = vpack.c.b16 %v1861, %v1853
    %v2182 = vpack.c.b16 %v1862, %v1854
    %v2183 = vpack.c.b16 %v1863, %v1855
    %v2184 = vpack.c.b16 %v1864, %v1856
    %v2185 = vpack.c.b16 %v1873, %v1865
    %v2186 = vpack.c.b16 %v1874, %v1866
    %v2187 = vpack.c.b16 %v1875, %v1867
    %v2188 = vpack.c.b16 %v1876, %v1868
    %v2189 = vpack.c.b16 %v1877, %v1869
    %v2190 = vpack.c.b16 %v1878, %v1870
    %v2191 = vpack.c.b16 %v1879, %v1871
    %v2192 = vpack.c.b16 %v1880, %v1872
    %v2193 = vpack.c.b16 %v1889, %v1881
    %v2194 = vpack.c.b16 %v1890, %v1882
    %v2195 = vpack.c.b16 %v1891, %v1883
    %v2196 = vpack.c.b16 %v1892, %v1884
    %v2197 = vpack.c.b16 %v1893, %v1885
    %v2198 = vpack.c.b16 %v1894, %v1886
    %v2199 = vpack.c.b16 %v1895, %v1887
    %v2200 = vpack.c.b16 %v1896, %v1888
    %v2201 = vpack.c.b16 %v1905, %v1897
    %v2202 = vpack.c.b16 %v1906, %v1898
    %v2203 = vpack.c.b16 %v1907, %v1899
    %v2204 = vpack.c.b16 %v1908, %v1900
    %v2205 = vpack.c.b16 %v1909, %v1901
    %v2206 = vpack.c.b16 %v1910, %v1902
    %v2207 = vpack.c.b16 %v1911, %v1903
    %v2208 = vpack.c.b16 %v1912, %v1904
    %v2209 = vpack.c.b16 %v1921, %v1913
    %v2210 = vpack.c.b16 %v1922, %v1914
    %v2211 = vpack.c.b16 %v1923, %v1915
    %v2212 = vpack.c.b16 %v1924, %v1916
    %v2213 = vpack.c.b16 %v1925, %v1917
    %v2214 = vpack.c.b16 %v1926, %v1918
    %v2215 = vpack.c.b16 %v1927, %v1919
    %v2216 = vpack.c.b16 %v1928, %v1920
    %v2217 = vpack.c.b16 %v1937, %v1929
    %v2218 = vpack.c.b16 %v1938, %v1930
    %v2219 = vpack.c.b16 %v1939, %v1931
    %v2220 = vpack.c.b16 %v1940, %v1932
    %v2221 = vpack.c.b16 %v1941, %v1933
    %v2222 = vpack.c.b16 %v1942, %v1934
    %v2223 = vpack.c.b16 %v1943, %v1935
    %v2224 = vpack.c.b16 %v1944, %v1936
    %v2225 = vpack.c.b16 %v1953, %v1945
    %v2226 = vpack.c.b16 %v1954, %v1946
    %v2227 = vpack.c.b16 %v1955, %v1947
    %v2228 = vpack.c.b16 %v1956, %v1948
    %v2229 = vpack.c.b16 %v1957, %v1949
    %v2230 = vpack.c.b16 %v1958, %v1950
    %v2231 = vpack.c.b16 %v1959, %v1951
    %v2232 = vpack.c.b16 %v1960, %v1952
    %v2233 = vpack.c.b16 %v1969, %v1961
    %v2234 = vpack.c.b16 %v1970, %v1962
    %v2235 = vpack.c.b16 %v1971, %v1963
    %v2236 = vpack.c.b16 %v1972, %v1964
    %v2237 = vpack.c.b16 %v1973, %v1965
    %v2238 = vpack.c.b16 %v1974, %v1966
    %v2239 = vpack.c.b16 %v1975, %v1967
    %v2240 = vpack.c.b16 %v1976, %v1968
    %v2241 = vpack.c.b16 %v1985, %v1977
    %v2242 = vpack.c.b16 %v1986, %v1978
    %v2243 = vpack.c.b16 %v1987, %v1979
    %v2244 = vpack.c.b16 %v1988, %v1980
    %v2245 = vpack.c.b16 %v1989, %v1981
    %v2246 = vpack.c.b16 %v1990, %v1982
    %v2247 = vpack.c.b16 %v1991, %v1983
    %v2248 = vpack.c.b16 %v1992, %v1984
    %2505 = vmatprep.subr.bf16.mxu0 %v1994
    %2506 = vmatpush1.bf16.msra.mxu0 %v1993
    %2507 = vmatprep.subr.bf16.mxu0 %v2002
    %2508 = vmatpush1.bf16.msra.mxu0 %v2001
    %2509 = vmatprep.subr.bf16.mxu0 %v2010
    %2510 = vmatpush1.bf16.msra.mxu0 %v2009
    %2511 = vmatprep.subr.bf16.mxu0 %v2018
    %2512 = vmatpush1.bf16.msra.mxu0 %v2017
    %2513 = vmatprep.subr.bf16.mxu0 %v2026
    %2514 = vmatpush1.bf16.msra.mxu0 %v2025
    %2515 = vmatprep.subr.bf16.mxu0 %v2034
    %2516 = vmatpush1.bf16.msra.mxu0 %v2033
    %2517 = vmatprep.subr.bf16.mxu0 %v2042
    %2518 = vmatpush1.bf16.msra.mxu0 %v2041
    %2519 = vmatprep.subr.bf16.mxu0 %v2050
    %2520 = vmatpush1.bf16.msra.mxu0 %v2049
    %2521 = vmatprep.subr.bf16.mxu0 %v2058
    %2522 = vmatpush1.bf16.msra.mxu0 %v2057
    %2523 = vmatprep.subr.bf16.mxu0 %v2066
    %2524 = vmatpush1.bf16.msra.mxu0 %v2065
    %2525 = vmatprep.subr.bf16.mxu0 %v2074
    %2526 = vmatpush1.bf16.msra.mxu0 %v2073
    %2527 = vmatprep.subr.bf16.mxu0 %v2082
    %2528 = vmatpush1.bf16.msra.mxu0 %v2081
    %2529 = vmatprep.subr.bf16.mxu0 %v2090
    %2530 = vmatpush1.bf16.msra.mxu0 %v2089
    %2531 = vmatprep.subr.bf16.mxu0 %v2098
    %2532 = vmatpush1.bf16.msra.mxu0 %v2097
    %2533 = vmatprep.subr.bf16.mxu0 %v2106
    %2534 = vmatpush1.bf16.msra.mxu0 %v2105
    %2535 = vmatprep.subr.bf16.mxu0 %v2114
    %2536 = vmatpush1.bf16.msra.mxu0 %v2113
    %2537 = vmatprep.mubr.bf16.mxu0 %v924
    %2538 = vmatmul.mubr.bf16.gmra.mrb[0].mxu0 %v923
    %v2539 = vpop.f32.mrb[0].mxu0
    %v2540 = vadd.f32 %v1188, %v2539
    %v2541 = vpop.f32.mrb[0].mxu0
    %v2542 = vadd.f32 %v1192, %v2541
    %v2543 = vpop.f32.mrb[0].mxu0
    %v2544 = vpop.f32.mrb[0].mxu0
    %2545 = vdwg.mxu0
    %2546 = vmatprep.subr.bf16.mxu0 %v2122
    %2547 = vmatpush1.bf16.msra.mxu0 %v2121
    %2548 = vmatprep.subr.bf16.mxu0 %v2130
    %2549 = vmatpush1.bf16.msra.mxu0 %v2129
    %2550 = vmatprep.subr.bf16.mxu0 %v2138
    %2551 = vmatpush1.bf16.msra.mxu0 %v2137
    %2552 = vmatprep.subr.bf16.mxu0 %v2146
    %2553 = vmatpush1.bf16.msra.mxu0 %v2145
    %2554 = vmatprep.subr.bf16.mxu0 %v2154
    %2555 = vmatpush1.bf16.msra.mxu0 %v2153
    %2556 = vmatprep.subr.bf16.mxu0 %v2162
    %2557 = vmatpush1.bf16.msra.mxu0 %v2161
    %2558 = vmatprep.subr.bf16.mxu0 %v2170
    %2559 = vmatpush1.bf16.msra.mxu0 %v2169
    %2560 = vmatprep.subr.bf16.mxu0 %v2178
    %2561 = vmatpush1.bf16.msra.mxu0 %v2177
    %2562 = vmatprep.subr.bf16.mxu0 %v2186
    %2563 = vmatpush1.bf16.msra.mxu0 %v2185
    %2564 = vmatprep.subr.bf16.mxu0 %v2194
    %2565 = vmatpush1.bf16.msra.mxu0 %v2193
    %2566 = vmatprep.subr.bf16.mxu0 %v2202
    %2567 = vmatpush1.bf16.msra.mxu0 %v2201
    %2568 = vmatprep.subr.bf16.mxu0 %v2210
    %2569 = vmatpush1.bf16.msra.mxu0 %v2209
    %2570 = vmatprep.subr.bf16.mxu0 %v2218
    %2571 = vmatpush1.bf16.msra.mxu0 %v2217
    %2572 = vmatprep.subr.bf16.mxu0 %v2226
    %2573 = vmatpush1.bf16.msra.mxu0 %v2225
    %2574 = vmatprep.subr.bf16.mxu0 %v2234
    %2575 = vmatpush1.bf16.msra.mxu0 %v2233
    %2576 = vmatprep.subr.bf16.mxu0 %v2242
    %2577 = vmatpush1.bf16.msra.mxu0 %v2241
    %2578 = vmatprep.mubr.bf16.mxu0 %v926
    %2579 = vmatmul.mubr.bf16.gmra.mrb[0].mxu0 %v925
    %v2580 = vpop.f32.mrb[0].mxu0
    %v2581 = vadd.f32 %v2540, %v2580
    %v2582 = vpop.f32.mrb[0].mxu0
    %v2583 = vadd.f32 %v2542, %v2582
    %v2584 = vpop.f32.mrb[0].mxu0
    %v2585 = vpop.f32.mrb[0].mxu0
    %2586 = vdwg.mxu0
    %2587 = vmatprep.subr.bf16.mxu0 %v1996
    %2588 = vmatpush1.bf16.msra.mxu0 %v1995
    %2589 = vmatprep.subr.bf16.mxu0 %v2004
    %2590 = vmatpush1.bf16.msra.mxu0 %v2003
    %2591 = vmatprep.subr.bf16.mxu0 %v2012
    %2592 = vmatpush1.bf16.msra.mxu0 %v2011
    %2593 = vmatprep.subr.bf16.mxu0 %v2020
    %2594 = vmatpush1.bf16.msra.mxu0 %v2019
    %2595 = vmatprep.subr.bf16.mxu0 %v2028
    %2596 = vmatpush1.bf16.msra.mxu0 %v2027
    %2597 = vmatprep.subr.bf16.mxu0 %v2036
    %2598 = vmatpush1.bf16.msra.mxu0 %v2035
    %2599 = vmatprep.subr.bf16.mxu0 %v2044
    %2600 = vmatpush1.bf16.msra.mxu0 %v2043
    %2601 = vmatprep.subr.bf16.mxu0 %v2052
    %2602 = vmatpush1.bf16.msra.mxu0 %v2051
    %2603 = vmatprep.subr.bf16.mxu0 %v2060
    %2604 = vmatpush1.bf16.msra.mxu0 %v2059
    %2605 = vmatprep.subr.bf16.mxu0 %v2068
    %2606 = vmatpush1.bf16.msra.mxu0 %v2067
    %2607 = vmatprep.subr.bf16.mxu0 %v2076
    %2608 = vmatpush1.bf16.msra.mxu0 %v2075
    %2609 = vmatprep.subr.bf16.mxu0 %v2084
    %2610 = vmatpush1.bf16.msra.mxu0 %v2083
    %2611 = vmatprep.subr.bf16.mxu0 %v2092
    %2612 = vmatpush1.bf16.msra.mxu0 %v2091
    %2613 = vmatprep.subr.bf16.mxu0 %v2100
    %2614 = vmatpush1.bf16.msra.mxu0 %v2099
    %2615 = vmatprep.subr.bf16.mxu0 %v2108
    %2616 = vmatpush1.bf16.msra.mxu0 %v2107
    %2617 = vmatprep.subr.bf16.mxu0 %v2116
    %2618 = vmatpush1.bf16.msra.mxu0 %v2115
    %2619 = vmatprep.mubr.bf16.mxu0 %v924
    %2620 = vmatmul.mubr.bf16.gmra.mrb[0].mxu0 %v923
    %v2621 = vpop.f32.mrb[0].mxu0
    %v2622 = vadd.f32 %v1196, %v2621
    %v2623 = vpop.f32.mrb[0].mxu0
    %v2624 = vadd.f32 %v1200, %v2623
    %v2625 = vpop.f32.mrb[0].mxu0
    %v2626 = vpop.f32.mrb[0].mxu0
    %2627 = vdwg.mxu0
    %2628 = vmatprep.subr.bf16.mxu0 %v2124
    %2629 = vmatpush1.bf16.msra.mxu0 %v2123
    %2630 = vmatprep.subr.bf16.mxu0 %v2132
    %2631 = vmatpush1.bf16.msra.mxu0 %v2131
    %2632 = vmatprep.subr.bf16.mxu0 %v2140
    %2633 = vmatpush1.bf16.msra.mxu0 %v2139
    %2634 = vmatprep.subr.bf16.mxu0 %v2148
    %2635 = vmatpush1.bf16.msra.mxu0 %v2147
    %2636 = vmatprep.subr.bf16.mxu0 %v2156
    %2637 = vmatpush1.bf16.msra.mxu0 %v2155
    %2638 = vmatprep.subr.bf16.mxu0 %v2164
    %2639 = vmatpush1.bf16.msra.mxu0 %v2163
    %2640 = vmatprep.subr.bf16.mxu0 %v2172
    %2641 = vmatpush1.bf16.msra.mxu0 %v2171
    %2642 = vmatprep.subr.bf16.mxu0 %v2180
    %2643 = vmatpush1.bf16.msra.mxu0 %v2179
    %2644 = vmatprep.subr.bf16.mxu0 %v2188
    %2645 = vmatpush1.bf16.msra.mxu0 %v2187
    %2646 = vmatprep.subr.bf16.mxu0 %v2196
    %2647 = vmatpush1.bf16.msra.mxu0 %v2195
    %2648 = vmatprep.subr.bf16.mxu0 %v2204
    %2649 = vmatpush1.bf16.msra.mxu0 %v2203
    %2650 = vmatprep.subr.bf16.mxu0 %v2212
    %2651 = vmatpush1.bf16.msra.mxu0 %v2211
    %2652 = vmatprep.subr.bf16.mxu0 %v2220
    %2653 = vmatpush1.bf16.msra.mxu0 %v2219
    %2654 = vmatprep.subr.bf16.mxu0 %v2228
    %2655 = vmatpush1.bf16.msra.mxu0 %v2227
    %2656 = vmatprep.subr.bf16.mxu0 %v2236
    %2657 = vmatpush1.bf16.msra.mxu0 %v2235
    %2658 = vmatprep.subr.bf16.mxu0 %v2244
    %2659 = vmatpush1.bf16.msra.mxu0 %v2243
    %2660 = vmatprep.mubr.bf16.mxu0 %v926
    %2661 = vmatmul.mubr.bf16.gmra.mrb[0].mxu0 %v925
    %v2662 = vpop.f32.mrb[0].mxu0
    %v2663 = vadd.f32 %v2622, %v2662
    %v2664 = vpop.f32.mrb[0].mxu0
    %v2665 = vadd.f32 %v2624, %v2664
    %v2666 = vpop.f32.mrb[0].mxu0
    %v2667 = vpop.f32.mrb[0].mxu0
    %2668 = vdwg.mxu0
    %2669 = vmatprep.subr.bf16.mxu0 %v1998
    %2670 = vmatpush1.bf16.msra.mxu0 %v1997
    %2671 = vmatprep.subr.bf16.mxu0 %v2006
    %2672 = vmatpush1.bf16.msra.mxu0 %v2005
    %2673 = vmatprep.subr.bf16.mxu0 %v2014
    %2674 = vmatpush1.bf16.msra.mxu0 %v2013
    %2675 = vmatprep.subr.bf16.mxu0 %v2022
    %2676 = vmatpush1.bf16.msra.mxu0 %v2021
    %2677 = vmatprep.subr.bf16.mxu0 %v2030
    %2678 = vmatpush1.bf16.msra.mxu0 %v2029
    %2679 = vmatprep.subr.bf16.mxu0 %v2038
    %2680 = vmatpush1.bf16.msra.mxu0 %v2037
    %2681 = vmatprep.subr.bf16.mxu0 %v2046
    %2682 = vmatpush1.bf16.msra.mxu0 %v2045
    %2683 = vmatprep.subr.bf16.mxu0 %v2054
    %2684 = vmatpush1.bf16.msra.mxu0 %v2053
    %2685 = vmatprep.subr.bf16.mxu0 %v2062
    %2686 = vmatpush1.bf16.msra.mxu0 %v2061
    %2687 = vmatprep.subr.bf16.mxu0 %v2070
    %2688 = vmatpush1.bf16.msra.mxu0 %v2069
    %2689 = vmatprep.subr.bf16.mxu0 %v2078
    %2690 = vmatpush1.bf16.msra.mxu0 %v2077
    %2691 = vmatprep.subr.bf16.mxu0 %v2086
    %2692 = vmatpush1.bf16.msra.mxu0 %v2085
    %2693 = vmatprep.subr.bf16.mxu0 %v2094
    %2694 = vmatpush1.bf16.msra.mxu0 %v2093
    %2695 = vmatprep.subr.bf16.mxu0 %v2102
    %2696 = vmatpush1.bf16.msra.mxu0 %v2101
    %2697 = vmatprep.subr.bf16.mxu0 %v2110
    %2698 = vmatpush1.bf16.msra.mxu0 %v2109
    %2699 = vmatprep.subr.bf16.mxu0 %v2118
    %2700 = vmatpush1.bf16.msra.mxu0 %v2117
    %2701 = vmatprep.mubr.bf16.mxu0 %v924
    %2702 = vmatmul.mubr.bf16.gmra.mrb[0].mxu0 %v923
    %v2703 = vpop.f32.mrb[0].mxu0
    %v2704 = vadd.f32 %v1204, %v2703
    %v2705 = vpop.f32.mrb[0].mxu0
    %v2706 = vadd.f32 %v1208, %v2705
    %v2707 = vpop.f32.mrb[0].mxu0
    %v2708 = vpop.f32.mrb[0].mxu0
    %2709 = vdwg.mxu0
    %2710 = vmatprep.subr.bf16.mxu0 %v2126
    %2711 = vmatpush1.bf16.msra.mxu0 %v2125
    %2712 = vmatprep.subr.bf16.mxu0 %v2134
    %2713 = vmatpush1.bf16.msra.mxu0 %v2133
    %2714 = vmatprep.subr.bf16.mxu0 %v2142
    %2715 = vmatpush1.bf16.msra.mxu0 %v2141
    %2716 = vmatprep.subr.bf16.mxu0 %v2150
    %2717 = vmatpush1.bf16.msra.mxu0 %v2149
    %2718 = vmatprep.subr.bf16.mxu0 %v2158
    %2719 = vmatpush1.bf16.msra.mxu0 %v2157
    %2720 = vmatprep.subr.bf16.mxu0 %v2166
    %2721 = vmatpush1.bf16.msra.mxu0 %v2165
    %2722 = vmatprep.subr.bf16.mxu0 %v2174
    %2723 = vmatpush1.bf16.msra.mxu0 %v2173
    %2724 = vmatprep.subr.bf16.mxu0 %v2182
    %2725 = vmatpush1.bf16.msra.mxu0 %v2181
    %2726 = vmatprep.subr.bf16.mxu0 %v2190
    %2727 = vmatpush1.bf16.msra.mxu0 %v2189
    %2728 = vmatprep.subr.bf16.mxu0 %v2198
    %2729 = vmatpush1.bf16.msra.mxu0 %v2197
    %2730 = vmatprep.subr.bf16.mxu0 %v2206
    %2731 = vmatpush1.bf16.msra.mxu0 %v2205
    %2732 = vmatprep.subr.bf16.mxu0 %v2214
    %2733 = vmatpush1.bf16.msra.mxu0 %v2213
    %2734 = vmatprep.subr.bf16.mxu0 %v2222
    %2735 = vmatpush1.bf16.msra.mxu0 %v2221
    %2736 = vmatprep.subr.bf16.mxu0 %v2230
    %2737 = vmatpush1.bf16.msra.mxu0 %v2229
    %2738 = vmatprep.subr.bf16.mxu0 %v2238
    %2739 = vmatpush1.bf16.msra.mxu0 %v2237
    %2740 = vmatprep.subr.bf16.mxu0 %v2246
    %2741 = vmatpush1.bf16.msra.mxu0 %v2245
    %2742 = vmatprep.mubr.bf16.mxu0 %v926
    %2743 = vmatmul.mubr.bf16.gmra.mrb[0].mxu0 %v925
    %v2744 = vpop.f32.mrb[0].mxu0
    %v2745 = vadd.f32 %v2704, %v2744
    %v2746 = vpop.f32.mrb[0].mxu0
    %v2747 = vadd.f32 %v2706, %v2746
    %v2748 = vpop.f32.mrb[0].mxu0
    %v2749 = vpop.f32.mrb[0].mxu0
    %2750 = vdwg.mxu0
    %2751 = vmatprep.subr.bf16.mxu0 %v2000
    %2752 = vmatpush1.bf16.msra.mxu0 %v1999
    %2753 = vmatprep.subr.bf16.mxu0 %v2008
    %2754 = vmatpush1.bf16.msra.mxu0 %v2007
    %2755 = vmatprep.subr.bf16.mxu0 %v2016
    %2756 = vmatpush1.bf16.msra.mxu0 %v2015
    %2757 = vmatprep.subr.bf16.mxu0 %v2024
    %2758 = vmatpush1.bf16.msra.mxu0 %v2023
    %2759 = vmatprep.subr.bf16.mxu0 %v2032
    %2760 = vmatpush1.bf16.msra.mxu0 %v2031
    %2761 = vmatprep.subr.bf16.mxu0 %v2040
    %2762 = vmatpush1.bf16.msra.mxu0 %v2039
    %2763 = vmatprep.subr.bf16.mxu0 %v2048
    %2764 = vmatpush1.bf16.msra.mxu0 %v2047
    %2765 = vmatprep.subr.bf16.mxu0 %v2056
    %2766 = vmatpush1.bf16.msra.mxu0 %v2055
    %2767 = vmatprep.subr.bf16.mxu0 %v2064
    %2768 = vmatpush1.bf16.msra.mxu0 %v2063
    %2769 = vmatprep.subr.bf16.mxu0 %v2072
    %2770 = vmatpush1.bf16.msra.mxu0 %v2071
    %2771 = vmatprep.subr.bf16.mxu0 %v2080
    %2772 = vmatpush1.bf16.msra.mxu0 %v2079
    %2773 = vmatprep.subr.bf16.mxu0 %v2088
    %2774 = vmatpush1.bf16.msra.mxu0 %v2087
    %2775 = vmatprep.subr.bf16.mxu0 %v2096
    %2776 = vmatpush1.bf16.msra.mxu0 %v2095
    %2777 = vmatprep.subr.bf16.mxu0 %v2104
    %2778 = vmatpush1.bf16.msra.mxu0 %v2103
    %2779 = vmatprep.subr.bf16.mxu0 %v2112
    %2780 = vmatpush1.bf16.msra.mxu0 %v2111
    %2781 = vmatprep.subr.bf16.mxu0 %v2120
    %2782 = vmatpush1.bf16.msra.mxu0 %v2119
    %2783 = vmatprep.mubr.bf16.mxu0 %v924
    %2784 = vmatmul.mubr.bf16.gmra.mrb[0].mxu0 %v923
    %v2785 = vpop.f32.mrb[0].mxu0
    %v2786 = vadd.f32 %v1212, %v2785
    %v2787 = vpop.f32.mrb[0].mxu0
    %v2788 = vadd.f32 %v1216, %v2787
    %v2789 = vpop.f32.mrb[0].mxu0
    %v2790 = vpop.f32.mrb[0].mxu0
    %2791 = vdwg.mxu0
    %2792 = vmatprep.subr.bf16.mxu0 %v2128
    %2793 = vmatpush1.bf16.msra.mxu0 %v2127
    %2794 = vmatprep.subr.bf16.mxu0 %v2136
    %2795 = vmatpush1.bf16.msra.mxu0 %v2135
    %2796 = vmatprep.subr.bf16.mxu0 %v2144
    %2797 = vmatpush1.bf16.msra.mxu0 %v2143
    %2798 = vmatprep.subr.bf16.mxu0 %v2152
    %2799 = vmatpush1.bf16.msra.mxu0 %v2151
    %2800 = vmatprep.subr.bf16.mxu0 %v2160
    %2801 = vmatpush1.bf16.msra.mxu0 %v2159
    %2802 = vmatprep.subr.bf16.mxu0 %v2168
    %2803 = vmatpush1.bf16.msra.mxu0 %v2167
    %2804 = vmatprep.subr.bf16.mxu0 %v2176
    %2805 = vmatpush1.bf16.msra.mxu0 %v2175
    %2806 = vmatprep.subr.bf16.mxu0 %v2184
    %2807 = vmatpush1.bf16.msra.mxu0 %v2183
    %2808 = vmatprep.subr.bf16.mxu0 %v2192
    %2809 = vmatpush1.bf16.msra.mxu0 %v2191
    %2810 = vmatprep.subr.bf16.mxu0 %v2200
    %2811 = vmatpush1.bf16.msra.mxu0 %v2199
    %2812 = vmatprep.subr.bf16.mxu0 %v2208
    %2813 = vmatpush1.bf16.msra.mxu0 %v2207
    %2814 = vmatprep.subr.bf16.mxu0 %v2216
    %2815 = vmatpush1.bf16.msra.mxu0 %v2215
    %2816 = vmatprep.subr.bf16.mxu0 %v2224
    %2817 = vmatpush1.bf16.msra.mxu0 %v2223
    %2818 = vmatprep.subr.bf16.mxu0 %v2232
    %2819 = vmatpush1.bf16.msra.mxu0 %v2231
    %2820 = vmatprep.subr.bf16.mxu0 %v2240
    %2821 = vmatpush1.bf16.msra.mxu0 %v2239
    %2822 = vmatprep.subr.bf16.mxu0 %v2248
    %2823 = vmatpush1.bf16.msra.mxu0 %v2247
    %2824 = vmatprep.mubr.bf16.mxu0 %v926
    %2825 = vmatmul.mubr.bf16.gmra.mrb[0].mxu0 %v925
    %v2826 = vpop.f32.mrb[0].mxu0
    %v2827 = vadd.f32 %v2786, %v2826
    %v2828 = vpop.f32.mrb[0].mxu0
    %v2829 = vadd.f32 %v2788, %v2828
    %v2830 = vpop.f32.mrb[0].mxu0
    %v2831 = vpop.f32.mrb[0].mxu0
    %2832 = vdwg.mxu0
    %vm2833 = vcmp.ge.f32.partialorder %v2581, 0.0
    %vm2834 = vcmp.ge.f32.partialorder %v2583, 0.0
    %vm2835 = vcmp.ge.f32.partialorder %v2663, 0.0
    %vm2836 = vcmp.ge.f32.partialorder %v2665, 0.0
    %vm2837 = vcmp.ge.f32.partialorder %v2745, 0.0
    %vm2838 = vcmp.ge.f32.partialorder %v2747, 0.0
    %vm2839 = vcmp.ge.f32.partialorder %v2827, 0.0
    %vm2840 = vcmp.ge.f32.partialorder %v2829, 0.0
    %v2841 = vmul.f32 %v2581, 0.2
    %v2842 = vmul.f32 %v2583, 0.2
    %v2843 = vmul.f32 %v2663, 0.2
    %v2844 = vmul.f32 %v2665, 0.2
    %v2845 = vmul.f32 %v2745, 0.2
    %v2846 = vmul.f32 %v2747, 0.2
    %v2847 = vmul.f32 %v2827, 0.2
    %v2848 = vmul.f32 %v2829, 0.2
    %v2849 = vsel %vm2833, %v2581, %v2841
    %v2850 = vsel %vm2834, %v2583, %v2842
    %v2851 = vsel %vm2835, %v2663, %v2843
    %v2852 = vsel %vm2836, %v2665, %v2844
    %v2853 = vsel %vm2837, %v2745, %v2845
    %v2854 = vsel %vm2838, %v2747, %v2846
    %v2855 = vsel %vm2839, %v2827, %v2847
    %v2856 = vsel %vm2840, %v2829, %v2848
    %v2857 = vpack.c.bf16 %v2849, %v2849
    %v2858 = vpack.c.bf16 %v2850, %v2850
    %v2859 = vpack.c.bf16 %v2851, %v2851
    %v2860 = vpack.c.bf16 %v2852, %v2852
    %v2861 = vpack.c.bf16 %v2853, %v2853
    %v2862 = vpack.c.bf16 %v2854, %v2854
    %v2863 = vpack.c.bf16 %v2855, %v2855
    %v2864 = vpack.c.bf16 %v2856, %v2856
    %v2865 = vld [vmem:[#allocation17] sm:$0xff]
    %v2866 = vld [vmem:[#allocation17 + $0x8] sm:$0xff]
    %v2867 = vld [vmem:[#allocation17 + $0x10] sm:$0xff]
    %v2868 = vld [vmem:[#allocation17 + $0x18] sm:$0xff]
    %v2869 = vld [vmem:[#allocation17 + $0x20] sm:$0xff]
    %v2870 = vld [vmem:[#allocation17 + $0x28] sm:$0xff]
    %v2871 = vld [vmem:[#allocation17 + $0x30] sm:$0xff]
    %v2872 = vld [vmem:[#allocation17 + $0x38] sm:$0xff]
    %v2873 = vld [vmem:[#allocation17 + $0x40] sm:$0xff]
    %v2874 = vld [vmem:[#allocation17 + $0x48] sm:$0xff]
    %v2875 = vld [vmem:[#allocation17 + $0x50] sm:$0xff]
    %v2876 = vld [vmem:[#allocation17 + $0x58] sm:$0xff]
    %v2877 = vld [vmem:[#allocation17 + $0x60] sm:$0xff]
    %v2878 = vld [vmem:[#allocation17 + $0x68] sm:$0xff]
    %v2879 = vld [vmem:[#allocation17 + $0x70] sm:$0xff]
    %v2880 = vld [vmem:[#allocation17 + $0x78] sm:$0xff]
    %v2881 = vld [vmem:[#allocation17 + $0x80] sm:$0xff]
    %v2882 = vld [vmem:[#allocation17 + $0x88] sm:$0xff]
    %v2883 = vld [vmem:[#allocation17 + $0x90] sm:$0xff]
    %v2884 = vld [vmem:[#allocation17 + $0x98] sm:$0xff]
    %v2885 = vld [vmem:[#allocation17 + $0xa0] sm:$0xff]
    %v2886 = vld [vmem:[#allocation17 + $0xa8] sm:$0xff]
    %v2887 = vld [vmem:[#allocation17 + $0xb0] sm:$0xff]
    %v2888 = vld [vmem:[#allocation17 + $0xb8] sm:$0xff]
    %v2889 = vld [vmem:[#allocation17 + $0xc0] sm:$0xff]
    %v2890 = vld [vmem:[#allocation17 + $0xc8] sm:$0xff]
    %v2891 = vld [vmem:[#allocation17 + $0xd0] sm:$0xff]
    %v2892 = vld [vmem:[#allocation17 + $0xd8] sm:$0xff]
    %v2893 = vld [vmem:[#allocation17 + $0xe0] sm:$0xff]
    %v2894 = vld [vmem:[#allocation17 + $0xe8] sm:$0xff]
    %v2895 = vld [vmem:[#allocation17 + $0xf0] sm:$0xff]
    %v2896 = vld [vmem:[#allocation17 + $0xf8] sm:$0xff]
    %v2897 = vld [vmem:[#allocation17 + $0x100] sm:$0xff]
    %v2898 = vld [vmem:[#allocation17 + $0x108] sm:$0xff]
    %v2899 = vld [vmem:[#allocation17 + $0x110] sm:$0xff]
    %v2900 = vld [vmem:[#allocation17 + $0x118] sm:$0xff]
    %v2901 = vld [vmem:[#allocation17 + $0x120] sm:$0xff]
    %v2902 = vld [vmem:[#allocation17 + $0x128] sm:$0xff]
    %v2903 = vld [vmem:[#allocation17 + $0x130] sm:$0xff]
    %v2904 = vld [vmem:[#allocation17 + $0x138] sm:$0xff]
    %v2905 = vld [vmem:[#allocation17 + $0x140] sm:$0xff]
    %v2906 = vld [vmem:[#allocation17 + $0x148] sm:$0xff]
    %v2907 = vld [vmem:[#allocation17 + $0x150] sm:$0xff]
    %v2908 = vld [vmem:[#allocation17 + $0x158] sm:$0xff]
    %v2909 = vld [vmem:[#allocation17 + $0x160] sm:$0xff]
    %v2910 = vld [vmem:[#allocation17 + $0x168] sm:$0xff]
    %v2911 = vld [vmem:[#allocation17 + $0x170] sm:$0xff]
    %v2912 = vld [vmem:[#allocation17 + $0x178] sm:$0xff]
    %v2913 = vld [vmem:[#allocation17 + $0x180] sm:$0xff]
    %v2914 = vld [vmem:[#allocation17 + $0x188] sm:$0xff]
    %v2915 = vld [vmem:[#allocation17 + $0x190] sm:$0xff]
    %v2916 = vld [vmem:[#allocation17 + $0x198] sm:$0xff]
    %v2917 = vld [vmem:[#allocation17 + $0x1a0] sm:$0xff]
    %v2918 = vld [vmem:[#allocation17 + $0x1a8] sm:$0xff]
    %v2919 = vld [vmem:[#allocation17 + $0x1b0] sm:$0xff]
    %v2920 = vld [vmem:[#allocation17 + $0x1b8] sm:$0xff]
    %v2921 = vld [vmem:[#allocation17 + $0x1c0] sm:$0xff]
    %v2922 = vld [vmem:[#allocation17 + $0x1c8] sm:$0xff]
    %v2923 = vld [vmem:[#allocation17 + $0x1d0] sm:$0xff]
    %v2924 = vld [vmem:[#allocation17 + $0x1d8] sm:$0xff]
    %v2925 = vld [vmem:[#allocation17 + $0x1e0] sm:$0xff]
    %v2926 = vld [vmem:[#allocation17 + $0x1e8] sm:$0xff]
    %v2927 = vld [vmem:[#allocation17 + $0x1f0] sm:$0xff]
    %v2928 = vld [vmem:[#allocation17 + $0x1f8] sm:$0xff]
    %v2929 = vld [vmem:[#allocation17 + $0x200] sm:$0xff]
    %v2930 = vld [vmem:[#allocation17 + $0x208] sm:$0xff]
    %v2931 = vld [vmem:[#allocation17 + $0x210] sm:$0xff]
    %v2932 = vld [vmem:[#allocation17 + $0x218] sm:$0xff]
    %v2933 = vld [vmem:[#allocation17 + $0x220] sm:$0xff]
    %v2934 = vld [vmem:[#allocation17 + $0x228] sm:$0xff]
    %v2935 = vld [vmem:[#allocation17 + $0x230] sm:$0xff]
    %v2936 = vld [vmem:[#allocation17 + $0x238] sm:$0xff]
    %v2937 = vld [vmem:[#allocation17 + $0x240] sm:$0xff]
    %v2938 = vld [vmem:[#allocation17 + $0x248] sm:$0xff]
    %v2939 = vld [vmem:[#allocation17 + $0x250] sm:$0xff]
    %v2940 = vld [vmem:[#allocation17 + $0x258] sm:$0xff]
    %v2941 = vld [vmem:[#allocation17 + $0x260] sm:$0xff]
    %v2942 = vld [vmem:[#allocation17 + $0x268] sm:$0xff]
    %v2943 = vld [vmem:[#allocation17 + $0x270] sm:$0xff]
    %v2944 = vld [vmem:[#allocation17 + $0x278] sm:$0xff]
    %v2945 = vld [vmem:[#allocation17 + $0x280] sm:$0xff]
    %v2946 = vld [vmem:[#allocation17 + $0x288] sm:$0xff]
    %v2947 = vld [vmem:[#allocation17 + $0x290] sm:$0xff]
    %v2948 = vld [vmem:[#allocation17 + $0x298] sm:$0xff]
    %v2949 = vld [vmem:[#allocation17 + $0x2a0] sm:$0xff]
    %v2950 = vld [vmem:[#allocation17 + $0x2a8] sm:$0xff]
    %v2951 = vld [vmem:[#allocation17 + $0x2b0] sm:$0xff]
    %v2952 = vld [vmem:[#allocation17 + $0x2b8] sm:$0xff]
    %v2953 = vld [vmem:[#allocation17 + $0x2c0] sm:$0xff]
    %v2954 = vld [vmem:[#allocation17 + $0x2c8] sm:$0xff]
    %v2955 = vld [vmem:[#allocation17 + $0x2d0] sm:$0xff]
    %v2956 = vld [vmem:[#allocation17 + $0x2d8] sm:$0xff]
    %v2957 = vld [vmem:[#allocation17 + $0x2e0] sm:$0xff]
    %v2958 = vld [vmem:[#allocation17 + $0x2e8] sm:$0xff]
    %v2959 = vld [vmem:[#allocation17 + $0x2f0] sm:$0xff]
    %v2960 = vld [vmem:[#allocation17 + $0x2f8] sm:$0xff]
    %v2961 = vld [vmem:[#allocation17 + $0x300] sm:$0xff]
    %v2962 = vld [vmem:[#allocation17 + $0x308] sm:$0xff]
    %v2963 = vld [vmem:[#allocation17 + $0x310] sm:$0xff]
    %v2964 = vld [vmem:[#allocation17 + $0x318] sm:$0xff]
    %v2965 = vld [vmem:[#allocation17 + $0x320] sm:$0xff]
    %v2966 = vld [vmem:[#allocation17 + $0x328] sm:$0xff]
    %v2967 = vld [vmem:[#allocation17 + $0x330] sm:$0xff]
    %v2968 = vld [vmem:[#allocation17 + $0x338] sm:$0xff]
    %v2969 = vld [vmem:[#allocation17 + $0x340] sm:$0xff]
    %v2970 = vld [vmem:[#allocation17 + $0x348] sm:$0xff]
    %v2971 = vld [vmem:[#allocation17 + $0x350] sm:$0xff]
    %v2972 = vld [vmem:[#allocation17 + $0x358] sm:$0xff]
    %v2973 = vld [vmem:[#allocation17 + $0x360] sm:$0xff]
    %v2974 = vld [vmem:[#allocation17 + $0x368] sm:$0xff]
    %v2975 = vld [vmem:[#allocation17 + $0x370] sm:$0xff]
    %v2976 = vld [vmem:[#allocation17 + $0x378] sm:$0xff]
    %v2977 = vld [vmem:[#allocation17 + $0x380] sm:$0xff]
    %v2978 = vld [vmem:[#allocation17 + $0x388] sm:$0xff]
    %v2979 = vld [vmem:[#allocation17 + $0x390] sm:$0xff]
    %v2980 = vld [vmem:[#allocation17 + $0x398] sm:$0xff]
    %v2981 = vld [vmem:[#allocation17 + $0x3a0] sm:$0xff]
    %v2982 = vld [vmem:[#allocation17 + $0x3a8] sm:$0xff]
    %v2983 = vld [vmem:[#allocation17 + $0x3b0] sm:$0xff]
    %v2984 = vld [vmem:[#allocation17 + $0x3b8] sm:$0xff]
    %v2985 = vld [vmem:[#allocation17 + $0x3c0] sm:$0xff]
    %v2986 = vld [vmem:[#allocation17 + $0x3c8] sm:$0xff]
    %v2987 = vld [vmem:[#allocation17 + $0x3d0] sm:$0xff]
    %v2988 = vld [vmem:[#allocation17 + $0x3d8] sm:$0xff]
    %v2989 = vld [vmem:[#allocation17 + $0x3e0] sm:$0xff]
    %v2990 = vld [vmem:[#allocation17 + $0x3e8] sm:$0xff]
    %v2991 = vld [vmem:[#allocation17 + $0x3f0] sm:$0xff]
    %v2992 = vld [vmem:[#allocation17 + $0x3f8] sm:$0xff]
    %v2993 = vld [vmem:[#allocation17 + $0x400] sm:$0xff]
    %v2994 = vld [vmem:[#allocation17 + $0x408] sm:$0xff]
    %v2995 = vld [vmem:[#allocation17 + $0x410] sm:$0xff]
    %v2996 = vld [vmem:[#allocation17 + $0x418] sm:$0xff]
    %v2997 = vld [vmem:[#allocation17 + $0x420] sm:$0xff]
    %v2998 = vld [vmem:[#allocation17 + $0x428] sm:$0xff]
    %v2999 = vld [vmem:[#allocation17 + $0x430] sm:$0xff]
    %v3000 = vld [vmem:[#allocation17 + $0x438] sm:$0xff]
    %v3001 = vld [vmem:[#allocation17 + $0x440] sm:$0xff]
    %v3002 = vld [vmem:[#allocation17 + $0x448] sm:$0xff]
    %v3003 = vld [vmem:[#allocation17 + $0x450] sm:$0xff]
    %v3004 = vld [vmem:[#allocation17 + $0x458] sm:$0xff]
    %v3005 = vld [vmem:[#allocation17 + $0x460] sm:$0xff]
    %v3006 = vld [vmem:[#allocation17 + $0x468] sm:$0xff]
    %v3007 = vld [vmem:[#allocation17 + $0x470] sm:$0xff]
    %v3008 = vld [vmem:[#allocation17 + $0x478] sm:$0xff]
    %v3009 = vld [vmem:[#allocation17 + $0x480] sm:$0xff]
    %v3010 = vld [vmem:[#allocation17 + $0x488] sm:$0xff]
    %v3011 = vld [vmem:[#allocation17 + $0x490] sm:$0xff]
    %v3012 = vld [vmem:[#allocation17 + $0x498] sm:$0xff]
    %v3013 = vld [vmem:[#allocation17 + $0x4a0] sm:$0xff]
    %v3014 = vld [vmem:[#allocation17 + $0x4a8] sm:$0xff]
    %v3015 = vld [vmem:[#allocation17 + $0x4b0] sm:$0xff]
    %v3016 = vld [vmem:[#allocation17 + $0x4b8] sm:$0xff]
    %v3017 = vld [vmem:[#allocation17 + $0x4c0] sm:$0xff]
    %v3018 = vld [vmem:[#allocation17 + $0x4c8] sm:$0xff]
    %v3019 = vld [vmem:[#allocation17 + $0x4d0] sm:$0xff]
    %v3020 = vld [vmem:[#allocation17 + $0x4d8] sm:$0xff]
    %v3021 = vld [vmem:[#allocation17 + $0x4e0] sm:$0xff]
    %v3022 = vld [vmem:[#allocation17 + $0x4e8] sm:$0xff]
    %v3023 = vld [vmem:[#allocation17 + $0x4f0] sm:$0xff]
    %v3024 = vld [vmem:[#allocation17 + $0x4f8] sm:$0xff]
    %v3025 = vld [vmem:[#allocation17 + $0x500] sm:$0xff]
    %v3026 = vld [vmem:[#allocation17 + $0x508] sm:$0xff]
    %v3027 = vld [vmem:[#allocation17 + $0x510] sm:$0xff]
    %v3028 = vld [vmem:[#allocation17 + $0x518] sm:$0xff]
    %v3029 = vld [vmem:[#allocation17 + $0x520] sm:$0xff]
    %v3030 = vld [vmem:[#allocation17 + $0x528] sm:$0xff]
    %v3031 = vld [vmem:[#allocation17 + $0x530] sm:$0xff]
    %v3032 = vld [vmem:[#allocation17 + $0x538] sm:$0xff]
    %v3033 = vld [vmem:[#allocation17 + $0x540] sm:$0xff]
    %v3034 = vld [vmem:[#allocation17 + $0x548] sm:$0xff]
    %v3035 = vld [vmem:[#allocation17 + $0x550] sm:$0xff]
    %v3036 = vld [vmem:[#allocation17 + $0x558] sm:$0xff]
    %v3037 = vld [vmem:[#allocation17 + $0x560] sm:$0xff]
    %v3038 = vld [vmem:[#allocation17 + $0x568] sm:$0xff]
    %v3039 = vld [vmem:[#allocation17 + $0x570] sm:$0xff]
    %v3040 = vld [vmem:[#allocation17 + $0x578] sm:$0xff]
    %v3041 = vld [vmem:[#allocation17 + $0x580] sm:$0xff]
    %v3042 = vld [vmem:[#allocation17 + $0x588] sm:$0xff]
    %v3043 = vld [vmem:[#allocation17 + $0x590] sm:$0xff]
    %v3044 = vld [vmem:[#allocation17 + $0x598] sm:$0xff]
    %v3045 = vld [vmem:[#allocation17 + $0x5a0] sm:$0xff]
    %v3046 = vld [vmem:[#allocation17 + $0x5a8] sm:$0xff]
    %v3047 = vld [vmem:[#allocation17 + $0x5b0] sm:$0xff]
    %v3048 = vld [vmem:[#allocation17 + $0x5b8] sm:$0xff]
    %v3049 = vld [vmem:[#allocation17 + $0x5c0] sm:$0xff]
    %v3050 = vld [vmem:[#allocation17 + $0x5c8] sm:$0xff]
    %v3051 = vld [vmem:[#allocation17 + $0x5d0] sm:$0xff]
    %v3052 = vld [vmem:[#allocation17 + $0x5d8] sm:$0xff]
    %v3053 = vld [vmem:[#allocation17 + $0x5e0] sm:$0xff]
    %v3054 = vld [vmem:[#allocation17 + $0x5e8] sm:$0xff]
    %v3055 = vld [vmem:[#allocation17 + $0x5f0] sm:$0xff]
    %v3056 = vld [vmem:[#allocation17 + $0x5f8] sm:$0xff]
    %v3057 = vld [vmem:[#allocation17 + $0x600] sm:$0xff]
    %v3058 = vld [vmem:[#allocation17 + $0x608] sm:$0xff]
    %v3059 = vld [vmem:[#allocation17 + $0x610] sm:$0xff]
    %v3060 = vld [vmem:[#allocation17 + $0x618] sm:$0xff]
    %v3061 = vld [vmem:[#allocation17 + $0x620] sm:$0xff]
    %v3062 = vld [vmem:[#allocation17 + $0x628] sm:$0xff]
    %v3063 = vld [vmem:[#allocation17 + $0x630] sm:$0xff]
    %v3064 = vld [vmem:[#allocation17 + $0x638] sm:$0xff]
    %v3065 = vld [vmem:[#allocation17 + $0x640] sm:$0xff]
    %v3066 = vld [vmem:[#allocation17 + $0x648] sm:$0xff]
    %v3067 = vld [vmem:[#allocation17 + $0x650] sm:$0xff]
    %v3068 = vld [vmem:[#allocation17 + $0x658] sm:$0xff]
    %v3069 = vld [vmem:[#allocation17 + $0x660] sm:$0xff]
    %v3070 = vld [vmem:[#allocation17 + $0x668] sm:$0xff]
    %v3071 = vld [vmem:[#allocation17 + $0x670] sm:$0xff]
    %v3072 = vld [vmem:[#allocation17 + $0x678] sm:$0xff]
    %v3073 = vld [vmem:[#allocation17 + $0x680] sm:$0xff]
    %v3074 = vld [vmem:[#allocation17 + $0x688] sm:$0xff]
    %v3075 = vld [vmem:[#allocation17 + $0x690] sm:$0xff]
    %v3076 = vld [vmem:[#allocation17 + $0x698] sm:$0xff]
    %v3077 = vld [vmem:[#allocation17 + $0x6a0] sm:$0xff]
    %v3078 = vld [vmem:[#allocation17 + $0x6a8] sm:$0xff]
    %v3079 = vld [vmem:[#allocation17 + $0x6b0] sm:$0xff]
    %v3080 = vld [vmem:[#allocation17 + $0x6b8] sm:$0xff]
    %v3081 = vld [vmem:[#allocation17 + $0x6c0] sm:$0xff]
    %v3082 = vld [vmem:[#allocation17 + $0x6c8] sm:$0xff]
    %v3083 = vld [vmem:[#allocation17 + $0x6d0] sm:$0xff]
    %v3084 = vld [vmem:[#allocation17 + $0x6d8] sm:$0xff]
    %v3085 = vld [vmem:[#allocation17 + $0x6e0] sm:$0xff]
    %v3086 = vld [vmem:[#allocation17 + $0x6e8] sm:$0xff]
    %v3087 = vld [vmem:[#allocation17 + $0x6f0] sm:$0xff]
    %v3088 = vld [vmem:[#allocation17 + $0x6f8] sm:$0xff]
    %v3089 = vld [vmem:[#allocation17 + $0x700] sm:$0xff]
    %v3090 = vld [vmem:[#allocation17 + $0x708] sm:$0xff]
    %v3091 = vld [vmem:[#allocation17 + $0x710] sm:$0xff]
    %v3092 = vld [vmem:[#allocation17 + $0x718] sm:$0xff]
    %v3093 = vld [vmem:[#allocation17 + $0x720] sm:$0xff]
    %v3094 = vld [vmem:[#allocation17 + $0x728] sm:$0xff]
    %v3095 = vld [vmem:[#allocation17 + $0x730] sm:$0xff]
    %v3096 = vld [vmem:[#allocation17 + $0x738] sm:$0xff]
    %v3097 = vld [vmem:[#allocation17 + $0x740] sm:$0xff]
    %v3098 = vld [vmem:[#allocation17 + $0x748] sm:$0xff]
    %v3099 = vld [vmem:[#allocation17 + $0x750] sm:$0xff]
    %v3100 = vld [vmem:[#allocation17 + $0x758] sm:$0xff]
    %v3101 = vld [vmem:[#allocation17 + $0x760] sm:$0xff]
    %v3102 = vld [vmem:[#allocation17 + $0x768] sm:$0xff]
    %v3103 = vld [vmem:[#allocation17 + $0x770] sm:$0xff]
    %v3104 = vld [vmem:[#allocation17 + $0x778] sm:$0xff]
    %v3105 = vld [vmem:[#allocation17 + $0x780] sm:$0xff]
    %v3106 = vld [vmem:[#allocation17 + $0x788] sm:$0xff]
    %v3107 = vld [vmem:[#allocation17 + $0x790] sm:$0xff]
    %v3108 = vld [vmem:[#allocation17 + $0x798] sm:$0xff]
    %v3109 = vld [vmem:[#allocation17 + $0x7a0] sm:$0xff]
    %v3110 = vld [vmem:[#allocation17 + $0x7a8] sm:$0xff]
    %v3111 = vld [vmem:[#allocation17 + $0x7b0] sm:$0xff]
    %v3112 = vld [vmem:[#allocation17 + $0x7b8] sm:$0xff]
    %v3113 = vld [vmem:[#allocation17 + $0x7c0] sm:$0xff]
    %v3114 = vld [vmem:[#allocation17 + $0x7c8] sm:$0xff]
    %v3115 = vld [vmem:[#allocation17 + $0x7d0] sm:$0xff]
    %v3116 = vld [vmem:[#allocation17 + $0x7d8] sm:$0xff]
    %v3117 = vld [vmem:[#allocation17 + $0x7e0] sm:$0xff]
    %v3118 = vld [vmem:[#allocation17 + $0x7e8] sm:$0xff]
    %v3119 = vld [vmem:[#allocation17 + $0x7f0] sm:$0xff]
    %v3120 = vld [vmem:[#allocation17 + $0x7f8] sm:$0xff]
    %v3121 = vld [vmem:[#allocation17 + $0x800] sm:$0xff]
    %v3122 = vld [vmem:[#allocation17 + $0x808] sm:$0xff]
    %v3123 = vld [vmem:[#allocation17 + $0x810] sm:$0xff]
    %v3124 = vld [vmem:[#allocation17 + $0x818] sm:$0xff]
    %v3125 = vld [vmem:[#allocation17 + $0x820] sm:$0xff]
    %v3126 = vld [vmem:[#allocation17 + $0x828] sm:$0xff]
    %v3127 = vld [vmem:[#allocation17 + $0x830] sm:$0xff]
    %v3128 = vld [vmem:[#allocation17 + $0x838] sm:$0xff]
    %v3129 = vld [vmem:[#allocation17 + $0x840] sm:$0xff]
    %v3130 = vld [vmem:[#allocation17 + $0x848] sm:$0xff]
    %v3131 = vld [vmem:[#allocation17 + $0x850] sm:$0xff]
    %v3132 = vld [vmem:[#allocation17 + $0x858] sm:$0xff]
    %v3133 = vld [vmem:[#allocation17 + $0x860] sm:$0xff]
    %v3134 = vld [vmem:[#allocation17 + $0x868] sm:$0xff]
    %v3135 = vld [vmem:[#allocation17 + $0x870] sm:$0xff]
    %v3136 = vld [vmem:[#allocation17 + $0x878] sm:$0xff]
    %v3137 = vld [vmem:[#allocation17 + $0x880] sm:$0xff]
    %v3138 = vld [vmem:[#allocation17 + $0x888] sm:$0xff]
    %v3139 = vld [vmem:[#allocation17 + $0x890] sm:$0xff]
    %v3140 = vld [vmem:[#allocation17 + $0x898] sm:$0xff]
    %v3141 = vld [vmem:[#allocation17 + $0x8a0] sm:$0xff]
    %v3142 = vld [vmem:[#allocation17 + $0x8a8] sm:$0xff]
    %v3143 = vld [vmem:[#allocation17 + $0x8b0] sm:$0xff]
    %v3144 = vld [vmem:[#allocation17 + $0x8b8] sm:$0xff]
    %v3145 = vld [vmem:[#allocation17 + $0x8c0] sm:$0xff]
    %v3146 = vld [vmem:[#allocation17 + $0x8c8] sm:$0xff]
    %v3147 = vld [vmem:[#allocation17 + $0x8d0] sm:$0xff]
    %v3148 = vld [vmem:[#allocation17 + $0x8d8] sm:$0xff]
    %v3149 = vld [vmem:[#allocation17 + $0x8e0] sm:$0xff]
    %v3150 = vld [vmem:[#allocation17 + $0x8e8] sm:$0xff]
    %v3151 = vld [vmem:[#allocation17 + $0x8f0] sm:$0xff]
    %v3152 = vld [vmem:[#allocation17 + $0x8f8] sm:$0xff]
    %v3153 = vld [vmem:[#allocation17 + $0x900] sm:$0xff]
    %v3154 = vld [vmem:[#allocation17 + $0x908] sm:$0xff]
    %v3155 = vld [vmem:[#allocation17 + $0x910] sm:$0xff]
    %v3156 = vld [vmem:[#allocation17 + $0x918] sm:$0xff]
    %v3157 = vld [vmem:[#allocation17 + $0x920] sm:$0xff]
    %v3158 = vld [vmem:[#allocation17 + $0x928] sm:$0xff]
    %v3159 = vld [vmem:[#allocation17 + $0x930] sm:$0xff]
    %v3160 = vld [vmem:[#allocation17 + $0x938] sm:$0xff]
    %v3161 = vld [vmem:[#allocation17 + $0x940] sm:$0xff]
    %v3162 = vld [vmem:[#allocation17 + $0x948] sm:$0xff]
    %v3163 = vld [vmem:[#allocation17 + $0x950] sm:$0xff]
    %v3164 = vld [vmem:[#allocation17 + $0x958] sm:$0xff]
    %v3165 = vld [vmem:[#allocation17 + $0x960] sm:$0xff]
    %v3166 = vld [vmem:[#allocation17 + $0x968] sm:$0xff]
    %v3167 = vld [vmem:[#allocation17 + $0x970] sm:$0xff]
    %v3168 = vld [vmem:[#allocation17 + $0x978] sm:$0xff]
    %v3169 = vld [vmem:[#allocation17 + $0x980] sm:$0xff]
    %v3170 = vld [vmem:[#allocation17 + $0x988] sm:$0xff]
    %v3171 = vld [vmem:[#allocation17 + $0x990] sm:$0xff]
    %v3172 = vld [vmem:[#allocation17 + $0x998] sm:$0xff]
    %v3173 = vld [vmem:[#allocation17 + $0x9a0] sm:$0xff]
    %v3174 = vld [vmem:[#allocation17 + $0x9a8] sm:$0xff]
    %v3175 = vld [vmem:[#allocation17 + $0x9b0] sm:$0xff]
    %v3176 = vld [vmem:[#allocation17 + $0x9b8] sm:$0xff]
    %v3177 = vld [vmem:[#allocation17 + $0x9c0] sm:$0xff]
    %v3178 = vld [vmem:[#allocation17 + $0x9c8] sm:$0xff]
    %v3179 = vld [vmem:[#allocation17 + $0x9d0] sm:$0xff]
    %v3180 = vld [vmem:[#allocation17 + $0x9d8] sm:$0xff]
    %v3181 = vld [vmem:[#allocation17 + $0x9e0] sm:$0xff]
    %v3182 = vld [vmem:[#allocation17 + $0x9e8] sm:$0xff]
    %v3183 = vld [vmem:[#allocation17 + $0x9f0] sm:$0xff]
    %v3184 = vld [vmem:[#allocation17 + $0x9f8] sm:$0xff]
    %v3185 = vld [vmem:[#allocation17 + $0xa00] sm:$0xff]
    %v3186 = vld [vmem:[#allocation17 + $0xa08] sm:$0xff]
    %v3187 = vld [vmem:[#allocation17 + $0xa10] sm:$0xff]
    %v3188 = vld [vmem:[#allocation17 + $0xa18] sm:$0xff]
    %v3189 = vld [vmem:[#allocation17 + $0xa20] sm:$0xff]
    %v3190 = vld [vmem:[#allocation17 + $0xa28] sm:$0xff]
    %v3191 = vld [vmem:[#allocation17 + $0xa30] sm:$0xff]
    %v3192 = vld [vmem:[#allocation17 + $0xa38] sm:$0xff]
    %v3193 = vld [vmem:[#allocation17 + $0xa40] sm:$0xff]
    %v3194 = vld [vmem:[#allocation17 + $0xa48] sm:$0xff]
    %v3195 = vld [vmem:[#allocation17 + $0xa50] sm:$0xff]
    %v3196 = vld [vmem:[#allocation17 + $0xa58] sm:$0xff]
    %v3197 = vld [vmem:[#allocation17 + $0xa60] sm:$0xff]
    %v3198 = vld [vmem:[#allocation17 + $0xa68] sm:$0xff]
    %v3199 = vld [vmem:[#allocation17 + $0xa70] sm:$0xff]
    %v3200 = vld [vmem:[#allocation17 + $0xa78] sm:$0xff]
    %v3201 = vld [vmem:[#allocation17 + $0xa80] sm:$0xff]
    %v3202 = vld [vmem:[#allocation17 + $0xa88] sm:$0xff]
    %v3203 = vld [vmem:[#allocation17 + $0xa90] sm:$0xff]
    %v3204 = vld [vmem:[#allocation17 + $0xa98] sm:$0xff]
    %v3205 = vld [vmem:[#allocation17 + $0xaa0] sm:$0xff]
    %v3206 = vld [vmem:[#allocation17 + $0xaa8] sm:$0xff]
    %v3207 = vld [vmem:[#allocation17 + $0xab0] sm:$0xff]
    %v3208 = vld [vmem:[#allocation17 + $0xab8] sm:$0xff]
    %v3209 = vld [vmem:[#allocation17 + $0xac0] sm:$0xff]
    %v3210 = vld [vmem:[#allocation17 + $0xac8] sm:$0xff]
    %v3211 = vld [vmem:[#allocation17 + $0xad0] sm:$0xff]
    %v3212 = vld [vmem:[#allocation17 + $0xad8] sm:$0xff]
    %v3213 = vld [vmem:[#allocation17 + $0xae0] sm:$0xff]
    %v3214 = vld [vmem:[#allocation17 + $0xae8] sm:$0xff]
    %v3215 = vld [vmem:[#allocation17 + $0xaf0] sm:$0xff]
    %v3216 = vld [vmem:[#allocation17 + $0xaf8] sm:$0xff]
    %v3217 = vld [vmem:[#allocation17 + $0xb00] sm:$0xff]
    %v3218 = vld [vmem:[#allocation17 + $0xb08] sm:$0xff]
    %v3219 = vld [vmem:[#allocation17 + $0xb10] sm:$0xff]
    %v3220 = vld [vmem:[#allocation17 + $0xb18] sm:$0xff]
    %v3221 = vld [vmem:[#allocation17 + $0xb20] sm:$0xff]
    %v3222 = vld [vmem:[#allocation17 + $0xb28] sm:$0xff]
    %v3223 = vld [vmem:[#allocation17 + $0xb30] sm:$0xff]
    %v3224 = vld [vmem:[#allocation17 + $0xb38] sm:$0xff]
    %v3225 = vld [vmem:[#allocation17 + $0xb40] sm:$0xff]
    %v3226 = vld [vmem:[#allocation17 + $0xb48] sm:$0xff]
    %v3227 = vld [vmem:[#allocation17 + $0xb50] sm:$0xff]
    %v3228 = vld [vmem:[#allocation17 + $0xb58] sm:$0xff]
    %v3229 = vld [vmem:[#allocation17 + $0xb60] sm:$0xff]
    %v3230 = vld [vmem:[#allocation17 + $0xb68] sm:$0xff]
    %v3231 = vld [vmem:[#allocation17 + $0xb70] sm:$0xff]
    %v3232 = vld [vmem:[#allocation17 + $0xb78] sm:$0xff]
    %v3233 = vld [vmem:[#allocation17 + $0xb80] sm:$0xff]
    %v3234 = vld [vmem:[#allocation17 + $0xb88] sm:$0xff]
    %v3235 = vld [vmem:[#allocation17 + $0xb90] sm:$0xff]
    %v3236 = vld [vmem:[#allocation17 + $0xb98] sm:$0xff]
    %v3237 = vld [vmem:[#allocation17 + $0xba0] sm:$0xff]
    %v3238 = vld [vmem:[#allocation17 + $0xba8] sm:$0xff]
    %v3239 = vld [vmem:[#allocation17 + $0xbb0] sm:$0xff]
    %v3240 = vld [vmem:[#allocation17 + $0xbb8] sm:$0xff]
    %v3241 = vld [vmem:[#allocation17 + $0xbc0] sm:$0xff]
    %v3242 = vld [vmem:[#allocation17 + $0xbc8] sm:$0xff]
    %v3243 = vld [vmem:[#allocation17 + $0xbd0] sm:$0xff]
    %v3244 = vld [vmem:[#allocation17 + $0xbd8] sm:$0xff]
    %v3245 = vld [vmem:[#allocation17 + $0xbe0] sm:$0xff]
    %v3246 = vld [vmem:[#allocation17 + $0xbe8] sm:$0xff]
    %v3247 = vld [vmem:[#allocation17 + $0xbf0] sm:$0xff]
    %v3248 = vld [vmem:[#allocation17 + $0xbf8] sm:$0xff]
    %v3249 = vld [vmem:[#allocation17 + $0xc00] sm:$0xff]
    %v3250 = vld [vmem:[#allocation17 + $0xc08] sm:$0xff]
    %v3251 = vld [vmem:[#allocation17 + $0xc10] sm:$0xff]
    %v3252 = vld [vmem:[#allocation17 + $0xc18] sm:$0xff]
    %v3253 = vld [vmem:[#allocation17 + $0xc20] sm:$0xff]
    %v3254 = vld [vmem:[#allocation17 + $0xc28] sm:$0xff]
    %v3255 = vld [vmem:[#allocation17 + $0xc30] sm:$0xff]
    %v3256 = vld [vmem:[#allocation17 + $0xc38] sm:$0xff]
    %v3257 = vld [vmem:[#allocation17 + $0xc40] sm:$0xff]
    %v3258 = vld [vmem:[#allocation17 + $0xc48] sm:$0xff]
    %v3259 = vld [vmem:[#allocation17 + $0xc50] sm:$0xff]
    %v3260 = vld [vmem:[#allocation17 + $0xc58] sm:$0xff]
    %v3261 = vld [vmem:[#allocation17 + $0xc60] sm:$0xff]
    %v3262 = vld [vmem:[#allocation17 + $0xc68] sm:$0xff]
    %v3263 = vld [vmem:[#allocation17 + $0xc70] sm:$0xff]
    %v3264 = vld [vmem:[#allocation17 + $0xc78] sm:$0xff]
    %v3265 = vld [vmem:[#allocation17 + $0xc80] sm:$0xff]
    %v3266 = vld [vmem:[#allocation17 + $0xc88] sm:$0xff]
    %v3267 = vld [vmem:[#allocation17 + $0xc90] sm:$0xff]
    %v3268 = vld [vmem:[#allocation17 + $0xc98] sm:$0xff]
    %v3269 = vld [vmem:[#allocation17 + $0xca0] sm:$0xff]
    %v3270 = vld [vmem:[#allocation17 + $0xca8] sm:$0xff]
    %v3271 = vld [vmem:[#allocation17 + $0xcb0] sm:$0xff]
    %v3272 = vld [vmem:[#allocation17 + $0xcb8] sm:$0xff]
    %v3273 = vld [vmem:[#allocation17 + $0xcc0] sm:$0xff]
    %v3274 = vld [vmem:[#allocation17 + $0xcc8] sm:$0xff]
    %v3275 = vld [vmem:[#allocation17 + $0xcd0] sm:$0xff]
    %v3276 = vld [vmem:[#allocation17 + $0xcd8] sm:$0xff]
    %v3277 = vld [vmem:[#allocation17 + $0xce0] sm:$0xff]
    %v3278 = vld [vmem:[#allocation17 + $0xce8] sm:$0xff]
    %v3279 = vld [vmem:[#allocation17 + $0xcf0] sm:$0xff]
    %v3280 = vld [vmem:[#allocation17 + $0xcf8] sm:$0xff]
    %v3281 = vld [vmem:[#allocation17 + $0xd00] sm:$0xff]
    %v3282 = vld [vmem:[#allocation17 + $0xd08] sm:$0xff]
    %v3283 = vld [vmem:[#allocation17 + $0xd10] sm:$0xff]
    %v3284 = vld [vmem:[#allocation17 + $0xd18] sm:$0xff]
    %v3285 = vld [vmem:[#allocation17 + $0xd20] sm:$0xff]
    %v3286 = vld [vmem:[#allocation17 + $0xd28] sm:$0xff]
    %v3287 = vld [vmem:[#allocation17 + $0xd30] sm:$0xff]
    %v3288 = vld [vmem:[#allocation17 + $0xd38] sm:$0xff]
    %v3289 = vld [vmem:[#allocation17 + $0xd40] sm:$0xff]
    %v3290 = vld [vmem:[#allocation17 + $0xd48] sm:$0xff]
    %v3291 = vld [vmem:[#allocation17 + $0xd50] sm:$0xff]
    %v3292 = vld [vmem:[#allocation17 + $0xd58] sm:$0xff]
    %v3293 = vld [vmem:[#allocation17 + $0xd60] sm:$0xff]
    %v3294 = vld [vmem:[#allocation17 + $0xd68] sm:$0xff]
    %v3295 = vld [vmem:[#allocation17 + $0xd70] sm:$0xff]
    %v3296 = vld [vmem:[#allocation17 + $0xd78] sm:$0xff]
    %v3297 = vld [vmem:[#allocation17 + $0xd80] sm:$0xff]
    %v3298 = vld [vmem:[#allocation17 + $0xd88] sm:$0xff]
    %v3299 = vld [vmem:[#allocation17 + $0xd90] sm:$0xff]
    %v3300 = vld [vmem:[#allocation17 + $0xd98] sm:$0xff]
    %v3301 = vld [vmem:[#allocation17 + $0xda0] sm:$0xff]
    %v3302 = vld [vmem:[#allocation17 + $0xda8] sm:$0xff]
    %v3303 = vld [vmem:[#allocation17 + $0xdb0] sm:$0xff]
    %v3304 = vld [vmem:[#allocation17 + $0xdb8] sm:$0xff]
    %v3305 = vld [vmem:[#allocation17 + $0xdc0] sm:$0xff]
    %v3306 = vld [vmem:[#allocation17 + $0xdc8] sm:$0xff]
    %v3307 = vld [vmem:[#allocation17 + $0xdd0] sm:$0xff]
    %v3308 = vld [vmem:[#allocation17 + $0xdd8] sm:$0xff]
    %v3309 = vld [vmem:[#allocation17 + $0xde0] sm:$0xff]
    %v3310 = vld [vmem:[#allocation17 + $0xde8] sm:$0xff]
    %v3311 = vld [vmem:[#allocation17 + $0xdf0] sm:$0xff]
    %v3312 = vld [vmem:[#allocation17 + $0xdf8] sm:$0xff]
    %v3313 = vld [vmem:[#allocation17 + $0xe00] sm:$0xff]
    %v3314 = vld [vmem:[#allocation17 + $0xe08] sm:$0xff]
    %v3315 = vld [vmem:[#allocation17 + $0xe10] sm:$0xff]
    %v3316 = vld [vmem:[#allocation17 + $0xe18] sm:$0xff]
    %v3317 = vld [vmem:[#allocation17 + $0xe20] sm:$0xff]
    %v3318 = vld [vmem:[#allocation17 + $0xe28] sm:$0xff]
    %v3319 = vld [vmem:[#allocation17 + $0xe30] sm:$0xff]
    %v3320 = vld [vmem:[#allocation17 + $0xe38] sm:$0xff]
    %v3321 = vld [vmem:[#allocation17 + $0xe40] sm:$0xff]
    %v3322 = vld [vmem:[#allocation17 + $0xe48] sm:$0xff]
    %v3323 = vld [vmem:[#allocation17 + $0xe50] sm:$0xff]
    %v3324 = vld [vmem:[#allocation17 + $0xe58] sm:$0xff]
    %v3325 = vld [vmem:[#allocation17 + $0xe60] sm:$0xff]
    %v3326 = vld [vmem:[#allocation17 + $0xe68] sm:$0xff]
    %v3327 = vld [vmem:[#allocation17 + $0xe70] sm:$0xff]
    %v3328 = vld [vmem:[#allocation17 + $0xe78] sm:$0xff]
    %v3329 = vld [vmem:[#allocation17 + $0xe80] sm:$0xff]
    %v3330 = vld [vmem:[#allocation17 + $0xe88] sm:$0xff]
    %v3331 = vld [vmem:[#allocation17 + $0xe90] sm:$0xff]
    %v3332 = vld [vmem:[#allocation17 + $0xe98] sm:$0xff]
    %v3333 = vld [vmem:[#allocation17 + $0xea0] sm:$0xff]
    %v3334 = vld [vmem:[#allocation17 + $0xea8] sm:$0xff]
    %v3335 = vld [vmem:[#allocation17 + $0xeb0] sm:$0xff]
    %v3336 = vld [vmem:[#allocation17 + $0xeb8] sm:$0xff]
    %v3337 = vld [vmem:[#allocation17 + $0xec0] sm:$0xff]
    %v3338 = vld [vmem:[#allocation17 + $0xec8] sm:$0xff]
    %v3339 = vld [vmem:[#allocation17 + $0xed0] sm:$0xff]
    %v3340 = vld [vmem:[#allocation17 + $0xed8] sm:$0xff]
    %v3341 = vld [vmem:[#allocation17 + $0xee0] sm:$0xff]
    %v3342 = vld [vmem:[#allocation17 + $0xee8] sm:$0xff]
    %v3343 = vld [vmem:[#allocation17 + $0xef0] sm:$0xff]
    %v3344 = vld [vmem:[#allocation17 + $0xef8] sm:$0xff]
    %v3345 = vld [vmem:[#allocation17 + $0xf00] sm:$0xff]
    %v3346 = vld [vmem:[#allocation17 + $0xf08] sm:$0xff]
    %v3347 = vld [vmem:[#allocation17 + $0xf10] sm:$0xff]
    %v3348 = vld [vmem:[#allocation17 + $0xf18] sm:$0xff]
    %v3349 = vld [vmem:[#allocation17 + $0xf20] sm:$0xff]
    %v3350 = vld [vmem:[#allocation17 + $0xf28] sm:$0xff]
    %v3351 = vld [vmem:[#allocation17 + $0xf30] sm:$0xff]
    %v3352 = vld [vmem:[#allocation17 + $0xf38] sm:$0xff]
    %v3353 = vld [vmem:[#allocation17 + $0xf40] sm:$0xff]
    %v3354 = vld [vmem:[#allocation17 + $0xf48] sm:$0xff]
    %v3355 = vld [vmem:[#allocation17 + $0xf50] sm:$0xff]
    %v3356 = vld [vmem:[#allocation17 + $0xf58] sm:$0xff]
    %v3357 = vld [vmem:[#allocation17 + $0xf60] sm:$0xff]
    %v3358 = vld [vmem:[#allocation17 + $0xf68] sm:$0xff]
    %v3359 = vld [vmem:[#allocation17 + $0xf70] sm:$0xff]
    %v3360 = vld [vmem:[#allocation17 + $0xf78] sm:$0xff]
    %v3361 = vld [vmem:[#allocation17 + $0xf80] sm:$0xff]
    %v3362 = vld [vmem:[#allocation17 + $0xf88] sm:$0xff]
    %v3363 = vld [vmem:[#allocation17 + $0xf90] sm:$0xff]
    %v3364 = vld [vmem:[#allocation17 + $0xf98] sm:$0xff]
    %v3365 = vld [vmem:[#allocation17 + $0xfa0] sm:$0xff]
    %v3366 = vld [vmem:[#allocation17 + $0xfa8] sm:$0xff]
    %v3367 = vld [vmem:[#allocation17 + $0xfb0] sm:$0xff]
    %v3368 = vld [vmem:[#allocation17 + $0xfb8] sm:$0xff]
    %v3369 = vld [vmem:[#allocation17 + $0xfc0] sm:$0xff]
    %v3370 = vld [vmem:[#allocation17 + $0xfc8] sm:$0xff]
    %v3371 = vld [vmem:[#allocation17 + $0xfd0] sm:$0xff]
    %v3372 = vld [vmem:[#allocation17 + $0xfd8] sm:$0xff]
    %v3373 = vld [vmem:[#allocation17 + $0xfe0] sm:$0xff]
    %v3374 = vld [vmem:[#allocation17 + $0xfe8] sm:$0xff]
    %v3375 = vld [vmem:[#allocation17 + $0xff0] sm:$0xff]
    %v3376 = vld [vmem:[#allocation17 + $0xff8] sm:$0xff]
    %v3377 = vld [vmem:[#allocation19] sm:$0xff]
    %v3379 = vlaneseq
    %v3380 = vshrl.u32 %v3379, 7
    %v3381 = vsub.s32 0, %v3380
    %v3382 = vrot.slane %v3377, %v3381
    %v3383 = vlaneseq
    %v3384 = vshrl.u32 %v3383, 7
    %v3385 = vsub.s32 1, %v3384
    %v3386 = vrot.slane %v3377, %v3385
    %v3387 = vlaneseq
    %v3388 = vshrl.u32 %v3387, 7
    %v3389 = vsub.s32 2, %v3388
    %v3390 = vrot.slane %v3377, %v3389
    %v3391 = vlaneseq
    %v3392 = vshrl.u32 %v3391, 7
    %v3393 = vsub.s32 3, %v3392
    %v3394 = vrot.slane %v3377, %v3393
    %v3395 = vlaneseq
    %v3396 = vshrl.u32 %v3395, 7
    %v3397 = vsub.s32 4, %v3396
    %v3398 = vrot.slane %v3377, %v3397
    %v3399 = vlaneseq
    %v3400 = vshrl.u32 %v3399, 7
    %v3401 = vsub.s32 5, %v3400
    %v3402 = vrot.slane %v3377, %v3401
    %v3403 = vlaneseq
    %v3404 = vshrl.u32 %v3403, 7
    %v3405 = vsub.s32 6, %v3404
    %v3406 = vrot.slane %v3377, %v3405
    %v3407 = vlaneseq
    %v3408 = vshrl.u32 %v3407, 7
    %v3409 = vsub.s32 7, %v3408
    %v3410 = vrot.slane %v3377, %v3409
    %v3931 = vunpack.c.l.b16 %v2865
    %v3932 = vunpack.c.h.b16 %v2865
    %v3933 = vunpack.c.l.b16 %v2866
    %v3934 = vunpack.c.h.b16 %v2866
    %v3935 = vunpack.c.l.b16 %v2867
    %v3936 = vunpack.c.h.b16 %v2867
    %v3937 = vunpack.c.l.b16 %v2868
    %v3938 = vunpack.c.h.b16 %v2868
    %v3939 = vunpack.c.l.b16 %v2869
    %v3940 = vunpack.c.h.b16 %v2869
    %v3941 = vunpack.c.l.b16 %v2870
    %v3942 = vunpack.c.h.b16 %v2870
    %v3943 = vunpack.c.l.b16 %v2871
    %v3944 = vunpack.c.h.b16 %v2871
    %v3945 = vunpack.c.l.b16 %v2872
    %v3946 = vunpack.c.h.b16 %v2872
    %v3947 = vunpack.c.l.b16 %v2873
    %v3948 = vunpack.c.h.b16 %v2873
    %v3949 = vunpack.c.l.b16 %v2874
    %v3950 = vunpack.c.h.b16 %v2874
    %v3951 = vunpack.c.l.b16 %v2875
    %v3952 = vunpack.c.h.b16 %v2875
    %v3953 = vunpack.c.l.b16 %v2876
    %v3954 = vunpack.c.h.b16 %v2876
    %v3955 = vunpack.c.l.b16 %v2877
    %v3956 = vunpack.c.h.b16 %v2877
    %v3957 = vunpack.c.l.b16 %v2878
    %v3958 = vunpack.c.h.b16 %v2878
    %v3959 = vunpack.c.l.b16 %v2879
    %v3960 = vunpack.c.h.b16 %v2879
    %v3961 = vunpack.c.l.b16 %v2880
    %v3962 = vunpack.c.h.b16 %v2880
    %v3963 = vunpack.c.l.b16 %v2881
    %v3964 = vunpack.c.h.b16 %v2881
    %v3965 = vunpack.c.l.b16 %v2882
    %v3966 = vunpack.c.h.b16 %v2882
    %v3967 = vunpack.c.l.b16 %v2883
    %v3968 = vunpack.c.h.b16 %v2883
    %v3969 = vunpack.c.l.b16 %v2884
    %v3970 = vunpack.c.h.b16 %v2884
    %v3971 = vunpack.c.l.b16 %v2885
    %v3972 = vunpack.c.h.b16 %v2885
    %v3973 = vunpack.c.l.b16 %v2886
    %v3974 = vunpack.c.h.b16 %v2886
    %v3975 = vunpack.c.l.b16 %v2887
    %v3976 = vunpack.c.h.b16 %v2887
    %v3977 = vunpack.c.l.b16 %v2888
    %v3978 = vunpack.c.h.b16 %v2888
    %v3979 = vunpack.c.l.b16 %v2889
    %v3980 = vunpack.c.h.b16 %v2889
    %v3981 = vunpack.c.l.b16 %v2890
    %v3982 = vunpack.c.h.b16 %v2890
    %v3983 = vunpack.c.l.b16 %v2891
    %v3984 = vunpack.c.h.b16 %v2891
    %v3985 = vunpack.c.l.b16 %v2892
    %v3986 = vunpack.c.h.b16 %v2892
    %v3987 = vunpack.c.l.b16 %v2893
    %v3988 = vunpack.c.h.b16 %v2893
    %v3989 = vunpack.c.l.b16 %v2894
    %v3990 = vunpack.c.h.b16 %v2894
    %v3991 = vunpack.c.l.b16 %v2895
    %v3992 = vunpack.c.h.b16 %v2895
    %v3993 = vunpack.c.l.b16 %v2896
    %v3994 = vunpack.c.h.b16 %v2896
    %v3995 = vunpack.c.l.b16 %v2897
    %v3996 = vunpack.c.h.b16 %v2897
    %v3997 = vunpack.c.l.b16 %v2898
    %v3998 = vunpack.c.h.b16 %v2898
    %v3999 = vunpack.c.l.b16 %v2899
    %v4000 = vunpack.c.h.b16 %v2899
    %v4001 = vunpack.c.l.b16 %v2900
    %v4002 = vunpack.c.h.b16 %v2900
    %v4003 = vunpack.c.l.b16 %v2901
    %v4004 = vunpack.c.h.b16 %v2901
    %v4005 = vunpack.c.l.b16 %v2902
    %v4006 = vunpack.c.h.b16 %v2902
    %v4007 = vunpack.c.l.b16 %v2903
    %v4008 = vunpack.c.h.b16 %v2903
    %v4009 = vunpack.c.l.b16 %v2904
    %v4010 = vunpack.c.h.b16 %v2904
    %v4011 = vunpack.c.l.b16 %v2905
    %v4012 = vunpack.c.h.b16 %v2905
    %v4013 = vunpack.c.l.b16 %v2906
    %v4014 = vunpack.c.h.b16 %v2906
    %v4015 = vunpack.c.l.b16 %v2907
    %v4016 = vunpack.c.h.b16 %v2907
    %v4017 = vunpack.c.l.b16 %v2908
    %v4018 = vunpack.c.h.b16 %v2908
    %v4019 = vunpack.c.l.b16 %v2909
    %v4020 = vunpack.c.h.b16 %v2909
    %v4021 = vunpack.c.l.b16 %v2910
    %v4022 = vunpack.c.h.b16 %v2910
    %v4023 = vunpack.c.l.b16 %v2911
    %v4024 = vunpack.c.h.b16 %v2911
    %v4025 = vunpack.c.l.b16 %v2912
    %v4026 = vunpack.c.h.b16 %v2912
    %v4027 = vunpack.c.l.b16 %v2913
    %v4028 = vunpack.c.h.b16 %v2913
    %v4029 = vunpack.c.l.b16 %v2914
    %v4030 = vunpack.c.h.b16 %v2914
    %v4031 = vunpack.c.l.b16 %v2915
    %v4032 = vunpack.c.h.b16 %v2915
    %v4033 = vunpack.c.l.b16 %v2916
    %v4034 = vunpack.c.h.b16 %v2916
    %v4035 = vunpack.c.l.b16 %v2917
    %v4036 = vunpack.c.h.b16 %v2917
    %v4037 = vunpack.c.l.b16 %v2918
    %v4038 = vunpack.c.h.b16 %v2918
    %v4039 = vunpack.c.l.b16 %v2919
    %v4040 = vunpack.c.h.b16 %v2919
    %v4041 = vunpack.c.l.b16 %v2920
    %v4042 = vunpack.c.h.b16 %v2920
    %v4043 = vunpack.c.l.b16 %v2921
    %v4044 = vunpack.c.h.b16 %v2921
    %v4045 = vunpack.c.l.b16 %v2922
    %v4046 = vunpack.c.h.b16 %v2922
    %v4047 = vunpack.c.l.b16 %v2923
    %v4048 = vunpack.c.h.b16 %v2923
    %v4049 = vunpack.c.l.b16 %v2924
    %v4050 = vunpack.c.h.b16 %v2924
    %v4051 = vunpack.c.l.b16 %v2925
    %v4052 = vunpack.c.h.b16 %v2925
    %v4053 = vunpack.c.l.b16 %v2926
    %v4054 = vunpack.c.h.b16 %v2926
    %v4055 = vunpack.c.l.b16 %v2927
    %v4056 = vunpack.c.h.b16 %v2927
    %v4057 = vunpack.c.l.b16 %v2928
    %v4058 = vunpack.c.h.b16 %v2928
    %v4059 = vunpack.c.l.b16 %v2929
    %v4060 = vunpack.c.h.b16 %v2929
    %v4061 = vunpack.c.l.b16 %v2930
    %v4062 = vunpack.c.h.b16 %v2930
    %v4063 = vunpack.c.l.b16 %v2931
    %v4064 = vunpack.c.h.b16 %v2931
    %v4065 = vunpack.c.l.b16 %v2932
    %v4066 = vunpack.c.h.b16 %v2932
    %v4067 = vunpack.c.l.b16 %v2933
    %v4068 = vunpack.c.h.b16 %v2933
    %v4069 = vunpack.c.l.b16 %v2934
    %v4070 = vunpack.c.h.b16 %v2934
    %v4071 = vunpack.c.l.b16 %v2935
    %v4072 = vunpack.c.h.b16 %v2935
    %v4073 = vunpack.c.l.b16 %v2936
    %v4074 = vunpack.c.h.b16 %v2936
    %v4075 = vunpack.c.l.b16 %v2937
    %v4076 = vunpack.c.h.b16 %v2937
    %v4077 = vunpack.c.l.b16 %v2938
    %v4078 = vunpack.c.h.b16 %v2938
    %v4079 = vunpack.c.l.b16 %v2939
    %v4080 = vunpack.c.h.b16 %v2939
    %v4081 = vunpack.c.l.b16 %v2940
    %v4082 = vunpack.c.h.b16 %v2940
    %v4083 = vunpack.c.l.b16 %v2941
    %v4084 = vunpack.c.h.b16 %v2941
    %v4085 = vunpack.c.l.b16 %v2942
    %v4086 = vunpack.c.h.b16 %v2942
    %v4087 = vunpack.c.l.b16 %v2943
    %v4088 = vunpack.c.h.b16 %v2943
    %v4089 = vunpack.c.l.b16 %v2944
    %v4090 = vunpack.c.h.b16 %v2944
    %v4091 = vunpack.c.l.b16 %v2945
    %v4092 = vunpack.c.h.b16 %v2945
    %v4093 = vunpack.c.l.b16 %v2946
    %v4094 = vunpack.c.h.b16 %v2946
    %v4095 = vunpack.c.l.b16 %v2947
    %v4096 = vunpack.c.h.b16 %v2947
    %v4097 = vunpack.c.l.b16 %v2948
    %v4098 = vunpack.c.h.b16 %v2948
    %v4099 = vunpack.c.l.b16 %v2949
    %v4100 = vunpack.c.h.b16 %v2949
    %v4101 = vunpack.c.l.b16 %v2950
    %v4102 = vunpack.c.h.b16 %v2950
    %v4103 = vunpack.c.l.b16 %v2951
    %v4104 = vunpack.c.h.b16 %v2951
    %v4105 = vunpack.c.l.b16 %v2952
    %v4106 = vunpack.c.h.b16 %v2952
    %v4107 = vunpack.c.l.b16 %v2953
    %v4108 = vunpack.c.h.b16 %v2953
    %v4109 = vunpack.c.l.b16 %v2954
    %v4110 = vunpack.c.h.b16 %v2954
    %v4111 = vunpack.c.l.b16 %v2955
    %v4112 = vunpack.c.h.b16 %v2955
    %v4113 = vunpack.c.l.b16 %v2956
    %v4114 = vunpack.c.h.b16 %v2956
    %v4115 = vunpack.c.l.b16 %v2957
    %v4116 = vunpack.c.h.b16 %v2957
    %v4117 = vunpack.c.l.b16 %v2958
    %v4118 = vunpack.c.h.b16 %v2958
    %v4119 = vunpack.c.l.b16 %v2959
    %v4120 = vunpack.c.h.b16 %v2959
    %v4121 = vunpack.c.l.b16 %v2960
    %v4122 = vunpack.c.h.b16 %v2960
    %v4123 = vunpack.c.l.b16 %v2961
    %v4124 = vunpack.c.h.b16 %v2961
    %v4125 = vunpack.c.l.b16 %v2962
    %v4126 = vunpack.c.h.b16 %v2962
    %v4127 = vunpack.c.l.b16 %v2963
    %v4128 = vunpack.c.h.b16 %v2963
    %v4129 = vunpack.c.l.b16 %v2964
    %v4130 = vunpack.c.h.b16 %v2964
    %v4131 = vunpack.c.l.b16 %v2965
    %v4132 = vunpack.c.h.b16 %v2965
    %v4133 = vunpack.c.l.b16 %v2966
    %v4134 = vunpack.c.h.b16 %v2966
    %v4135 = vunpack.c.l.b16 %v2967
    %v4136 = vunpack.c.h.b16 %v2967
    %v4137 = vunpack.c.l.b16 %v2968
    %v4138 = vunpack.c.h.b16 %v2968
    %v4139 = vunpack.c.l.b16 %v2969
    %v4140 = vunpack.c.h.b16 %v2969
    %v4141 = vunpack.c.l.b16 %v2970
    %v4142 = vunpack.c.h.b16 %v2970
    %v4143 = vunpack.c.l.b16 %v2971
    %v4144 = vunpack.c.h.b16 %v2971
    %v4145 = vunpack.c.l.b16 %v2972
    %v4146 = vunpack.c.h.b16 %v2972
    %v4147 = vunpack.c.l.b16 %v2973
    %v4148 = vunpack.c.h.b16 %v2973
    %v4149 = vunpack.c.l.b16 %v2974
    %v4150 = vunpack.c.h.b16 %v2974
    %v4151 = vunpack.c.l.b16 %v2975
    %v4152 = vunpack.c.h.b16 %v2975
    %v4153 = vunpack.c.l.b16 %v2976
    %v4154 = vunpack.c.h.b16 %v2976
    %v4155 = vunpack.c.l.b16 %v2977
    %v4156 = vunpack.c.h.b16 %v2977
    %v4157 = vunpack.c.l.b16 %v2978
    %v4158 = vunpack.c.h.b16 %v2978
    %v4159 = vunpack.c.l.b16 %v2979
    %v4160 = vunpack.c.h.b16 %v2979
    %v4161 = vunpack.c.l.b16 %v2980
    %v4162 = vunpack.c.h.b16 %v2980
    %v4163 = vunpack.c.l.b16 %v2981
    %v4164 = vunpack.c.h.b16 %v2981
    %v4165 = vunpack.c.l.b16 %v2982
    %v4166 = vunpack.c.h.b16 %v2982
    %v4167 = vunpack.c.l.b16 %v2983
    %v4168 = vunpack.c.h.b16 %v2983
    %v4169 = vunpack.c.l.b16 %v2984
    %v4170 = vunpack.c.h.b16 %v2984
    %v4171 = vunpack.c.l.b16 %v2985
    %v4172 = vunpack.c.h.b16 %v2985
    %v4173 = vunpack.c.l.b16 %v2986
    %v4174 = vunpack.c.h.b16 %v2986
    %v4175 = vunpack.c.l.b16 %v2987
    %v4176 = vunpack.c.h.b16 %v2987
    %v4177 = vunpack.c.l.b16 %v2988
    %v4178 = vunpack.c.h.b16 %v2988
    %v4179 = vunpack.c.l.b16 %v2989
    %v4180 = vunpack.c.h.b16 %v2989
    %v4181 = vunpack.c.l.b16 %v2990
    %v4182 = vunpack.c.h.b16 %v2990
    %v4183 = vunpack.c.l.b16 %v2991
    %v4184 = vunpack.c.h.b16 %v2991
    %v4185 = vunpack.c.l.b16 %v2992
    %v4186 = vunpack.c.h.b16 %v2992
    %v4187 = vunpack.c.l.b16 %v2993
    %v4188 = vunpack.c.h.b16 %v2993
    %v4189 = vunpack.c.l.b16 %v2994
    %v4190 = vunpack.c.h.b16 %v2994
    %v4191 = vunpack.c.l.b16 %v2995
    %v4192 = vunpack.c.h.b16 %v2995
    %v4193 = vunpack.c.l.b16 %v2996
    %v4194 = vunpack.c.h.b16 %v2996
    %v4195 = vunpack.c.l.b16 %v2997
    %v4196 = vunpack.c.h.b16 %v2997
    %v4197 = vunpack.c.l.b16 %v2998
    %v4198 = vunpack.c.h.b16 %v2998
    %v4199 = vunpack.c.l.b16 %v2999
    %v4200 = vunpack.c.h.b16 %v2999
    %v4201 = vunpack.c.l.b16 %v3000
    %v4202 = vunpack.c.h.b16 %v3000
    %v4203 = vunpack.c.l.b16 %v3001
    %v4204 = vunpack.c.h.b16 %v3001
    %v4205 = vunpack.c.l.b16 %v3002
    %v4206 = vunpack.c.h.b16 %v3002
    %v4207 = vunpack.c.l.b16 %v3003
    %v4208 = vunpack.c.h.b16 %v3003
    %v4209 = vunpack.c.l.b16 %v3004
    %v4210 = vunpack.c.h.b16 %v3004
    %v4211 = vunpack.c.l.b16 %v3005
    %v4212 = vunpack.c.h.b16 %v3005
    %v4213 = vunpack.c.l.b16 %v3006
    %v4214 = vunpack.c.h.b16 %v3006
    %v4215 = vunpack.c.l.b16 %v3007
    %v4216 = vunpack.c.h.b16 %v3007
    %v4217 = vunpack.c.l.b16 %v3008
    %v4218 = vunpack.c.h.b16 %v3008
    %v4219 = vunpack.c.l.b16 %v3009
    %v4220 = vunpack.c.h.b16 %v3009
    %v4221 = vunpack.c.l.b16 %v3010
    %v4222 = vunpack.c.h.b16 %v3010
    %v4223 = vunpack.c.l.b16 %v3011
    %v4224 = vunpack.c.h.b16 %v3011
    %v4225 = vunpack.c.l.b16 %v3012
    %v4226 = vunpack.c.h.b16 %v3012
    %v4227 = vunpack.c.l.b16 %v3013
    %v4228 = vunpack.c.h.b16 %v3013
    %v4229 = vunpack.c.l.b16 %v3014
    %v4230 = vunpack.c.h.b16 %v3014
    %v4231 = vunpack.c.l.b16 %v3015
    %v4232 = vunpack.c.h.b16 %v3015
    %v4233 = vunpack.c.l.b16 %v3016
    %v4234 = vunpack.c.h.b16 %v3016
    %v4235 = vunpack.c.l.b16 %v3017
    %v4236 = vunpack.c.h.b16 %v3017
    %v4237 = vunpack.c.l.b16 %v3018
    %v4238 = vunpack.c.h.b16 %v3018
    %v4239 = vunpack.c.l.b16 %v3019
    %v4240 = vunpack.c.h.b16 %v3019
    %v4241 = vunpack.c.l.b16 %v3020
    %v4242 = vunpack.c.h.b16 %v3020
    %v4243 = vunpack.c.l.b16 %v3021
    %v4244 = vunpack.c.h.b16 %v3021
    %v4245 = vunpack.c.l.b16 %v3022
    %v4246 = vunpack.c.h.b16 %v3022
    %v4247 = vunpack.c.l.b16 %v3023
    %v4248 = vunpack.c.h.b16 %v3023
    %v4249 = vunpack.c.l.b16 %v3024
    %v4250 = vunpack.c.h.b16 %v3024
    %v4251 = vunpack.c.l.b16 %v3025
    %v4252 = vunpack.c.h.b16 %v3025
    %v4253 = vunpack.c.l.b16 %v3026
    %v4254 = vunpack.c.h.b16 %v3026
    %v4255 = vunpack.c.l.b16 %v3027
    %v4256 = vunpack.c.h.b16 %v3027
    %v4257 = vunpack.c.l.b16 %v3028
    %v4258 = vunpack.c.h.b16 %v3028
    %v4259 = vunpack.c.l.b16 %v3029
    %v4260 = vunpack.c.h.b16 %v3029
    %v4261 = vunpack.c.l.b16 %v3030
    %v4262 = vunpack.c.h.b16 %v3030
    %v4263 = vunpack.c.l.b16 %v3031
    %v4264 = vunpack.c.h.b16 %v3031
    %v4265 = vunpack.c.l.b16 %v3032
    %v4266 = vunpack.c.h.b16 %v3032
    %v4267 = vunpack.c.l.b16 %v3033
    %v4268 = vunpack.c.h.b16 %v3033
    %v4269 = vunpack.c.l.b16 %v3034
    %v4270 = vunpack.c.h.b16 %v3034
    %v4271 = vunpack.c.l.b16 %v3035
    %v4272 = vunpack.c.h.b16 %v3035
    %v4273 = vunpack.c.l.b16 %v3036
    %v4274 = vunpack.c.h.b16 %v3036
    %v4275 = vunpack.c.l.b16 %v3037
    %v4276 = vunpack.c.h.b16 %v3037
    %v4277 = vunpack.c.l.b16 %v3038
    %v4278 = vunpack.c.h.b16 %v3038
    %v4279 = vunpack.c.l.b16 %v3039
    %v4280 = vunpack.c.h.b16 %v3039
    %v4281 = vunpack.c.l.b16 %v3040
    %v4282 = vunpack.c.h.b16 %v3040
    %v4283 = vunpack.c.l.b16 %v3041
    %v4284 = vunpack.c.h.b16 %v3041
    %v4285 = vunpack.c.l.b16 %v3042
    %v4286 = vunpack.c.h.b16 %v3042
    %v4287 = vunpack.c.l.b16 %v3043
    %v4288 = vunpack.c.h.b16 %v3043
    %v4289 = vunpack.c.l.b16 %v3044
    %v4290 = vunpack.c.h.b16 %v3044
    %v4291 = vunpack.c.l.b16 %v3045
    %v4292 = vunpack.c.h.b16 %v3045
    %v4293 = vunpack.c.l.b16 %v3046
    %v4294 = vunpack.c.h.b16 %v3046
    %v4295 = vunpack.c.l.b16 %v3047
    %v4296 = vunpack.c.h.b16 %v3047
    %v4297 = vunpack.c.l.b16 %v3048
    %v4298 = vunpack.c.h.b16 %v3048
    %v4299 = vunpack.c.l.b16 %v3049
    %v4300 = vunpack.c.h.b16 %v3049
    %v4301 = vunpack.c.l.b16 %v3050
    %v4302 = vunpack.c.h.b16 %v3050
    %v4303 = vunpack.c.l.b16 %v3051
    %v4304 = vunpack.c.h.b16 %v3051
    %v4305 = vunpack.c.l.b16 %v3052
    %v4306 = vunpack.c.h.b16 %v3052
    %v4307 = vunpack.c.l.b16 %v3053
    %v4308 = vunpack.c.h.b16 %v3053
    %v4309 = vunpack.c.l.b16 %v3054
    %v4310 = vunpack.c.h.b16 %v3054
    %v4311 = vunpack.c.l.b16 %v3055
    %v4312 = vunpack.c.h.b16 %v3055
    %v4313 = vunpack.c.l.b16 %v3056
    %v4314 = vunpack.c.h.b16 %v3056
    %v4315 = vunpack.c.l.b16 %v3057
    %v4316 = vunpack.c.h.b16 %v3057
    %v4317 = vunpack.c.l.b16 %v3058
    %v4318 = vunpack.c.h.b16 %v3058
    %v4319 = vunpack.c.l.b16 %v3059
    %v4320 = vunpack.c.h.b16 %v3059
    %v4321 = vunpack.c.l.b16 %v3060
    %v4322 = vunpack.c.h.b16 %v3060
    %v4323 = vunpack.c.l.b16 %v3061
    %v4324 = vunpack.c.h.b16 %v3061
    %v4325 = vunpack.c.l.b16 %v3062
    %v4326 = vunpack.c.h.b16 %v3062
    %v4327 = vunpack.c.l.b16 %v3063
    %v4328 = vunpack.c.h.b16 %v3063
    %v4329 = vunpack.c.l.b16 %v3064
    %v4330 = vunpack.c.h.b16 %v3064
    %v4331 = vunpack.c.l.b16 %v3065
    %v4332 = vunpack.c.h.b16 %v3065
    %v4333 = vunpack.c.l.b16 %v3066
    %v4334 = vunpack.c.h.b16 %v3066
    %v4335 = vunpack.c.l.b16 %v3067
    %v4336 = vunpack.c.h.b16 %v3067
    %v4337 = vunpack.c.l.b16 %v3068
    %v4338 = vunpack.c.h.b16 %v3068
    %v4339 = vunpack.c.l.b16 %v3069
    %v4340 = vunpack.c.h.b16 %v3069
    %v4341 = vunpack.c.l.b16 %v3070
    %v4342 = vunpack.c.h.b16 %v3070
    %v4343 = vunpack.c.l.b16 %v3071
    %v4344 = vunpack.c.h.b16 %v3071
    %v4345 = vunpack.c.l.b16 %v3072
    %v4346 = vunpack.c.h.b16 %v3072
    %v4347 = vunpack.c.l.b16 %v3073
    %v4348 = vunpack.c.h.b16 %v3073
    %v4349 = vunpack.c.l.b16 %v3074
    %v4350 = vunpack.c.h.b16 %v3074
    %v4351 = vunpack.c.l.b16 %v3075
    %v4352 = vunpack.c.h.b16 %v3075
    %v4353 = vunpack.c.l.b16 %v3076
    %v4354 = vunpack.c.h.b16 %v3076
    %v4355 = vunpack.c.l.b16 %v3077
    %v4356 = vunpack.c.h.b16 %v3077
    %v4357 = vunpack.c.l.b16 %v3078
    %v4358 = vunpack.c.h.b16 %v3078
    %v4359 = vunpack.c.l.b16 %v3079
    %v4360 = vunpack.c.h.b16 %v3079
    %v4361 = vunpack.c.l.b16 %v3080
    %v4362 = vunpack.c.h.b16 %v3080
    %v4363 = vunpack.c.l.b16 %v3081
    %v4364 = vunpack.c.h.b16 %v3081
    %v4365 = vunpack.c.l.b16 %v3082
    %v4366 = vunpack.c.h.b16 %v3082
    %v4367 = vunpack.c.l.b16 %v3083
    %v4368 = vunpack.c.h.b16 %v3083
    %v4369 = vunpack.c.l.b16 %v3084
    %v4370 = vunpack.c.h.b16 %v3084
    %v4371 = vunpack.c.l.b16 %v3085
    %v4372 = vunpack.c.h.b16 %v3085
    %v4373 = vunpack.c.l.b16 %v3086
    %v4374 = vunpack.c.h.b16 %v3086
    %v4375 = vunpack.c.l.b16 %v3087
    %v4376 = vunpack.c.h.b16 %v3087
    %v4377 = vunpack.c.l.b16 %v3088
    %v4378 = vunpack.c.h.b16 %v3088
    %v4379 = vunpack.c.l.b16 %v3089
    %v4380 = vunpack.c.h.b16 %v3089
    %v4381 = vunpack.c.l.b16 %v3090
    %v4382 = vunpack.c.h.b16 %v3090
    %v4383 = vunpack.c.l.b16 %v3091
    %v4384 = vunpack.c.h.b16 %v3091
    %v4385 = vunpack.c.l.b16 %v3092
    %v4386 = vunpack.c.h.b16 %v3092
    %v4387 = vunpack.c.l.b16 %v3093
    %v4388 = vunpack.c.h.b16 %v3093
    %v4389 = vunpack.c.l.b16 %v3094
    %v4390 = vunpack.c.h.b16 %v3094
    %v4391 = vunpack.c.l.b16 %v3095
    %v4392 = vunpack.c.h.b16 %v3095
    %v4393 = vunpack.c.l.b16 %v3096
    %v4394 = vunpack.c.h.b16 %v3096
    %v4395 = vunpack.c.l.b16 %v3097
    %v4396 = vunpack.c.h.b16 %v3097
    %v4397 = vunpack.c.l.b16 %v3098
    %v4398 = vunpack.c.h.b16 %v3098
    %v4399 = vunpack.c.l.b16 %v3099
    %v4400 = vunpack.c.h.b16 %v3099
    %v4401 = vunpack.c.l.b16 %v3100
    %v4402 = vunpack.c.h.b16 %v3100
    %v4403 = vunpack.c.l.b16 %v3101
    %v4404 = vunpack.c.h.b16 %v3101
    %v4405 = vunpack.c.l.b16 %v3102
    %v4406 = vunpack.c.h.b16 %v3102
    %v4407 = vunpack.c.l.b16 %v3103
    %v4408 = vunpack.c.h.b16 %v3103
    %v4409 = vunpack.c.l.b16 %v3104
    %v4410 = vunpack.c.h.b16 %v3104
    %v4411 = vunpack.c.l.b16 %v3105
    %v4412 = vunpack.c.h.b16 %v3105
    %v4413 = vunpack.c.l.b16 %v3106
    %v4414 = vunpack.c.h.b16 %v3106
    %v4415 = vunpack.c.l.b16 %v3107
    %v4416 = vunpack.c.h.b16 %v3107
    %v4417 = vunpack.c.l.b16 %v3108
    %v4418 = vunpack.c.h.b16 %v3108
    %v4419 = vunpack.c.l.b16 %v3109
    %v4420 = vunpack.c.h.b16 %v3109
    %v4421 = vunpack.c.l.b16 %v3110
    %v4422 = vunpack.c.h.b16 %v3110
    %v4423 = vunpack.c.l.b16 %v3111
    %v4424 = vunpack.c.h.b16 %v3111
    %v4425 = vunpack.c.l.b16 %v3112
    %v4426 = vunpack.c.h.b16 %v3112
    %v4427 = vunpack.c.l.b16 %v3113
    %v4428 = vunpack.c.h.b16 %v3113
    %v4429 = vunpack.c.l.b16 %v3114
    %v4430 = vunpack.c.h.b16 %v3114
    %v4431 = vunpack.c.l.b16 %v3115
    %v4432 = vunpack.c.h.b16 %v3115
    %v4433 = vunpack.c.l.b16 %v3116
    %v4434 = vunpack.c.h.b16 %v3116
    %v4435 = vunpack.c.l.b16 %v3117
    %v4436 = vunpack.c.h.b16 %v3117
    %v4437 = vunpack.c.l.b16 %v3118
    %v4438 = vunpack.c.h.b16 %v3118
    %v4439 = vunpack.c.l.b16 %v3119
    %v4440 = vunpack.c.h.b16 %v3119
    %v4441 = vunpack.c.l.b16 %v3120
    %v4442 = vunpack.c.h.b16 %v3120
    %v4443 = vunpack.c.l.b16 %v3121
    %v4444 = vunpack.c.h.b16 %v3121
    %v4445 = vunpack.c.l.b16 %v3122
    %v4446 = vunpack.c.h.b16 %v3122
    %v4447 = vunpack.c.l.b16 %v3123
    %v4448 = vunpack.c.h.b16 %v3123
    %v4449 = vunpack.c.l.b16 %v3124
    %v4450 = vunpack.c.h.b16 %v3124
    %v4451 = vunpack.c.l.b16 %v3125
    %v4452 = vunpack.c.h.b16 %v3125
    %v4453 = vunpack.c.l.b16 %v3126
    %v4454 = vunpack.c.h.b16 %v3126
    %v4455 = vunpack.c.l.b16 %v3127
    %v4456 = vunpack.c.h.b16 %v3127
    %v4457 = vunpack.c.l.b16 %v3128
    %v4458 = vunpack.c.h.b16 %v3128
    %v4459 = vunpack.c.l.b16 %v3129
    %v4460 = vunpack.c.h.b16 %v3129
    %v4461 = vunpack.c.l.b16 %v3130
    %v4462 = vunpack.c.h.b16 %v3130
    %v4463 = vunpack.c.l.b16 %v3131
    %v4464 = vunpack.c.h.b16 %v3131
    %v4465 = vunpack.c.l.b16 %v3132
    %v4466 = vunpack.c.h.b16 %v3132
    %v4467 = vunpack.c.l.b16 %v3133
    %v4468 = vunpack.c.h.b16 %v3133
    %v4469 = vunpack.c.l.b16 %v3134
    %v4470 = vunpack.c.h.b16 %v3134
    %v4471 = vunpack.c.l.b16 %v3135
    %v4472 = vunpack.c.h.b16 %v3135
    %v4473 = vunpack.c.l.b16 %v3136
    %v4474 = vunpack.c.h.b16 %v3136
    %v4475 = vunpack.c.l.b16 %v3137
    %v4476 = vunpack.c.h.b16 %v3137
    %v4477 = vunpack.c.l.b16 %v3138
    %v4478 = vunpack.c.h.b16 %v3138
    %v4479 = vunpack.c.l.b16 %v3139
    %v4480 = vunpack.c.h.b16 %v3139
    %v4481 = vunpack.c.l.b16 %v3140
    %v4482 = vunpack.c.h.b16 %v3140
    %v4483 = vunpack.c.l.b16 %v3141
    %v4484 = vunpack.c.h.b16 %v3141
    %v4485 = vunpack.c.l.b16 %v3142
    %v4486 = vunpack.c.h.b16 %v3142
    %v4487 = vunpack.c.l.b16 %v3143
    %v4488 = vunpack.c.h.b16 %v3143
    %v4489 = vunpack.c.l.b16 %v3144
    %v4490 = vunpack.c.h.b16 %v3144
    %v4491 = vunpack.c.l.b16 %v3145
    %v4492 = vunpack.c.h.b16 %v3145
    %v4493 = vunpack.c.l.b16 %v3146
    %v4494 = vunpack.c.h.b16 %v3146
    %v4495 = vunpack.c.l.b16 %v3147
    %v4496 = vunpack.c.h.b16 %v3147
    %v4497 = vunpack.c.l.b16 %v3148
    %v4498 = vunpack.c.h.b16 %v3148
    %v4499 = vunpack.c.l.b16 %v3149
    %v4500 = vunpack.c.h.b16 %v3149
    %v4501 = vunpack.c.l.b16 %v3150
    %v4502 = vunpack.c.h.b16 %v3150
    %v4503 = vunpack.c.l.b16 %v3151
    %v4504 = vunpack.c.h.b16 %v3151
    %v4505 = vunpack.c.l.b16 %v3152
    %v4506 = vunpack.c.h.b16 %v3152
    %v4507 = vunpack.c.l.b16 %v3153
    %v4508 = vunpack.c.h.b16 %v3153
    %v4509 = vunpack.c.l.b16 %v3154
    %v4510 = vunpack.c.h.b16 %v3154
    %v4511 = vunpack.c.l.b16 %v3155
    %v4512 = vunpack.c.h.b16 %v3155
    %v4513 = vunpack.c.l.b16 %v3156
    %v4514 = vunpack.c.h.b16 %v3156
    %v4515 = vunpack.c.l.b16 %v3157
    %v4516 = vunpack.c.h.b16 %v3157
    %v4517 = vunpack.c.l.b16 %v3158
    %v4518 = vunpack.c.h.b16 %v3158
    %v4519 = vunpack.c.l.b16 %v3159
    %v4520 = vunpack.c.h.b16 %v3159
    %v4521 = vunpack.c.l.b16 %v3160
    %v4522 = vunpack.c.h.b16 %v3160
    %v4523 = vunpack.c.l.b16 %v3161
    %v4524 = vunpack.c.h.b16 %v3161
    %v4525 = vunpack.c.l.b16 %v3162
    %v4526 = vunpack.c.h.b16 %v3162
    %v4527 = vunpack.c.l.b16 %v3163
    %v4528 = vunpack.c.h.b16 %v3163
    %v4529 = vunpack.c.l.b16 %v3164
    %v4530 = vunpack.c.h.b16 %v3164
    %v4531 = vunpack.c.l.b16 %v3165
    %v4532 = vunpack.c.h.b16 %v3165
    %v4533 = vunpack.c.l.b16 %v3166
    %v4534 = vunpack.c.h.b16 %v3166
    %v4535 = vunpack.c.l.b16 %v3167
    %v4536 = vunpack.c.h.b16 %v3167
    %v4537 = vunpack.c.l.b16 %v3168
    %v4538 = vunpack.c.h.b16 %v3168
    %v4539 = vunpack.c.l.b16 %v3169
    %v4540 = vunpack.c.h.b16 %v3169
    %v4541 = vunpack.c.l.b16 %v3170
    %v4542 = vunpack.c.h.b16 %v3170
    %v4543 = vunpack.c.l.b16 %v3171
    %v4544 = vunpack.c.h.b16 %v3171
    %v4545 = vunpack.c.l.b16 %v3172
    %v4546 = vunpack.c.h.b16 %v3172
    %v4547 = vunpack.c.l.b16 %v3173
    %v4548 = vunpack.c.h.b16 %v3173
    %v4549 = vunpack.c.l.b16 %v3174
    %v4550 = vunpack.c.h.b16 %v3174
    %v4551 = vunpack.c.l.b16 %v3175
    %v4552 = vunpack.c.h.b16 %v3175
    %v4553 = vunpack.c.l.b16 %v3176
    %v4554 = vunpack.c.h.b16 %v3176
    %v4555 = vunpack.c.l.b16 %v3177
    %v4556 = vunpack.c.h.b16 %v3177
    %v4557 = vunpack.c.l.b16 %v3178
    %v4558 = vunpack.c.h.b16 %v3178
    %v4559 = vunpack.c.l.b16 %v3179
    %v4560 = vunpack.c.h.b16 %v3179
    %v4561 = vunpack.c.l.b16 %v3180
    %v4562 = vunpack.c.h.b16 %v3180
    %v4563 = vunpack.c.l.b16 %v3181
    %v4564 = vunpack.c.h.b16 %v3181
    %v4565 = vunpack.c.l.b16 %v3182
    %v4566 = vunpack.c.h.b16 %v3182
    %v4567 = vunpack.c.l.b16 %v3183
    %v4568 = vunpack.c.h.b16 %v3183
    %v4569 = vunpack.c.l.b16 %v3184
    %v4570 = vunpack.c.h.b16 %v3184
    %v4571 = vunpack.c.l.b16 %v3185
    %v4572 = vunpack.c.h.b16 %v3185
    %v4573 = vunpack.c.l.b16 %v3186
    %v4574 = vunpack.c.h.b16 %v3186
    %v4575 = vunpack.c.l.b16 %v3187
    %v4576 = vunpack.c.h.b16 %v3187
    %v4577 = vunpack.c.l.b16 %v3188
    %v4578 = vunpack.c.h.b16 %v3188
    %v4579 = vunpack.c.l.b16 %v3189
    %v4580 = vunpack.c.h.b16 %v3189
    %v4581 = vunpack.c.l.b16 %v3190
    %v4582 = vunpack.c.h.b16 %v3190
    %v4583 = vunpack.c.l.b16 %v3191
    %v4584 = vunpack.c.h.b16 %v3191
    %v4585 = vunpack.c.l.b16 %v3192
    %v4586 = vunpack.c.h.b16 %v3192
    %v4587 = vunpack.c.l.b16 %v3193
    %v4588 = vunpack.c.h.b16 %v3193
    %v4589 = vunpack.c.l.b16 %v3194
    %v4590 = vunpack.c.h.b16 %v3194
    %v4591 = vunpack.c.l.b16 %v3195
    %v4592 = vunpack.c.h.b16 %v3195
    %v4593 = vunpack.c.l.b16 %v3196
    %v4594 = vunpack.c.h.b16 %v3196
    %v4595 = vunpack.c.l.b16 %v3197
    %v4596 = vunpack.c.h.b16 %v3197
    %v4597 = vunpack.c.l.b16 %v3198
    %v4598 = vunpack.c.h.b16 %v3198
    %v4599 = vunpack.c.l.b16 %v3199
    %v4600 = vunpack.c.h.b16 %v3199
    %v4601 = vunpack.c.l.b16 %v3200
    %v4602 = vunpack.c.h.b16 %v3200
    %v4603 = vunpack.c.l.b16 %v3201
    %v4604 = vunpack.c.h.b16 %v3201
    %v4605 = vunpack.c.l.b16 %v3202
    %v4606 = vunpack.c.h.b16 %v3202
    %v4607 = vunpack.c.l.b16 %v3203
    %v4608 = vunpack.c.h.b16 %v3203
    %v4609 = vunpack.c.l.b16 %v3204
    %v4610 = vunpack.c.h.b16 %v3204
    %v4611 = vunpack.c.l.b16 %v3205
    %v4612 = vunpack.c.h.b16 %v3205
    %v4613 = vunpack.c.l.b16 %v3206
    %v4614 = vunpack.c.h.b16 %v3206
    %v4615 = vunpack.c.l.b16 %v3207
    %v4616 = vunpack.c.h.b16 %v3207
    %v4617 = vunpack.c.l.b16 %v3208
    %v4618 = vunpack.c.h.b16 %v3208
    %v4619 = vunpack.c.l.b16 %v3209
    %v4620 = vunpack.c.h.b16 %v3209
    %v4621 = vunpack.c.l.b16 %v3210
    %v4622 = vunpack.c.h.b16 %v3210
    %v4623 = vunpack.c.l.b16 %v3211
    %v4624 = vunpack.c.h.b16 %v3211
    %v4625 = vunpack.c.l.b16 %v3212
    %v4626 = vunpack.c.h.b16 %v3212
    %v4627 = vunpack.c.l.b16 %v3213
    %v4628 = vunpack.c.h.b16 %v3213
    %v4629 = vunpack.c.l.b16 %v3214
    %v4630 = vunpack.c.h.b16 %v3214
    %v4631 = vunpack.c.l.b16 %v3215
    %v4632 = vunpack.c.h.b16 %v3215
    %v4633 = vunpack.c.l.b16 %v3216
    %v4634 = vunpack.c.h.b16 %v3216
    %v4635 = vunpack.c.l.b16 %v3217
    %v4636 = vunpack.c.h.b16 %v3217
    %v4637 = vunpack.c.l.b16 %v3218
    %v4638 = vunpack.c.h.b16 %v3218
    %v4639 = vunpack.c.l.b16 %v3219
    %v4640 = vunpack.c.h.b16 %v3219
    %v4641 = vunpack.c.l.b16 %v3220
    %v4642 = vunpack.c.h.b16 %v3220
    %v4643 = vunpack.c.l.b16 %v3221
    %v4644 = vunpack.c.h.b16 %v3221
    %v4645 = vunpack.c.l.b16 %v3222
    %v4646 = vunpack.c.h.b16 %v3222
    %v4647 = vunpack.c.l.b16 %v3223
    %v4648 = vunpack.c.h.b16 %v3223
    %v4649 = vunpack.c.l.b16 %v3224
    %v4650 = vunpack.c.h.b16 %v3224
    %v4651 = vunpack.c.l.b16 %v3225
    %v4652 = vunpack.c.h.b16 %v3225
    %v4653 = vunpack.c.l.b16 %v3226
    %v4654 = vunpack.c.h.b16 %v3226
    %v4655 = vunpack.c.l.b16 %v3227
    %v4656 = vunpack.c.h.b16 %v3227
    %v4657 = vunpack.c.l.b16 %v3228
    %v4658 = vunpack.c.h.b16 %v3228
    %v4659 = vunpack.c.l.b16 %v3229
    %v4660 = vunpack.c.h.b16 %v3229
    %v4661 = vunpack.c.l.b16 %v3230
    %v4662 = vunpack.c.h.b16 %v3230
    %v4663 = vunpack.c.l.b16 %v3231
    %v4664 = vunpack.c.h.b16 %v3231
    %v4665 = vunpack.c.l.b16 %v3232
    %v4666 = vunpack.c.h.b16 %v3232
    %v4667 = vunpack.c.l.b16 %v3233
    %v4668 = vunpack.c.h.b16 %v3233
    %v4669 = vunpack.c.l.b16 %v3234
    %v4670 = vunpack.c.h.b16 %v3234
    %v4671 = vunpack.c.l.b16 %v3235
    %v4672 = vunpack.c.h.b16 %v3235
    %v4673 = vunpack.c.l.b16 %v3236
    %v4674 = vunpack.c.h.b16 %v3236
    %v4675 = vunpack.c.l.b16 %v3237
    %v4676 = vunpack.c.h.b16 %v3237
    %v4677 = vunpack.c.l.b16 %v3238
    %v4678 = vunpack.c.h.b16 %v3238
    %v4679 = vunpack.c.l.b16 %v3239
    %v4680 = vunpack.c.h.b16 %v3239
    %v4681 = vunpack.c.l.b16 %v3240
    %v4682 = vunpack.c.h.b16 %v3240
    %v4683 = vunpack.c.l.b16 %v3241
    %v4684 = vunpack.c.h.b16 %v3241
    %v4685 = vunpack.c.l.b16 %v3242
    %v4686 = vunpack.c.h.b16 %v3242
    %v4687 = vunpack.c.l.b16 %v3243
    %v4688 = vunpack.c.h.b16 %v3243
    %v4689 = vunpack.c.l.b16 %v3244
    %v4690 = vunpack.c.h.b16 %v3244
    %v4691 = vunpack.c.l.b16 %v3245
    %v4692 = vunpack.c.h.b16 %v3245
    %v4693 = vunpack.c.l.b16 %v3246
    %v4694 = vunpack.c.h.b16 %v3246
    %v4695 = vunpack.c.l.b16 %v3247
    %v4696 = vunpack.c.h.b16 %v3247
    %v4697 = vunpack.c.l.b16 %v3248
    %v4698 = vunpack.c.h.b16 %v3248
    %v4699 = vunpack.c.l.b16 %v3249
    %v4700 = vunpack.c.h.b16 %v3249
    %v4701 = vunpack.c.l.b16 %v3250
    %v4702 = vunpack.c.h.b16 %v3250
    %v4703 = vunpack.c.l.b16 %v3251
    %v4704 = vunpack.c.h.b16 %v3251
    %v4705 = vunpack.c.l.b16 %v3252
    %v4706 = vunpack.c.h.b16 %v3252
    %v4707 = vunpack.c.l.b16 %v3253
    %v4708 = vunpack.c.h.b16 %v3253
    %v4709 = vunpack.c.l.b16 %v3254
    %v4710 = vunpack.c.h.b16 %v3254
    %v4711 = vunpack.c.l.b16 %v3255
    %v4712 = vunpack.c.h.b16 %v3255
    %v4713 = vunpack.c.l.b16 %v3256
    %v4714 = vunpack.c.h.b16 %v3256
    %v4715 = vunpack.c.l.b16 %v3257
    %v4716 = vunpack.c.h.b16 %v3257
    %v4717 = vunpack.c.l.b16 %v3258
    %v4718 = vunpack.c.h.b16 %v3258
    %v4719 = vunpack.c.l.b16 %v3259
    %v4720 = vunpack.c.h.b16 %v3259
    %v4721 = vunpack.c.l.b16 %v3260
    %v4722 = vunpack.c.h.b16 %v3260
    %v4723 = vunpack.c.l.b16 %v3261
    %v4724 = vunpack.c.h.b16 %v3261
    %v4725 = vunpack.c.l.b16 %v3262
    %v4726 = vunpack.c.h.b16 %v3262
    %v4727 = vunpack.c.l.b16 %v3263
    %v4728 = vunpack.c.h.b16 %v3263
    %v4729 = vunpack.c.l.b16 %v3264
    %v4730 = vunpack.c.h.b16 %v3264
    %v4731 = vunpack.c.l.b16 %v3265
    %v4732 = vunpack.c.h.b16 %v3265
    %v4733 = vunpack.c.l.b16 %v3266
    %v4734 = vunpack.c.h.b16 %v3266
    %v4735 = vunpack.c.l.b16 %v3267
    %v4736 = vunpack.c.h.b16 %v3267
    %v4737 = vunpack.c.l.b16 %v3268
    %v4738 = vunpack.c.h.b16 %v3268
    %v4739 = vunpack.c.l.b16 %v3269
    %v4740 = vunpack.c.h.b16 %v3269
    %v4741 = vunpack.c.l.b16 %v3270
    %v4742 = vunpack.c.h.b16 %v3270
    %v4743 = vunpack.c.l.b16 %v3271
    %v4744 = vunpack.c.h.b16 %v3271
    %v4745 = vunpack.c.l.b16 %v3272
    %v4746 = vunpack.c.h.b16 %v3272
    %v4747 = vunpack.c.l.b16 %v3273
    %v4748 = vunpack.c.h.b16 %v3273
    %v4749 = vunpack.c.l.b16 %v3274
    %v4750 = vunpack.c.h.b16 %v3274
    %v4751 = vunpack.c.l.b16 %v3275
    %v4752 = vunpack.c.h.b16 %v3275
    %v4753 = vunpack.c.l.b16 %v3276
    %v4754 = vunpack.c.h.b16 %v3276
    %v4755 = vunpack.c.l.b16 %v3277
    %v4756 = vunpack.c.h.b16 %v3277
    %v4757 = vunpack.c.l.b16 %v3278
    %v4758 = vunpack.c.h.b16 %v3278
    %v4759 = vunpack.c.l.b16 %v3279
    %v4760 = vunpack.c.h.b16 %v3279
    %v4761 = vunpack.c.l.b16 %v3280
    %v4762 = vunpack.c.h.b16 %v3280
    %v4763 = vunpack.c.l.b16 %v3281
    %v4764 = vunpack.c.h.b16 %v3281
    %v4765 = vunpack.c.l.b16 %v3282
    %v4766 = vunpack.c.h.b16 %v3282
    %v4767 = vunpack.c.l.b16 %v3283
    %v4768 = vunpack.c.h.b16 %v3283
    %v4769 = vunpack.c.l.b16 %v3284
    %v4770 = vunpack.c.h.b16 %v3284
    %v4771 = vunpack.c.l.b16 %v3285
    %v4772 = vunpack.c.h.b16 %v3285
    %v4773 = vunpack.c.l.b16 %v3286
    %v4774 = vunpack.c.h.b16 %v3286
    %v4775 = vunpack.c.l.b16 %v3287
    %v4776 = vunpack.c.h.b16 %v3287
    %v4777 = vunpack.c.l.b16 %v3288
    %v4778 = vunpack.c.h.b16 %v3288
    %v4779 = vunpack.c.l.b16 %v3289
    %v4780 = vunpack.c.h.b16 %v3289
    %v4781 = vunpack.c.l.b16 %v3290
    %v4782 = vunpack.c.h.b16 %v3290
    %v4783 = vunpack.c.l.b16 %v3291
    %v4784 = vunpack.c.h.b16 %v3291
    %v4785 = vunpack.c.l.b16 %v3292
    %v4786 = vunpack.c.h.b16 %v3292
    %v4787 = vunpack.c.l.b16 %v3293
    %v4788 = vunpack.c.h.b16 %v3293
    %v4789 = vunpack.c.l.b16 %v3294
    %v4790 = vunpack.c.h.b16 %v3294
    %v4791 = vunpack.c.l.b16 %v3295
    %v4792 = vunpack.c.h.b16 %v3295
    %v4793 = vunpack.c.l.b16 %v3296
    %v4794 = vunpack.c.h.b16 %v3296
    %v4795 = vunpack.c.l.b16 %v3297
    %v4796 = vunpack.c.h.b16 %v3297
    %v4797 = vunpack.c.l.b16 %v3298
    %v4798 = vunpack.c.h.b16 %v3298
    %v4799 = vunpack.c.l.b16 %v3299
    %v4800 = vunpack.c.h.b16 %v3299
    %v4801 = vunpack.c.l.b16 %v3300
    %v4802 = vunpack.c.h.b16 %v3300
    %v4803 = vunpack.c.l.b16 %v3301
    %v4804 = vunpack.c.h.b16 %v3301
    %v4805 = vunpack.c.l.b16 %v3302
    %v4806 = vunpack.c.h.b16 %v3302
    %v4807 = vunpack.c.l.b16 %v3303
    %v4808 = vunpack.c.h.b16 %v3303
    %v4809 = vunpack.c.l.b16 %v3304
    %v4810 = vunpack.c.h.b16 %v3304
    %v4811 = vunpack.c.l.b16 %v3305
    %v4812 = vunpack.c.h.b16 %v3305
    %v4813 = vunpack.c.l.b16 %v3306
    %v4814 = vunpack.c.h.b16 %v3306
    %v4815 = vunpack.c.l.b16 %v3307
    %v4816 = vunpack.c.h.b16 %v3307
    %v4817 = vunpack.c.l.b16 %v3308
    %v4818 = vunpack.c.h.b16 %v3308
    %v4819 = vunpack.c.l.b16 %v3309
    %v4820 = vunpack.c.h.b16 %v3309
    %v4821 = vunpack.c.l.b16 %v3310
    %v4822 = vunpack.c.h.b16 %v3310
    %v4823 = vunpack.c.l.b16 %v3311
    %v4824 = vunpack.c.h.b16 %v3311
    %v4825 = vunpack.c.l.b16 %v3312
    %v4826 = vunpack.c.h.b16 %v3312
    %v4827 = vunpack.c.l.b16 %v3313
    %v4828 = vunpack.c.h.b16 %v3313
    %v4829 = vunpack.c.l.b16 %v3314
    %v4830 = vunpack.c.h.b16 %v3314
    %v4831 = vunpack.c.l.b16 %v3315
    %v4832 = vunpack.c.h.b16 %v3315
    %v4833 = vunpack.c.l.b16 %v3316
    %v4834 = vunpack.c.h.b16 %v3316
    %v4835 = vunpack.c.l.b16 %v3317
    %v4836 = vunpack.c.h.b16 %v3317
    %v4837 = vunpack.c.l.b16 %v3318
    %v4838 = vunpack.c.h.b16 %v3318
    %v4839 = vunpack.c.l.b16 %v3319
    %v4840 = vunpack.c.h.b16 %v3319
    %v4841 = vunpack.c.l.b16 %v3320
    %v4842 = vunpack.c.h.b16 %v3320
    %v4843 = vunpack.c.l.b16 %v3321
    %v4844 = vunpack.c.h.b16 %v3321
    %v4845 = vunpack.c.l.b16 %v3322
    %v4846 = vunpack.c.h.b16 %v3322
    %v4847 = vunpack.c.l.b16 %v3323
    %v4848 = vunpack.c.h.b16 %v3323
    %v4849 = vunpack.c.l.b16 %v3324
    %v4850 = vunpack.c.h.b16 %v3324
    %v4851 = vunpack.c.l.b16 %v3325
    %v4852 = vunpack.c.h.b16 %v3325
    %v4853 = vunpack.c.l.b16 %v3326
    %v4854 = vunpack.c.h.b16 %v3326
    %v4855 = vunpack.c.l.b16 %v3327
    %v4856 = vunpack.c.h.b16 %v3327
    %v4857 = vunpack.c.l.b16 %v3328
    %v4858 = vunpack.c.h.b16 %v3328
    %v4859 = vunpack.c.l.b16 %v3329
    %v4860 = vunpack.c.h.b16 %v3329
    %v4861 = vunpack.c.l.b16 %v3330
    %v4862 = vunpack.c.h.b16 %v3330
    %v4863 = vunpack.c.l.b16 %v3331
    %v4864 = vunpack.c.h.b16 %v3331
    %v4865 = vunpack.c.l.b16 %v3332
    %v4866 = vunpack.c.h.b16 %v3332
    %v4867 = vunpack.c.l.b16 %v3333
    %v4868 = vunpack.c.h.b16 %v3333
    %v4869 = vunpack.c.l.b16 %v3334
    %v4870 = vunpack.c.h.b16 %v3334
    %v4871 = vunpack.c.l.b16 %v3335
    %v4872 = vunpack.c.h.b16 %v3335
    %v4873 = vunpack.c.l.b16 %v3336
    %v4874 = vunpack.c.h.b16 %v3336
    %v4875 = vunpack.c.l.b16 %v3337
    %v4876 = vunpack.c.h.b16 %v3337
    %v4877 = vunpack.c.l.b16 %v3338
    %v4878 = vunpack.c.h.b16 %v3338
    %v4879 = vunpack.c.l.b16 %v3339
    %v4880 = vunpack.c.h.b16 %v3339
    %v4881 = vunpack.c.l.b16 %v3340
    %v4882 = vunpack.c.h.b16 %v3340
    %v4883 = vunpack.c.l.b16 %v3341
    %v4884 = vunpack.c.h.b16 %v3341
    %v4885 = vunpack.c.l.b16 %v3342
    %v4886 = vunpack.c.h.b16 %v3342
    %v4887 = vunpack.c.l.b16 %v3343
    %v4888 = vunpack.c.h.b16 %v3343
    %v4889 = vunpack.c.l.b16 %v3344
    %v4890 = vunpack.c.h.b16 %v3344
    %v4891 = vunpack.c.l.b16 %v3345
    %v4892 = vunpack.c.h.b16 %v3345
    %v4893 = vunpack.c.l.b16 %v3346
    %v4894 = vunpack.c.h.b16 %v3346
    %v4895 = vunpack.c.l.b16 %v3347
    %v4896 = vunpack.c.h.b16 %v3347
    %v4897 = vunpack.c.l.b16 %v3348
    %v4898 = vunpack.c.h.b16 %v3348
    %v4899 = vunpack.c.l.b16 %v3349
    %v4900 = vunpack.c.h.b16 %v3349
    %v4901 = vunpack.c.l.b16 %v3350
    %v4902 = vunpack.c.h.b16 %v3350
    %v4903 = vunpack.c.l.b16 %v3351
    %v4904 = vunpack.c.h.b16 %v3351
    %v4905 = vunpack.c.l.b16 %v3352
    %v4906 = vunpack.c.h.b16 %v3352
    %v4907 = vunpack.c.l.b16 %v3353
    %v4908 = vunpack.c.h.b16 %v3353
    %v4909 = vunpack.c.l.b16 %v3354
    %v4910 = vunpack.c.h.b16 %v3354
    %v4911 = vunpack.c.l.b16 %v3355
    %v4912 = vunpack.c.h.b16 %v3355
    %v4913 = vunpack.c.l.b16 %v3356
    %v4914 = vunpack.c.h.b16 %v3356
    %v4915 = vunpack.c.l.b16 %v3357
    %v4916 = vunpack.c.h.b16 %v3357
    %v4917 = vunpack.c.l.b16 %v3358
    %v4918 = vunpack.c.h.b16 %v3358
    %v4919 = vunpack.c.l.b16 %v3359
    %v4920 = vunpack.c.h.b16 %v3359
    %v4921 = vunpack.c.l.b16 %v3360
    %v4922 = vunpack.c.h.b16 %v3360
    %v4923 = vunpack.c.l.b16 %v3361
    %v4924 = vunpack.c.h.b16 %v3361
    %v4925 = vunpack.c.l.b16 %v3362
    %v4926 = vunpack.c.h.b16 %v3362
    %v4927 = vunpack.c.l.b16 %v3363
    %v4928 = vunpack.c.h.b16 %v3363
    %v4929 = vunpack.c.l.b16 %v3364
    %v4930 = vunpack.c.h.b16 %v3364
    %v4931 = vunpack.c.l.b16 %v3365
    %v4932 = vunpack.c.h.b16 %v3365
    %v4933 = vunpack.c.l.b16 %v3366
    %v4934 = vunpack.c.h.b16 %v3366
    %v4935 = vunpack.c.l.b16 %v3367
    %v4936 = vunpack.c.h.b16 %v3367
    %v4937 = vunpack.c.l.b16 %v3368
    %v4938 = vunpack.c.h.b16 %v3368
    %v4939 = vunpack.c.l.b16 %v3369
    %v4940 = vunpack.c.h.b16 %v3369
    %v4941 = vunpack.c.l.b16 %v3370
    %v4942 = vunpack.c.h.b16 %v3370
    %v4943 = vunpack.c.l.b16 %v3371
    %v4944 = vunpack.c.h.b16 %v3371
    %v4945 = vunpack.c.l.b16 %v3372
    %v4946 = vunpack.c.h.b16 %v3372
    %v4947 = vunpack.c.l.b16 %v3373
    %v4948 = vunpack.c.h.b16 %v3373
    %v4949 = vunpack.c.l.b16 %v3374
    %v4950 = vunpack.c.h.b16 %v3374
    %v4951 = vunpack.c.l.b16 %v3375
    %v4952 = vunpack.c.h.b16 %v3375
    %v4953 = vunpack.c.l.b16 %v3376
    %v4954 = vunpack.c.h.b16 %v3376
    %v4955 = vpack.c.b16 %v3939, %v3931
    %v4956 = vpack.c.b16 %v3940, %v3932
    %v4957 = vpack.c.b16 %v3941, %v3933
    %v4958 = vpack.c.b16 %v3942, %v3934
    %v4959 = vpack.c.b16 %v3943, %v3935
    %v4960 = vpack.c.b16 %v3944, %v3936
    %v4961 = vpack.c.b16 %v3945, %v3937
    %v4962 = vpack.c.b16 %v3946, %v3938
    %v4963 = vpack.c.b16 %v3955, %v3947
    %v4964 = vpack.c.b16 %v3956, %v3948
    %v4965 = vpack.c.b16 %v3957, %v3949
    %v4966 = vpack.c.b16 %v3958, %v3950
    %v4967 = vpack.c.b16 %v3959, %v3951
    %v4968 = vpack.c.b16 %v3960, %v3952
    %v4969 = vpack.c.b16 %v3961, %v3953
    %v4970 = vpack.c.b16 %v3962, %v3954
    %v4971 = vpack.c.b16 %v3971, %v3963
    %v4972 = vpack.c.b16 %v3972, %v3964
    %v4973 = vpack.c.b16 %v3973, %v3965
    %v4974 = vpack.c.b16 %v3974, %v3966
    %v4975 = vpack.c.b16 %v3975, %v3967
    %v4976 = vpack.c.b16 %v3976, %v3968
    %v4977 = vpack.c.b16 %v3977, %v3969
    %v4978 = vpack.c.b16 %v3978, %v3970
    %v4979 = vpack.c.b16 %v3987, %v3979
    %v4980 = vpack.c.b16 %v3988, %v3980
    %v4981 = vpack.c.b16 %v3989, %v3981
    %v4982 = vpack.c.b16 %v3990, %v3982
    %v4983 = vpack.c.b16 %v3991, %v3983
    %v4984 = vpack.c.b16 %v3992, %v3984
    %v4985 = vpack.c.b16 %v3993, %v3985
    %v4986 = vpack.c.b16 %v3994, %v3986
    %v4987 = vpack.c.b16 %v4003, %v3995
    %v4988 = vpack.c.b16 %v4004, %v3996
    %v4989 = vpack.c.b16 %v4005, %v3997
    %v4990 = vpack.c.b16 %v4006, %v3998
    %v4991 = vpack.c.b16 %v4007, %v3999
    %v4992 = vpack.c.b16 %v4008, %v4000
    %v4993 = vpack.c.b16 %v4009, %v4001
    %v4994 = vpack.c.b16 %v4010, %v4002
    %v4995 = vpack.c.b16 %v4019, %v4011
    %v4996 = vpack.c.b16 %v4020, %v4012
    %v4997 = vpack.c.b16 %v4021, %v4013
    %v4998 = vpack.c.b16 %v4022, %v4014
    %v4999 = vpack.c.b16 %v4023, %v4015
    %v5000 = vpack.c.b16 %v4024, %v4016
    %v5001 = vpack.c.b16 %v4025, %v4017
    %v5002 = vpack.c.b16 %v4026, %v4018
    %v5003 = vpack.c.b16 %v4035, %v4027
    %v5004 = vpack.c.b16 %v4036, %v4028
    %v5005 = vpack.c.b16 %v4037, %v4029
    %v5006 = vpack.c.b16 %v4038, %v4030
    %v5007 = vpack.c.b16 %v4039, %v4031
    %v5008 = vpack.c.b16 %v4040, %v4032
    %v5009 = vpack.c.b16 %v4041, %v4033
    %v5010 = vpack.c.b16 %v4042, %v4034
    %v5011 = vpack.c.b16 %v4051, %v4043
    %v5012 = vpack.c.b16 %v4052, %v4044
    %v5013 = vpack.c.b16 %v4053, %v4045
    %v5014 = vpack.c.b16 %v4054, %v4046
    %v5015 = vpack.c.b16 %v4055, %v4047
    %v5016 = vpack.c.b16 %v4056, %v4048
    %v5017 = vpack.c.b16 %v4057, %v4049
    %v5018 = vpack.c.b16 %v4058, %v4050
    %v5019 = vpack.c.b16 %v4067, %v4059
    %v5020 = vpack.c.b16 %v4068, %v4060
    %v5021 = vpack.c.b16 %v4069, %v4061
    %v5022 = vpack.c.b16 %v4070, %v4062
    %v5023 = vpack.c.b16 %v4071, %v4063
    %v5024 = vpack.c.b16 %v4072, %v4064
    %v5025 = vpack.c.b16 %v4073, %v4065
    %v5026 = vpack.c.b16 %v4074, %v4066
    %v5027 = vpack.c.b16 %v4083, %v4075
    %v5028 = vpack.c.b16 %v4084, %v4076
    %v5029 = vpack.c.b16 %v4085, %v4077
    %v5030 = vpack.c.b16 %v4086, %v4078
    %v5031 = vpack.c.b16 %v4087, %v4079
    %v5032 = vpack.c.b16 %v4088, %v4080
    %v5033 = vpack.c.b16 %v4089, %v4081
    %v5034 = vpack.c.b16 %v4090, %v4082
    %v5035 = vpack.c.b16 %v4099, %v4091
    %v5036 = vpack.c.b16 %v4100, %v4092
    %v5037 = vpack.c.b16 %v4101, %v4093
    %v5038 = vpack.c.b16 %v4102, %v4094
    %v5039 = vpack.c.b16 %v4103, %v4095
    %v5040 = vpack.c.b16 %v4104, %v4096
    %v5041 = vpack.c.b16 %v4105, %v4097
    %v5042 = vpack.c.b16 %v4106, %v4098
    %v5043 = vpack.c.b16 %v4115, %v4107
    %v5044 = vpack.c.b16 %v4116, %v4108
    %v5045 = vpack.c.b16 %v4117, %v4109
    %v5046 = vpack.c.b16 %v4118, %v4110
    %v5047 = vpack.c.b16 %v4119, %v4111
    %v5048 = vpack.c.b16 %v4120, %v4112
    %v5049 = vpack.c.b16 %v4121, %v4113
    %v5050 = vpack.c.b16 %v4122, %v4114
    %v5051 = vpack.c.b16 %v4131, %v4123
    %v5052 = vpack.c.b16 %v4132, %v4124
    %v5053 = vpack.c.b16 %v4133, %v4125
    %v5054 = vpack.c.b16 %v4134, %v4126
    %v5055 = vpack.c.b16 %v4135, %v4127
    %v5056 = vpack.c.b16 %v4136, %v4128
    %v5057 = vpack.c.b16 %v4137, %v4129
    %v5058 = vpack.c.b16 %v4138, %v4130
    %v5059 = vpack.c.b16 %v4147, %v4139
    %v5060 = vpack.c.b16 %v4148, %v4140
    %v5061 = vpack.c.b16 %v4149, %v4141
    %v5062 = vpack.c.b16 %v4150, %v4142
    %v5063 = vpack.c.b16 %v4151, %v4143
    %v5064 = vpack.c.b16 %v4152, %v4144
    %v5065 = vpack.c.b16 %v4153, %v4145
    %v5066 = vpack.c.b16 %v4154, %v4146
    %v5067 = vpack.c.b16 %v4163, %v4155
    %v5068 = vpack.c.b16 %v4164, %v4156
    %v5069 = vpack.c.b16 %v4165, %v4157
    %v5070 = vpack.c.b16 %v4166, %v4158
    %v5071 = vpack.c.b16 %v4167, %v4159
    %v5072 = vpack.c.b16 %v4168, %v4160
    %v5073 = vpack.c.b16 %v4169, %v4161
    %v5074 = vpack.c.b16 %v4170, %v4162
    %v5075 = vpack.c.b16 %v4179, %v4171
    %v5076 = vpack.c.b16 %v4180, %v4172
    %v5077 = vpack.c.b16 %v4181, %v4173
    %v5078 = vpack.c.b16 %v4182, %v4174
    %v5079 = vpack.c.b16 %v4183, %v4175
    %v5080 = vpack.c.b16 %v4184, %v4176
    %v5081 = vpack.c.b16 %v4185, %v4177
    %v5082 = vpack.c.b16 %v4186, %v4178
    %v5083 = vpack.c.b16 %v4195, %v4187
    %v5084 = vpack.c.b16 %v4196, %v4188
    %v5085 = vpack.c.b16 %v4197, %v4189
    %v5086 = vpack.c.b16 %v4198, %v4190
    %v5087 = vpack.c.b16 %v4199, %v4191
    %v5088 = vpack.c.b16 %v4200, %v4192
    %v5089 = vpack.c.b16 %v4201, %v4193
    %v5090 = vpack.c.b16 %v4202, %v4194
    %v5091 = vpack.c.b16 %v4211, %v4203
    %v5092 = vpack.c.b16 %v4212, %v4204
    %v5093 = vpack.c.b16 %v4213, %v4205
    %v5094 = vpack.c.b16 %v4214, %v4206
    %v5095 = vpack.c.b16 %v4215, %v4207
    %v5096 = vpack.c.b16 %v4216, %v4208
    %v5097 = vpack.c.b16 %v4217, %v4209
    %v5098 = vpack.c.b16 %v4218, %v4210
    %v5099 = vpack.c.b16 %v4227, %v4219
    %v5100 = vpack.c.b16 %v4228, %v4220
    %v5101 = vpack.c.b16 %v4229, %v4221
    %v5102 = vpack.c.b16 %v4230, %v4222
    %v5103 = vpack.c.b16 %v4231, %v4223
    %v5104 = vpack.c.b16 %v4232, %v4224
    %v5105 = vpack.c.b16 %v4233, %v4225
    %v5106 = vpack.c.b16 %v4234, %v4226
    %v5107 = vpack.c.b16 %v4243, %v4235
    %v5108 = vpack.c.b16 %v4244, %v4236
    %v5109 = vpack.c.b16 %v4245, %v4237
    %v5110 = vpack.c.b16 %v4246, %v4238
    %v5111 = vpack.c.b16 %v4247, %v4239
    %v5112 = vpack.c.b16 %v4248, %v4240
    %v5113 = vpack.c.b16 %v4249, %v4241
    %v5114 = vpack.c.b16 %v4250, %v4242
    %v5115 = vpack.c.b16 %v4259, %v4251
    %v5116 = vpack.c.b16 %v4260, %v4252
    %v5117 = vpack.c.b16 %v4261, %v4253
    %v5118 = vpack.c.b16 %v4262, %v4254
    %v5119 = vpack.c.b16 %v4263, %v4255
    %v5120 = vpack.c.b16 %v4264, %v4256
    %v5121 = vpack.c.b16 %v4265, %v4257
    %v5122 = vpack.c.b16 %v4266, %v4258
    %v5123 = vpack.c.b16 %v4275, %v4267
    %v5124 = vpack.c.b16 %v4276, %v4268
    %v5125 = vpack.c.b16 %v4277, %v4269
    %v5126 = vpack.c.b16 %v4278, %v4270
    %v5127 = vpack.c.b16 %v4279, %v4271
    %v5128 = vpack.c.b16 %v4280, %v4272
    %v5129 = vpack.c.b16 %v4281, %v4273
    %v5130 = vpack.c.b16 %v4282, %v4274
    %v5131 = vpack.c.b16 %v4291, %v4283
    %v5132 = vpack.c.b16 %v4292, %v4284
    %v5133 = vpack.c.b16 %v4293, %v4285
    %v5134 = vpack.c.b16 %v4294, %v4286
    %v5135 = vpack.c.b16 %v4295, %v4287
    %v5136 = vpack.c.b16 %v4296, %v4288
    %v5137 = vpack.c.b16 %v4297, %v4289
    %v5138 = vpack.c.b16 %v4298, %v4290
    %v5139 = vpack.c.b16 %v4307, %v4299
    %v5140 = vpack.c.b16 %v4308, %v4300
    %v5141 = vpack.c.b16 %v4309, %v4301
    %v5142 = vpack.c.b16 %v4310, %v4302
    %v5143 = vpack.c.b16 %v4311, %v4303
    %v5144 = vpack.c.b16 %v4312, %v4304
    %v5145 = vpack.c.b16 %v4313, %v4305
    %v5146 = vpack.c.b16 %v4314, %v4306
    %v5147 = vpack.c.b16 %v4323, %v4315
    %v5148 = vpack.c.b16 %v4324, %v4316
    %v5149 = vpack.c.b16 %v4325, %v4317
    %v5150 = vpack.c.b16 %v4326, %v4318
    %v5151 = vpack.c.b16 %v4327, %v4319
    %v5152 = vpack.c.b16 %v4328, %v4320
    %v5153 = vpack.c.b16 %v4329, %v4321
    %v5154 = vpack.c.b16 %v4330, %v4322
    %v5155 = vpack.c.b16 %v4339, %v4331
    %v5156 = vpack.c.b16 %v4340, %v4332
    %v5157 = vpack.c.b16 %v4341, %v4333
    %v5158 = vpack.c.b16 %v4342, %v4334
    %v5159 = vpack.c.b16 %v4343, %v4335
    %v5160 = vpack.c.b16 %v4344, %v4336
    %v5161 = vpack.c.b16 %v4345, %v4337
    %v5162 = vpack.c.b16 %v4346, %v4338
    %v5163 = vpack.c.b16 %v4355, %v4347
    %v5164 = vpack.c.b16 %v4356, %v4348
    %v5165 = vpack.c.b16 %v4357, %v4349
    %v5166 = vpack.c.b16 %v4358, %v4350
    %v5167 = vpack.c.b16 %v4359, %v4351
    %v5168 = vpack.c.b16 %v4360, %v4352
    %v5169 = vpack.c.b16 %v4361, %v4353
    %v5170 = vpack.c.b16 %v4362, %v4354
    %v5171 = vpack.c.b16 %v4371, %v4363
    %v5172 = vpack.c.b16 %v4372, %v4364
    %v5173 = vpack.c.b16 %v4373, %v4365
    %v5174 = vpack.c.b16 %v4374, %v4366
    %v5175 = vpack.c.b16 %v4375, %v4367
    %v5176 = vpack.c.b16 %v4376, %v4368
    %v5177 = vpack.c.b16 %v4377, %v4369
    %v5178 = vpack.c.b16 %v4378, %v4370
    %v5179 = vpack.c.b16 %v4387, %v4379
    %v5180 = vpack.c.b16 %v4388, %v4380
    %v5181 = vpack.c.b16 %v4389, %v4381
    %v5182 = vpack.c.b16 %v4390, %v4382
    %v5183 = vpack.c.b16 %v4391, %v4383
    %v5184 = vpack.c.b16 %v4392, %v4384
    %v5185 = vpack.c.b16 %v4393, %v4385
    %v5186 = vpack.c.b16 %v4394, %v4386
    %v5187 = vpack.c.b16 %v4403, %v4395
    %v5188 = vpack.c.b16 %v4404, %v4396
    %v5189 = vpack.c.b16 %v4405, %v4397
    %v5190 = vpack.c.b16 %v4406, %v4398
    %v5191 = vpack.c.b16 %v4407, %v4399
    %v5192 = vpack.c.b16 %v4408, %v4400
    %v5193 = vpack.c.b16 %v4409, %v4401
    %v5194 = vpack.c.b16 %v4410, %v4402
    %v5195 = vpack.c.b16 %v4419, %v4411
    %v5196 = vpack.c.b16 %v4420, %v4412
    %v5197 = vpack.c.b16 %v4421, %v4413
    %v5198 = vpack.c.b16 %v4422, %v4414
    %v5199 = vpack.c.b16 %v4423, %v4415
    %v5200 = vpack.c.b16 %v4424, %v4416
    %v5201 = vpack.c.b16 %v4425, %v4417
    %v5202 = vpack.c.b16 %v4426, %v4418
    %v5203 = vpack.c.b16 %v4435, %v4427
    %v5204 = vpack.c.b16 %v4436, %v4428
    %v5205 = vpack.c.b16 %v4437, %v4429
    %v5206 = vpack.c.b16 %v4438, %v4430
    %v5207 = vpack.c.b16 %v4439, %v4431
    %v5208 = vpack.c.b16 %v4440, %v4432
    %v5209 = vpack.c.b16 %v4441, %v4433
    %v5210 = vpack.c.b16 %v4442, %v4434
    %v5211 = vpack.c.b16 %v4451, %v4443
    %v5212 = vpack.c.b16 %v4452, %v4444
    %v5213 = vpack.c.b16 %v4453, %v4445
    %v5214 = vpack.c.b16 %v4454, %v4446
    %v5215 = vpack.c.b16 %v4455, %v4447
    %v5216 = vpack.c.b16 %v4456, %v4448
    %v5217 = vpack.c.b16 %v4457, %v4449
    %v5218 = vpack.c.b16 %v4458, %v4450
    %v5219 = vpack.c.b16 %v4467, %v4459
    %v5220 = vpack.c.b16 %v4468, %v4460
    %v5221 = vpack.c.b16 %v4469, %v4461
    %v5222 = vpack.c.b16 %v4470, %v4462
    %v5223 = vpack.c.b16 %v4471, %v4463
    %v5224 = vpack.c.b16 %v4472, %v4464
    %v5225 = vpack.c.b16 %v4473, %v4465
    %v5226 = vpack.c.b16 %v4474, %v4466
    %v5227 = vpack.c.b16 %v4483, %v4475
    %v5228 = vpack.c.b16 %v4484, %v4476
    %v5229 = vpack.c.b16 %v4485, %v4477
    %v5230 = vpack.c.b16 %v4486, %v4478
    %v5231 = vpack.c.b16 %v4487, %v4479
    %v5232 = vpack.c.b16 %v4488, %v4480
    %v5233 = vpack.c.b16 %v4489, %v4481
    %v5234 = vpack.c.b16 %v4490, %v4482
    %v5235 = vpack.c.b16 %v4499, %v4491
    %v5236 = vpack.c.b16 %v4500, %v4492
    %v5237 = vpack.c.b16 %v4501, %v4493
    %v5238 = vpack.c.b16 %v4502, %v4494
    %v5239 = vpack.c.b16 %v4503, %v4495
    %v5240 = vpack.c.b16 %v4504, %v4496
    %v5241 = vpack.c.b16 %v4505, %v4497
    %v5242 = vpack.c.b16 %v4506, %v4498
    %v5243 = vpack.c.b16 %v4515, %v4507
    %v5244 = vpack.c.b16 %v4516, %v4508
    %v5245 = vpack.c.b16 %v4517, %v4509
    %v5246 = vpack.c.b16 %v4518, %v4510
    %v5247 = vpack.c.b16 %v4519, %v4511
    %v5248 = vpack.c.b16 %v4520, %v4512
    %v5249 = vpack.c.b16 %v4521, %v4513
    %v5250 = vpack.c.b16 %v4522, %v4514
    %v5251 = vpack.c.b16 %v4531, %v4523
    %v5252 = vpack.c.b16 %v4532, %v4524
    %v5253 = vpack.c.b16 %v4533, %v4525
    %v5254 = vpack.c.b16 %v4534, %v4526
    %v5255 = vpack.c.b16 %v4535, %v4527
    %v5256 = vpack.c.b16 %v4536, %v4528
    %v5257 = vpack.c.b16 %v4537, %v4529
    %v5258 = vpack.c.b16 %v4538, %v4530
    %v5259 = vpack.c.b16 %v4547, %v4539
    %v5260 = vpack.c.b16 %v4548, %v4540
    %v5261 = vpack.c.b16 %v4549, %v4541
    %v5262 = vpack.c.b16 %v4550, %v4542
    %v5263 = vpack.c.b16 %v4551, %v4543
    %v5264 = vpack.c.b16 %v4552, %v4544
    %v5265 = vpack.c.b16 %v4553, %v4545
    %v5266 = vpack.c.b16 %v4554, %v4546
    %v5267 = vpack.c.b16 %v4563, %v4555
    %v5268 = vpack.c.b16 %v4564, %v4556
    %v5269 = vpack.c.b16 %v4565, %v4557
    %v5270 = vpack.c.b16 %v4566, %v4558
    %v5271 = vpack.c.b16 %v4567, %v4559
    %v5272 = vpack.c.b16 %v4568, %v4560
    %v5273 = vpack.c.b16 %v4569, %v4561
    %v5274 = vpack.c.b16 %v4570, %v4562
    %v5275 = vpack.c.b16 %v4579, %v4571
    %v5276 = vpack.c.b16 %v4580, %v4572
    %v5277 = vpack.c.b16 %v4581, %v4573
    %v5278 = vpack.c.b16 %v4582, %v4574
    %v5279 = vpack.c.b16 %v4583, %v4575
    %v5280 = vpack.c.b16 %v4584, %v4576
    %v5281 = vpack.c.b16 %v4585, %v4577
    %v5282 = vpack.c.b16 %v4586, %v4578
    %v5283 = vpack.c.b16 %v4595, %v4587
    %v5284 = vpack.c.b16 %v4596, %v4588
    %v5285 = vpack.c.b16 %v4597, %v4589
    %v5286 = vpack.c.b16 %v4598, %v4590
    %v5287 = vpack.c.b16 %v4599, %v4591
    %v5288 = vpack.c.b16 %v4600, %v4592
    %v5289 = vpack.c.b16 %v4601, %v4593
    %v5290 = vpack.c.b16 %v4602, %v4594
    %v5291 = vpack.c.b16 %v4611, %v4603
    %v5292 = vpack.c.b16 %v4612, %v4604
    %v5293 = vpack.c.b16 %v4613, %v4605
    %v5294 = vpack.c.b16 %v4614, %v4606
    %v5295 = vpack.c.b16 %v4615, %v4607
    %v5296 = vpack.c.b16 %v4616, %v4608
    %v5297 = vpack.c.b16 %v4617, %v4609
    %v5298 = vpack.c.b16 %v4618, %v4610
    %v5299 = vpack.c.b16 %v4627, %v4619
    %v5300 = vpack.c.b16 %v4628, %v4620
    %v5301 = vpack.c.b16 %v4629, %v4621
    %v5302 = vpack.c.b16 %v4630, %v4622
    %v5303 = vpack.c.b16 %v4631, %v4623
    %v5304 = vpack.c.b16 %v4632, %v4624
    %v5305 = vpack.c.b16 %v4633, %v4625
    %v5306 = vpack.c.b16 %v4634, %v4626
    %v5307 = vpack.c.b16 %v4643, %v4635
    %v5308 = vpack.c.b16 %v4644, %v4636
    %v5309 = vpack.c.b16 %v4645, %v4637
    %v5310 = vpack.c.b16 %v4646, %v4638
    %v5311 = vpack.c.b16 %v4647, %v4639
    %v5312 = vpack.c.b16 %v4648, %v4640
    %v5313 = vpack.c.b16 %v4649, %v4641
    %v5314 = vpack.c.b16 %v4650, %v4642
    %v5315 = vpack.c.b16 %v4659, %v4651
    %v5316 = vpack.c.b16 %v4660, %v4652
    %v5317 = vpack.c.b16 %v4661, %v4653
    %v5318 = vpack.c.b16 %v4662, %v4654
    %v5319 = vpack.c.b16 %v4663, %v4655
    %v5320 = vpack.c.b16 %v4664, %v4656
    %v5321 = vpack.c.b16 %v4665, %v4657
    %v5322 = vpack.c.b16 %v4666, %v4658
    %v5323 = vpack.c.b16 %v4675, %v4667
    %v5324 = vpack.c.b16 %v4676, %v4668
    %v5325 = vpack.c.b16 %v4677, %v4669
    %v5326 = vpack.c.b16 %v4678, %v4670
    %v5327 = vpack.c.b16 %v4679, %v4671
    %v5328 = vpack.c.b16 %v4680, %v4672
    %v5329 = vpack.c.b16 %v4681, %v4673
    %v5330 = vpack.c.b16 %v4682, %v4674
    %v5331 = vpack.c.b16 %v4691, %v4683
    %v5332 = vpack.c.b16 %v4692, %v4684
    %v5333 = vpack.c.b16 %v4693, %v4685
    %v5334 = vpack.c.b16 %v4694, %v4686
    %v5335 = vpack.c.b16 %v4695, %v4687
    %v5336 = vpack.c.b16 %v4696, %v4688
    %v5337 = vpack.c.b16 %v4697, %v4689
    %v5338 = vpack.c.b16 %v4698, %v4690
    %v5339 = vpack.c.b16 %v4707, %v4699
    %v5340 = vpack.c.b16 %v4708, %v4700
    %v5341 = vpack.c.b16 %v4709, %v4701
    %v5342 = vpack.c.b16 %v4710, %v4702
    %v5343 = vpack.c.b16 %v4711, %v4703
    %v5344 = vpack.c.b16 %v4712, %v4704
    %v5345 = vpack.c.b16 %v4713, %v4705
    %v5346 = vpack.c.b16 %v4714, %v4706
    %v5347 = vpack.c.b16 %v4723, %v4715
    %v5348 = vpack.c.b16 %v4724, %v4716
    %v5349 = vpack.c.b16 %v4725, %v4717
    %v5350 = vpack.c.b16 %v4726, %v4718
    %v5351 = vpack.c.b16 %v4727, %v4719
    %v5352 = vpack.c.b16 %v4728, %v4720
    %v5353 = vpack.c.b16 %v4729, %v4721
    %v5354 = vpack.c.b16 %v4730, %v4722
    %v5355 = vpack.c.b16 %v4739, %v4731
    %v5356 = vpack.c.b16 %v4740, %v4732
    %v5357 = vpack.c.b16 %v4741, %v4733
    %v5358 = vpack.c.b16 %v4742, %v4734
    %v5359 = vpack.c.b16 %v4743, %v4735
    %v5360 = vpack.c.b16 %v4744, %v4736
    %v5361 = vpack.c.b16 %v4745, %v4737
    %v5362 = vpack.c.b16 %v4746, %v4738
    %v5363 = vpack.c.b16 %v4755, %v4747
    %v5364 = vpack.c.b16 %v4756, %v4748
    %v5365 = vpack.c.b16 %v4757, %v4749
    %v5366 = vpack.c.b16 %v4758, %v4750
    %v5367 = vpack.c.b16 %v4759, %v4751
    %v5368 = vpack.c.b16 %v4760, %v4752
    %v5369 = vpack.c.b16 %v4761, %v4753
    %v5370 = vpack.c.b16 %v4762, %v4754
    %v5371 = vpack.c.b16 %v4771, %v4763
    %v5372 = vpack.c.b16 %v4772, %v4764
    %v5373 = vpack.c.b16 %v4773, %v4765
    %v5374 = vpack.c.b16 %v4774, %v4766
    %v5375 = vpack.c.b16 %v4775, %v4767
    %v5376 = vpack.c.b16 %v4776, %v4768
    %v5377 = vpack.c.b16 %v4777, %v4769
    %v5378 = vpack.c.b16 %v4778, %v4770
    %v5379 = vpack.c.b16 %v4787, %v4779
    %v5380 = vpack.c.b16 %v4788, %v4780
    %v5381 = vpack.c.b16 %v4789, %v4781
    %v5382 = vpack.c.b16 %v4790, %v4782
    %v5383 = vpack.c.b16 %v4791, %v4783
    %v5384 = vpack.c.b16 %v4792, %v4784
    %v5385 = vpack.c.b16 %v4793, %v4785
    %v5386 = vpack.c.b16 %v4794, %v4786
    %v5387 = vpack.c.b16 %v4803, %v4795
    %v5388 = vpack.c.b16 %v4804, %v4796
    %v5389 = vpack.c.b16 %v4805, %v4797
    %v5390 = vpack.c.b16 %v4806, %v4798
    %v5391 = vpack.c.b16 %v4807, %v4799
    %v5392 = vpack.c.b16 %v4808, %v4800
    %v5393 = vpack.c.b16 %v4809, %v4801
    %v5394 = vpack.c.b16 %v4810, %v4802
    %v5395 = vpack.c.b16 %v4819, %v4811
    %v5396 = vpack.c.b16 %v4820, %v4812
    %v5397 = vpack.c.b16 %v4821, %v4813
    %v5398 = vpack.c.b16 %v4822, %v4814
    %v5399 = vpack.c.b16 %v4823, %v4815
    %v5400 = vpack.c.b16 %v4824, %v4816
    %v5401 = vpack.c.b16 %v4825, %v4817
    %v5402 = vpack.c.b16 %v4826, %v4818
    %v5403 = vpack.c.b16 %v4835, %v4827
    %v5404 = vpack.c.b16 %v4836, %v4828
    %v5405 = vpack.c.b16 %v4837, %v4829
    %v5406 = vpack.c.b16 %v4838, %v4830
    %v5407 = vpack.c.b16 %v4839, %v4831
    %v5408 = vpack.c.b16 %v4840, %v4832
    %v5409 = vpack.c.b16 %v4841, %v4833
    %v5410 = vpack.c.b16 %v4842, %v4834
    %v5411 = vpack.c.b16 %v4851, %v4843
    %v5412 = vpack.c.b16 %v4852, %v4844
    %v5413 = vpack.c.b16 %v4853, %v4845
    %v5414 = vpack.c.b16 %v4854, %v4846
    %v5415 = vpack.c.b16 %v4855, %v4847
    %v5416 = vpack.c.b16 %v4856, %v4848
    %v5417 = vpack.c.b16 %v4857, %v4849
    %v5418 = vpack.c.b16 %v4858, %v4850
    %v5419 = vpack.c.b16 %v4867, %v4859
    %v5420 = vpack.c.b16 %v4868, %v4860
    %v5421 = vpack.c.b16 %v4869, %v4861
    %v5422 = vpack.c.b16 %v4870, %v4862
    %v5423 = vpack.c.b16 %v4871, %v4863
    %v5424 = vpack.c.b16 %v4872, %v4864
    %v5425 = vpack.c.b16 %v4873, %v4865
    %v5426 = vpack.c.b16 %v4874, %v4866
    %v5427 = vpack.c.b16 %v4883, %v4875
    %v5428 = vpack.c.b16 %v4884, %v4876
    %v5429 = vpack.c.b16 %v4885, %v4877
    %v5430 = vpack.c.b16 %v4886, %v4878
    %v5431 = vpack.c.b16 %v4887, %v4879
    %v5432 = vpack.c.b16 %v4888, %v4880
    %v5433 = vpack.c.b16 %v4889, %v4881
    %v5434 = vpack.c.b16 %v4890, %v4882
    %v5435 = vpack.c.b16 %v4899, %v4891
    %v5436 = vpack.c.b16 %v4900, %v4892
    %v5437 = vpack.c.b16 %v4901, %v4893
    %v5438 = vpack.c.b16 %v4902, %v4894
    %v5439 = vpack.c.b16 %v4903, %v4895
    %v5440 = vpack.c.b16 %v4904, %v4896
    %v5441 = vpack.c.b16 %v4905, %v4897
    %v5442 = vpack.c.b16 %v4906, %v4898
    %v5443 = vpack.c.b16 %v4915, %v4907
    %v5444 = vpack.c.b16 %v4916, %v4908
    %v5445 = vpack.c.b16 %v4917, %v4909
    %v5446 = vpack.c.b16 %v4918, %v4910
    %v5447 = vpack.c.b16 %v4919, %v4911
    %v5448 = vpack.c.b16 %v4920, %v4912
    %v5449 = vpack.c.b16 %v4921, %v4913
    %v5450 = vpack.c.b16 %v4922, %v4914
    %v5451 = vpack.c.b16 %v4931, %v4923
    %v5452 = vpack.c.b16 %v4932, %v4924
    %v5453 = vpack.c.b16 %v4933, %v4925
    %v5454 = vpack.c.b16 %v4934, %v4926
    %v5455 = vpack.c.b16 %v4935, %v4927
    %v5456 = vpack.c.b16 %v4936, %v4928
    %v5457 = vpack.c.b16 %v4937, %v4929
    %v5458 = vpack.c.b16 %v4938, %v4930
    %v5459 = vpack.c.b16 %v4947, %v4939
    %v5460 = vpack.c.b16 %v4948, %v4940
    %v5461 = vpack.c.b16 %v4949, %v4941
    %v5462 = vpack.c.b16 %v4950, %v4942
    %v5463 = vpack.c.b16 %v4951, %v4943
    %v5464 = vpack.c.b16 %v4952, %v4944
    %v5465 = vpack.c.b16 %v4953, %v4945
    %v5466 = vpack.c.b16 %v4954, %v4946
    %5979 = vmatprep.subr.bf16.mxu0 %v4956
    %5980 = vmatpush1.bf16.msra.mxu0 %v4955
    %5981 = vmatprep.subr.bf16.mxu0 %v4964
    %5982 = vmatpush1.bf16.msra.mxu0 %v4963
    %5983 = vmatprep.subr.bf16.mxu0 %v4972
    %5984 = vmatpush1.bf16.msra.mxu0 %v4971
    %5985 = vmatprep.subr.bf16.mxu0 %v4980
    %5986 = vmatpush1.bf16.msra.mxu0 %v4979
    %5987 = vmatprep.subr.bf16.mxu0 %v4988
    %5988 = vmatpush1.bf16.msra.mxu0 %v4987
    %5989 = vmatprep.subr.bf16.mxu0 %v4996
    %5990 = vmatpush1.bf16.msra.mxu0 %v4995
    %5991 = vmatprep.subr.bf16.mxu0 %v5004
    %5992 = vmatpush1.bf16.msra.mxu0 %v5003
    %5993 = vmatprep.subr.bf16.mxu0 %v5012
    %5994 = vmatpush1.bf16.msra.mxu0 %v5011
    %5995 = vmatprep.subr.bf16.mxu0 %v5020
    %5996 = vmatpush1.bf16.msra.mxu0 %v5019
    %5997 = vmatprep.subr.bf16.mxu0 %v5028
    %5998 = vmatpush1.bf16.msra.mxu0 %v5027
    %5999 = vmatprep.subr.bf16.mxu0 %v5036
    %6000 = vmatpush1.bf16.msra.mxu0 %v5035
    %6001 = vmatprep.subr.bf16.mxu0 %v5044
    %6002 = vmatpush1.bf16.msra.mxu0 %v5043
    %6003 = vmatprep.subr.bf16.mxu0 %v5052
    %6004 = vmatpush1.bf16.msra.mxu0 %v5051
    %6005 = vmatprep.subr.bf16.mxu0 %v5060
    %6006 = vmatpush1.bf16.msra.mxu0 %v5059
    %6007 = vmatprep.subr.bf16.mxu0 %v5068
    %6008 = vmatpush1.bf16.msra.mxu0 %v5067
    %6009 = vmatprep.subr.bf16.mxu0 %v5076
    %6010 = vmatpush1.bf16.msra.mxu0 %v5075
    %6011 = vmatprep.mubr.bf16.mxu0 %v2858
    %6012 = vmatmul.mubr.bf16.gmra.mrb[0].mxu0 %v2857
    %v6013 = vpop.f32.mrb[0].mxu0
    %v6014 = vadd.f32 %v3382, %v6013
    %v6015 = vpop.f32.mrb[0].mxu0
    %v6016 = vadd.f32 %v3386, %v6015
    %v6017 = vpop.f32.mrb[0].mxu0
    %v6018 = vpop.f32.mrb[0].mxu0
    %6019 = vdwg.mxu0
    %6020 = vmatprep.subr.bf16.mxu0 %v5084
    %6021 = vmatpush1.bf16.msra.mxu0 %v5083
    %6022 = vmatprep.subr.bf16.mxu0 %v5092
    %6023 = vmatpush1.bf16.msra.mxu0 %v5091
    %6024 = vmatprep.subr.bf16.mxu0 %v5100
    %6025 = vmatpush1.bf16.msra.mxu0 %v5099
    %6026 = vmatprep.subr.bf16.mxu0 %v5108
    %6027 = vmatpush1.bf16.msra.mxu0 %v5107
    %6028 = vmatprep.subr.bf16.mxu0 %v5116
    %6029 = vmatpush1.bf16.msra.mxu0 %v5115
    %6030 = vmatprep.subr.bf16.mxu0 %v5124
    %6031 = vmatpush1.bf16.msra.mxu0 %v5123
    %6032 = vmatprep.subr.bf16.mxu0 %v5132
    %6033 = vmatpush1.bf16.msra.mxu0 %v5131
    %6034 = vmatprep.subr.bf16.mxu0 %v5140
    %6035 = vmatpush1.bf16.msra.mxu0 %v5139
    %6036 = vmatprep.subr.bf16.mxu0 %v5148
    %6037 = vmatpush1.bf16.msra.mxu0 %v5147
    %6038 = vmatprep.subr.bf16.mxu0 %v5156
    %6039 = vmatpush1.bf16.msra.mxu0 %v5155
    %6040 = vmatprep.subr.bf16.mxu0 %v5164
    %6041 = vmatpush1.bf16.msra.mxu0 %v5163
    %6042 = vmatprep.subr.bf16.mxu0 %v5172
    %6043 = vmatpush1.bf16.msra.mxu0 %v5171
    %6044 = vmatprep.subr.bf16.mxu0 %v5180
    %6045 = vmatpush1.bf16.msra.mxu0 %v5179
    %6046 = vmatprep.subr.bf16.mxu0 %v5188
    %6047 = vmatpush1.bf16.msra.mxu0 %v5187
    %6048 = vmatprep.subr.bf16.mxu0 %v5196
    %6049 = vmatpush1.bf16.msra.mxu0 %v5195
    %6050 = vmatprep.subr.bf16.mxu0 %v5204
    %6051 = vmatpush1.bf16.msra.mxu0 %v5203
    %6052 = vmatprep.mubr.bf16.mxu0 %v2860
    %6053 = vmatmul.mubr.bf16.gmra.mrb[0].mxu0 %v2859
    %v6054 = vpop.f32.mrb[0].mxu0
    %v6055 = vadd.f32 %v6014, %v6054
    %v6056 = vpop.f32.mrb[0].mxu0
    %v6057 = vadd.f32 %v6016, %v6056
    %v6058 = vpop.f32.mrb[0].mxu0
    %v6059 = vpop.f32.mrb[0].mxu0
    %6060 = vdwg.mxu0
    %6061 = vmatprep.subr.bf16.mxu0 %v5212
    %6062 = vmatpush1.bf16.msra.mxu0 %v5211
    %6063 = vmatprep.subr.bf16.mxu0 %v5220
    %6064 = vmatpush1.bf16.msra.mxu0 %v5219
    %6065 = vmatprep.subr.bf16.mxu0 %v5228
    %6066 = vmatpush1.bf16.msra.mxu0 %v5227
    %6067 = vmatprep.subr.bf16.mxu0 %v5236
    %6068 = vmatpush1.bf16.msra.mxu0 %v5235
    %6069 = vmatprep.subr.bf16.mxu0 %v5244
    %6070 = vmatpush1.bf16.msra.mxu0 %v5243
    %6071 = vmatprep.subr.bf16.mxu0 %v5252
    %6072 = vmatpush1.bf16.msra.mxu0 %v5251
    %6073 = vmatprep.subr.bf16.mxu0 %v5260
    %6074 = vmatpush1.bf16.msra.mxu0 %v5259
    %6075 = vmatprep.subr.bf16.mxu0 %v5268
    %6076 = vmatpush1.bf16.msra.mxu0 %v5267
    %6077 = vmatprep.subr.bf16.mxu0 %v5276
    %6078 = vmatpush1.bf16.msra.mxu0 %v5275
    %6079 = vmatprep.subr.bf16.mxu0 %v5284
    %6080 = vmatpush1.bf16.msra.mxu0 %v5283
    %6081 = vmatprep.subr.bf16.mxu0 %v5292
    %6082 = vmatpush1.bf16.msra.mxu0 %v5291
    %6083 = vmatprep.subr.bf16.mxu0 %v5300
    %6084 = vmatpush1.bf16.msra.mxu0 %v5299
    %6085 = vmatprep.subr.bf16.mxu0 %v5308
    %6086 = vmatpush1.bf16.msra.mxu0 %v5307
    %6087 = vmatprep.subr.bf16.mxu0 %v5316
    %6088 = vmatpush1.bf16.msra.mxu0 %v5315
    %6089 = vmatprep.subr.bf16.mxu0 %v5324
    %6090 = vmatpush1.bf16.msra.mxu0 %v5323
    %6091 = vmatprep.subr.bf16.mxu0 %v5332
    %6092 = vmatpush1.bf16.msra.mxu0 %v5331
    %6093 = vmatprep.mubr.bf16.mxu0 %v2862
    %6094 = vmatmul.mubr.bf16.gmra.mrb[0].mxu0 %v2861
    %v6095 = vpop.f32.mrb[0].mxu0
    %v6096 = vadd.f32 %v6055, %v6095
    %v6097 = vpop.f32.mrb[0].mxu0
    %v6098 = vadd.f32 %v6057, %v6097
    %v6099 = vpop.f32.mrb[0].mxu0
    %v6100 = vpop.f32.mrb[0].mxu0
    %6101 = vdwg.mxu0
    %6102 = vmatprep.subr.bf16.mxu0 %v5340
    %6103 = vmatpush1.bf16.msra.mxu0 %v5339
    %6104 = vmatprep.subr.bf16.mxu0 %v5348
    %6105 = vmatpush1.bf16.msra.mxu0 %v5347
    %6106 = vmatprep.subr.bf16.mxu0 %v5356
    %6107 = vmatpush1.bf16.msra.mxu0 %v5355
    %6108 = vmatprep.subr.bf16.mxu0 %v5364
    %6109 = vmatpush1.bf16.msra.mxu0 %v5363
    %6110 = vmatprep.subr.bf16.mxu0 %v5372
    %6111 = vmatpush1.bf16.msra.mxu0 %v5371
    %6112 = vmatprep.subr.bf16.mxu0 %v5380
    %6113 = vmatpush1.bf16.msra.mxu0 %v5379
    %6114 = vmatprep.subr.bf16.mxu0 %v5388
    %6115 = vmatpush1.bf16.msra.mxu0 %v5387
    %6116 = vmatprep.subr.bf16.mxu0 %v5396
    %6117 = vmatpush1.bf16.msra.mxu0 %v5395
    %6118 = vmatprep.subr.bf16.mxu0 %v5404
    %6119 = vmatpush1.bf16.msra.mxu0 %v5403
    %6120 = vmatprep.subr.bf16.mxu0 %v5412
    %6121 = vmatpush1.bf16.msra.mxu0 %v5411
    %6122 = vmatprep.subr.bf16.mxu0 %v5420
    %6123 = vmatpush1.bf16.msra.mxu0 %v5419
    %6124 = vmatprep.subr.bf16.mxu0 %v5428
    %6125 = vmatpush1.bf16.msra.mxu0 %v5427
    %6126 = vmatprep.subr.bf16.mxu0 %v5436
    %6127 = vmatpush1.bf16.msra.mxu0 %v5435
    %6128 = vmatprep.subr.bf16.mxu0 %v5444
    %6129 = vmatpush1.bf16.msra.mxu0 %v5443
    %6130 = vmatprep.subr.bf16.mxu0 %v5452
    %6131 = vmatpush1.bf16.msra.mxu0 %v5451
    %6132 = vmatprep.subr.bf16.mxu0 %v5460
    %6133 = vmatpush1.bf16.msra.mxu0 %v5459
    %6134 = vmatprep.mubr.bf16.mxu0 %v2864
    %6135 = vmatmul.mubr.bf16.gmra.mrb[0].mxu0 %v2863
    %v6136 = vpop.f32.mrb[0].mxu0
    %v6137 = vadd.f32 %v6096, %v6136
    %v6138 = vpop.f32.mrb[0].mxu0
    %v6139 = vadd.f32 %v6098, %v6138
    %v6140 = vpop.f32.mrb[0].mxu0
    %v6141 = vpop.f32.mrb[0].mxu0
    %6142 = vdwg.mxu0
    %6143 = vmatprep.subr.bf16.mxu0 %v4958
    %6144 = vmatpush1.bf16.msra.mxu0 %v4957
    %6145 = vmatprep.subr.bf16.mxu0 %v4966
    %6146 = vmatpush1.bf16.msra.mxu0 %v4965
    %6147 = vmatprep.subr.bf16.mxu0 %v4974
    %6148 = vmatpush1.bf16.msra.mxu0 %v4973
    %6149 = vmatprep.subr.bf16.mxu0 %v4982
    %6150 = vmatpush1.bf16.msra.mxu0 %v4981
    %6151 = vmatprep.subr.bf16.mxu0 %v4990
    %6152 = vmatpush1.bf16.msra.mxu0 %v4989
    %6153 = vmatprep.subr.bf16.mxu0 %v4998
    %6154 = vmatpush1.bf16.msra.mxu0 %v4997
    %6155 = vmatprep.subr.bf16.mxu0 %v5006
    %6156 = vmatpush1.bf16.msra.mxu0 %v5005
    %6157 = vmatprep.subr.bf16.mxu0 %v5014
    %6158 = vmatpush1.bf16.msra.mxu0 %v5013
    %6159 = vmatprep.subr.bf16.mxu0 %v5022
    %6160 = vmatpush1.bf16.msra.mxu0 %v5021
    %6161 = vmatprep.subr.bf16.mxu0 %v5030
    %6162 = vmatpush1.bf16.msra.mxu0 %v5029
    %6163 = vmatprep.subr.bf16.mxu0 %v5038
    %6164 = vmatpush1.bf16.msra.mxu0 %v5037
    %6165 = vmatprep.subr.bf16.mxu0 %v5046
    %6166 = vmatpush1.bf16.msra.mxu0 %v5045
    %6167 = vmatprep.subr.bf16.mxu0 %v5054
    %6168 = vmatpush1.bf16.msra.mxu0 %v5053
    %6169 = vmatprep.subr.bf16.mxu0 %v5062
    %6170 = vmatpush1.bf16.msra.mxu0 %v5061
    %6171 = vmatprep.subr.bf16.mxu0 %v5070
    %6172 = vmatpush1.bf16.msra.mxu0 %v5069
    %6173 = vmatprep.subr.bf16.mxu0 %v5078
    %6174 = vmatpush1.bf16.msra.mxu0 %v5077
    %6175 = vmatprep.mubr.bf16.mxu0 %v2858
    %6176 = vmatmul.mubr.bf16.gmra.mrb[0].mxu0 %v2857
    %v6177 = vpop.f32.mrb[0].mxu0
    %v6178 = vadd.f32 %v3390, %v6177
    %v6179 = vpop.f32.mrb[0].mxu0
    %v6180 = vadd.f32 %v3394, %v6179
    %v6181 = vpop.f32.mrb[0].mxu0
    %v6182 = vpop.f32.mrb[0].mxu0
    %6183 = vdwg.mxu0
    %6184 = vmatprep.subr.bf16.mxu0 %v5086
    %6185 = vmatpush1.bf16.msra.mxu0 %v5085
    %6186 = vmatprep.subr.bf16.mxu0 %v5094
    %6187 = vmatpush1.bf16.msra.mxu0 %v5093
    %6188 = vmatprep.subr.bf16.mxu0 %v5102
    %6189 = vmatpush1.bf16.msra.mxu0 %v5101
    %6190 = vmatprep.subr.bf16.mxu0 %v5110
    %6191 = vmatpush1.bf16.msra.mxu0 %v5109
    %6192 = vmatprep.subr.bf16.mxu0 %v5118
    %6193 = vmatpush1.bf16.msra.mxu0 %v5117
    %6194 = vmatprep.subr.bf16.mxu0 %v5126
    %6195 = vmatpush1.bf16.msra.mxu0 %v5125
    %6196 = vmatprep.subr.bf16.mxu0 %v5134
    %6197 = vmatpush1.bf16.msra.mxu0 %v5133
    %6198 = vmatprep.subr.bf16.mxu0 %v5142
    %6199 = vmatpush1.bf16.msra.mxu0 %v5141
    %6200 = vmatprep.subr.bf16.mxu0 %v5150
    %6201 = vmatpush1.bf16.msra.mxu0 %v5149
    %6202 = vmatprep.subr.bf16.mxu0 %v5158
    %6203 = vmatpush1.bf16.msra.mxu0 %v5157
    %6204 = vmatprep.subr.bf16.mxu0 %v5166
    %6205 = vmatpush1.bf16.msra.mxu0 %v5165
    %6206 = vmatprep.subr.bf16.mxu0 %v5174
    %6207 = vmatpush1.bf16.msra.mxu0 %v5173
    %6208 = vmatprep.subr.bf16.mxu0 %v5182
    %6209 = vmatpush1.bf16.msra.mxu0 %v5181
    %6210 = vmatprep.subr.bf16.mxu0 %v5190
    %6211 = vmatpush1.bf16.msra.mxu0 %v5189
    %6212 = vmatprep.subr.bf16.mxu0 %v5198
    %6213 = vmatpush1.bf16.msra.mxu0 %v5197
    %6214 = vmatprep.subr.bf16.mxu0 %v5206
    %6215 = vmatpush1.bf16.msra.mxu0 %v5205
    %6216 = vmatprep.mubr.bf16.mxu0 %v2860
    %6217 = vmatmul.mubr.bf16.gmra.mrb[0].mxu0 %v2859
    %v6218 = vpop.f32.mrb[0].mxu0
    %v6219 = vadd.f32 %v6178, %v6218
    %v6220 = vpop.f32.mrb[0].mxu0
    %v6221 = vadd.f32 %v6180, %v6220
    %v6222 = vpop.f32.mrb[0].mxu0
    %v6223 = vpop.f32.mrb[0].mxu0
    %6224 = vdwg.mxu0
    %6225 = vmatprep.subr.bf16.mxu0 %v5214
    %6226 = vmatpush1.bf16.msra.mxu0 %v5213
    %6227 = vmatprep.subr.bf16.mxu0 %v5222
    %6228 = vmatpush1.bf16.msra.mxu0 %v5221
    %6229 = vmatprep.subr.bf16.mxu0 %v5230
    %6230 = vmatpush1.bf16.msra.mxu0 %v5229
    %6231 = vmatprep.subr.bf16.mxu0 %v5238
    %6232 = vmatpush1.bf16.msra.mxu0 %v5237
    %6233 = vmatprep.subr.bf16.mxu0 %v5246
    %6234 = vmatpush1.bf16.msra.mxu0 %v5245
    %6235 = vmatprep.subr.bf16.mxu0 %v5254
    %6236 = vmatpush1.bf16.msra.mxu0 %v5253
    %6237 = vmatprep.subr.bf16.mxu0 %v5262
    %6238 = vmatpush1.bf16.msra.mxu0 %v5261
    %6239 = vmatprep.subr.bf16.mxu0 %v5270
    %6240 = vmatpush1.bf16.msra.mxu0 %v5269
    %6241 = vmatprep.subr.bf16.mxu0 %v5278
    %6242 = vmatpush1.bf16.msra.mxu0 %v5277
    %6243 = vmatprep.subr.bf16.mxu0 %v5286
    %6244 = vmatpush1.bf16.msra.mxu0 %v5285
    %6245 = vmatprep.subr.bf16.mxu0 %v5294
    %6246 = vmatpush1.bf16.msra.mxu0 %v5293
    %6247 = vmatprep.subr.bf16.mxu0 %v5302
    %6248 = vmatpush1.bf16.msra.mxu0 %v5301
    %6249 = vmatprep.subr.bf16.mxu0 %v5310
    %6250 = vmatpush1.bf16.msra.mxu0 %v5309
    %6251 = vmatprep.subr.bf16.mxu0 %v5318
    %6252 = vmatpush1.bf16.msra.mxu0 %v5317
    %6253 = vmatprep.subr.bf16.mxu0 %v5326
    %6254 = vmatpush1.bf16.msra.mxu0 %v5325
    %6255 = vmatprep.subr.bf16.mxu0 %v5334
    %6256 = vmatpush1.bf16.msra.mxu0 %v5333
    %6257 = vmatprep.mubr.bf16.mxu0 %v2862
    %6258 = vmatmul.mubr.bf16.gmra.mrb[0].mxu0 %v2861
    %v6259 = vpop.f32.mrb[0].mxu0
    %v6260 = vadd.f32 %v6219, %v6259
    %v6261 = vpop.f32.mrb[0].mxu0
    %v6262 = vadd.f32 %v6221, %v6261
    %v6263 = vpop.f32.mrb[0].mxu0
    %v6264 = vpop.f32.mrb[0].mxu0
    %6265 = vdwg.mxu0
    %6266 = vmatprep.subr.bf16.mxu0 %v5342
    %6267 = vmatpush1.bf16.msra.mxu0 %v5341
    %6268 = vmatprep.subr.bf16.mxu0 %v5350
    %6269 = vmatpush1.bf16.msra.mxu0 %v5349
    %6270 = vmatprep.subr.bf16.mxu0 %v5358
    %6271 = vmatpush1.bf16.msra.mxu0 %v5357
    %6272 = vmatprep.subr.bf16.mxu0 %v5366
    %6273 = vmatpush1.bf16.msra.mxu0 %v5365
    %6274 = vmatprep.subr.bf16.mxu0 %v5374
    %6275 = vmatpush1.bf16.msra.mxu0 %v5373
    %6276 = vmatprep.subr.bf16.mxu0 %v5382
    %6277 = vmatpush1.bf16.msra.mxu0 %v5381
    %6278 = vmatprep.subr.bf16.mxu0 %v5390
    %6279 = vmatpush1.bf16.msra.mxu0 %v5389
    %6280 = vmatprep.subr.bf16.mxu0 %v5398
    %6281 = vmatpush1.bf16.msra.mxu0 %v5397
    %6282 = vmatprep.subr.bf16.mxu0 %v5406
    %6283 = vmatpush1.bf16.msra.mxu0 %v5405
    %6284 = vmatprep.subr.bf16.mxu0 %v5414
    %6285 = vmatpush1.bf16.msra.mxu0 %v5413
    %6286 = vmatprep.subr.bf16.mxu0 %v5422
    %6287 = vmatpush1.bf16.msra.mxu0 %v5421
    %6288 = vmatprep.subr.bf16.mxu0 %v5430
    %6289 = vmatpush1.bf16.msra.mxu0 %v5429
    %6290 = vmatprep.subr.bf16.mxu0 %v5438
    %6291 = vmatpush1.bf16.msra.mxu0 %v5437
    %6292 = vmatprep.subr.bf16.mxu0 %v5446
    %6293 = vmatpush1.bf16.msra.mxu0 %v5445
    %6294 = vmatprep.subr.bf16.mxu0 %v5454
    %6295 = vmatpush1.bf16.msra.mxu0 %v5453
    %6296 = vmatprep.subr.bf16.mxu0 %v5462
    %6297 = vmatpush1.bf16.msra.mxu0 %v5461
    %6298 = vmatprep.mubr.bf16.mxu0 %v2864
    %6299 = vmatmul.mubr.bf16.gmra.mrb[0].mxu0 %v2863
    %v6300 = vpop.f32.mrb[0].mxu0
    %v6301 = vadd.f32 %v6260, %v6300
    %v6302 = vpop.f32.mrb[0].mxu0
    %v6303 = vadd.f32 %v6262, %v6302
    %v6304 = vpop.f32.mrb[0].mxu0
    %v6305 = vpop.f32.mrb[0].mxu0
    %6306 = vdwg.mxu0
    %6307 = vmatprep.subr.bf16.mxu0 %v4960
    %6308 = vmatpush1.bf16.msra.mxu0 %v4959
    %6309 = vmatprep.subr.bf16.mxu0 %v4968
    %6310 = vmatpush1.bf16.msra.mxu0 %v4967
    %6311 = vmatprep.subr.bf16.mxu0 %v4976
    %6312 = vmatpush1.bf16.msra.mxu0 %v4975
    %6313 = vmatprep.subr.bf16.mxu0 %v4984
    %6314 = vmatpush1.bf16.msra.mxu0 %v4983
    %6315 = vmatprep.subr.bf16.mxu0 %v4992
    %6316 = vmatpush1.bf16.msra.mxu0 %v4991
    %6317 = vmatprep.subr.bf16.mxu0 %v5000
    %6318 = vmatpush1.bf16.msra.mxu0 %v4999
    %6319 = vmatprep.subr.bf16.mxu0 %v5008
    %6320 = vmatpush1.bf16.msra.mxu0 %v5007
    %6321 = vmatprep.subr.bf16.mxu0 %v5016
    %6322 = vmatpush1.bf16.msra.mxu0 %v5015
    %6323 = vmatprep.subr.bf16.mxu0 %v5024
    %6324 = vmatpush1.bf16.msra.mxu0 %v5023
    %6325 = vmatprep.subr.bf16.mxu0 %v5032
    %6326 = vmatpush1.bf16.msra.mxu0 %v5031
    %6327 = vmatprep.subr.bf16.mxu0 %v5040
    %6328 = vmatpush1.bf16.msra.mxu0 %v5039
    %6329 = vmatprep.subr.bf16.mxu0 %v5048
    %6330 = vmatpush1.bf16.msra.mxu0 %v5047
    %6331 = vmatprep.subr.bf16.mxu0 %v5056
    %6332 = vmatpush1.bf16.msra.mxu0 %v5055
    %6333 = vmatprep.subr.bf16.mxu0 %v5064
    %6334 = vmatpush1.bf16.msra.mxu0 %v5063
    %6335 = vmatprep.subr.bf16.mxu0 %v5072
    %6336 = vmatpush1.bf16.msra.mxu0 %v5071
    %6337 = vmatprep.subr.bf16.mxu0 %v5080
    %6338 = vmatpush1.bf16.msra.mxu0 %v5079
    %6339 = vmatprep.mubr.bf16.mxu0 %v2858
    %6340 = vmatmul.mubr.bf16.gmra.mrb[0].mxu0 %v2857
    %v6341 = vpop.f32.mrb[0].mxu0
    %v6342 = vadd.f32 %v3398, %v6341
    %v6343 = vpop.f32.mrb[0].mxu0
    %v6344 = vadd.f32 %v3402, %v6343
    %v6345 = vpop.f32.mrb[0].mxu0
    %v6346 = vpop.f32.mrb[0].mxu0
    %6347 = vdwg.mxu0
    %6348 = vmatprep.subr.bf16.mxu0 %v5088
    %6349 = vmatpush1.bf16.msra.mxu0 %v5087
    %6350 = vmatprep.subr.bf16.mxu0 %v5096
    %6351 = vmatpush1.bf16.msra.mxu0 %v5095
    %6352 = vmatprep.subr.bf16.mxu0 %v5104
    %6353 = vmatpush1.bf16.msra.mxu0 %v5103
    %6354 = vmatprep.subr.bf16.mxu0 %v5112
    %6355 = vmatpush1.bf16.msra.mxu0 %v5111
    %6356 = vmatprep.subr.bf16.mxu0 %v5120
    %6357 = vmatpush1.bf16.msra.mxu0 %v5119
    %6358 = vmatprep.subr.bf16.mxu0 %v5128
    %6359 = vmatpush1.bf16.msra.mxu0 %v5127
    %6360 = vmatprep.subr.bf16.mxu0 %v5136
    %6361 = vmatpush1.bf16.msra.mxu0 %v5135
    %6362 = vmatprep.subr.bf16.mxu0 %v5144
    %6363 = vmatpush1.bf16.msra.mxu0 %v5143
    %6364 = vmatprep.subr.bf16.mxu0 %v5152
    %6365 = vmatpush1.bf16.msra.mxu0 %v5151
    %6366 = vmatprep.subr.bf16.mxu0 %v5160
    %6367 = vmatpush1.bf16.msra.mxu0 %v5159
    %6368 = vmatprep.subr.bf16.mxu0 %v5168
    %6369 = vmatpush1.bf16.msra.mxu0 %v5167
    %6370 = vmatprep.subr.bf16.mxu0 %v5176
    %6371 = vmatpush1.bf16.msra.mxu0 %v5175
    %6372 = vmatprep.subr.bf16.mxu0 %v5184
    %6373 = vmatpush1.bf16.msra.mxu0 %v5183
    %6374 = vmatprep.subr.bf16.mxu0 %v5192
    %6375 = vmatpush1.bf16.msra.mxu0 %v5191
    %6376 = vmatprep.subr.bf16.mxu0 %v5200
    %6377 = vmatpush1.bf16.msra.mxu0 %v5199
    %6378 = vmatprep.subr.bf16.mxu0 %v5208
    %6379 = vmatpush1.bf16.msra.mxu0 %v5207
    %6380 = vmatprep.mubr.bf16.mxu0 %v2860
    %6381 = vmatmul.mubr.bf16.gmra.mrb[0].mxu0 %v2859
    %v6382 = vpop.f32.mrb[0].mxu0
    %v6383 = vadd.f32 %v6342, %v6382
    %v6384 = vpop.f32.mrb[0].mxu0
    %v6385 = vadd.f32 %v6344, %v6384
    %v6386 = vpop.f32.mrb[0].mxu0
    %v6387 = vpop.f32.mrb[0].mxu0
    %6388 = vdwg.mxu0
    %6389 = vmatprep.subr.bf16.mxu0 %v5216
    %6390 = vmatpush1.bf16.msra.mxu0 %v5215
    %6391 = vmatprep.subr.bf16.mxu0 %v5224
    %6392 = vmatpush1.bf16.msra.mxu0 %v5223
    %6393 = vmatprep.subr.bf16.mxu0 %v5232
    %6394 = vmatpush1.bf16.msra.mxu0 %v5231
    %6395 = vmatprep.subr.bf16.mxu0 %v5240
    %6396 = vmatpush1.bf16.msra.mxu0 %v5239
    %6397 = vmatprep.subr.bf16.mxu0 %v5248
    %6398 = vmatpush1.bf16.msra.mxu0 %v5247
    %6399 = vmatprep.subr.bf16.mxu0 %v5256
    %6400 = vmatpush1.bf16.msra.mxu0 %v5255
    %6401 = vmatprep.subr.bf16.mxu0 %v5264
    %6402 = vmatpush1.bf16.msra.mxu0 %v5263
    %6403 = vmatprep.subr.bf16.mxu0 %v5272
    %6404 = vmatpush1.bf16.msra.mxu0 %v5271
    %6405 = vmatprep.subr.bf16.mxu0 %v5280
    %6406 = vmatpush1.bf16.msra.mxu0 %v5279
    %6407 = vmatprep.subr.bf16.mxu0 %v5288
    %6408 = vmatpush1.bf16.msra.mxu0 %v5287
    %6409 = vmatprep.subr.bf16.mxu0 %v5296
    %6410 = vmatpush1.bf16.msra.mxu0 %v5295
    %6411 = vmatprep.subr.bf16.mxu0 %v5304
    %6412 = vmatpush1.bf16.msra.mxu0 %v5303
    %6413 = vmatprep.subr.bf16.mxu0 %v5312
    %6414 = vmatpush1.bf16.msra.mxu0 %v5311
    %6415 = vmatprep.subr.bf16.mxu0 %v5320
    %6416 = vmatpush1.bf16.msra.mxu0 %v5319
    %6417 = vmatprep.subr.bf16.mxu0 %v5328
    %6418 = vmatpush1.bf16.msra.mxu0 %v5327
    %6419 = vmatprep.subr.bf16.mxu0 %v5336
    %6420 = vmatpush1.bf16.msra.mxu0 %v5335
    %6421 = vmatprep.mubr.bf16.mxu0 %v2862
    %6422 = vmatmul.mubr.bf16.gmra.mrb[0].mxu0 %v2861
    %v6423 = vpop.f32.mrb[0].mxu0
    %v6424 = vadd.f32 %v6383, %v6423
    %v6425 = vpop.f32.mrb[0].mxu0
    %v6426 = vadd.f32 %v6385, %v6425
    %v6427 = vpop.f32.mrb[0].mxu0
    %v6428 = vpop.f32.mrb[0].mxu0
    %6429 = vdwg.mxu0
    %6430 = vmatprep.subr.bf16.mxu0 %v5344
    %6431 = vmatpush1.bf16.msra.mxu0 %v5343
    %6432 = vmatprep.subr.bf16.mxu0 %v5352
    %6433 = vmatpush1.bf16.msra.mxu0 %v5351
    %6434 = vmatprep.subr.bf16.mxu0 %v5360
    %6435 = vmatpush1.bf16.msra.mxu0 %v5359
    %6436 = vmatprep.subr.bf16.mxu0 %v5368
    %6437 = vmatpush1.bf16.msra.mxu0 %v5367
    %6438 = vmatprep.subr.bf16.mxu0 %v5376
    %6439 = vmatpush1.bf16.msra.mxu0 %v5375
    %6440 = vmatprep.subr.bf16.mxu0 %v5384
    %6441 = vmatpush1.bf16.msra.mxu0 %v5383
    %6442 = vmatprep.subr.bf16.mxu0 %v5392
    %6443 = vmatpush1.bf16.msra.mxu0 %v5391
    %6444 = vmatprep.subr.bf16.mxu0 %v5400
    %6445 = vmatpush1.bf16.msra.mxu0 %v5399
    %6446 = vmatprep.subr.bf16.mxu0 %v5408
    %6447 = vmatpush1.bf16.msra.mxu0 %v5407
    %6448 = vmatprep.subr.bf16.mxu0 %v5416
    %6449 = vmatpush1.bf16.msra.mxu0 %v5415
    %6450 = vmatprep.subr.bf16.mxu0 %v5424
    %6451 = vmatpush1.bf16.msra.mxu0 %v5423
    %6452 = vmatprep.subr.bf16.mxu0 %v5432
    %6453 = vmatpush1.bf16.msra.mxu0 %v5431
    %6454 = vmatprep.subr.bf16.mxu0 %v5440
    %6455 = vmatpush1.bf16.msra.mxu0 %v5439
    %6456 = vmatprep.subr.bf16.mxu0 %v5448
    %6457 = vmatpush1.bf16.msra.mxu0 %v5447
    %6458 = vmatprep.subr.bf16.mxu0 %v5456
    %6459 = vmatpush1.bf16.msra.mxu0 %v5455
    %6460 = vmatprep.subr.bf16.mxu0 %v5464
    %6461 = vmatpush1.bf16.msra.mxu0 %v5463
    %6462 = vmatprep.mubr.bf16.mxu0 %v2864
    %6463 = vmatmul.mubr.bf16.gmra.mrb[0].mxu0 %v2863
    %v6464 = vpop.f32.mrb[0].mxu0
    %v6465 = vadd.f32 %v6424, %v6464
    %v6466 = vpop.f32.mrb[0].mxu0
    %v6467 = vadd.f32 %v6426, %v6466
    %v6468 = vpop.f32.mrb[0].mxu0
    %v6469 = vpop.f32.mrb[0].mxu0
    %6470 = vdwg.mxu0
    %6471 = vmatprep.subr.bf16.mxu0 %v4962
    %6472 = vmatpush1.bf16.msra.mxu0 %v4961
    %6473 = vmatprep.subr.bf16.mxu0 %v4970
    %6474 = vmatpush1.bf16.msra.mxu0 %v4969
    %6475 = vmatprep.subr.bf16.mxu0 %v4978
    %6476 = vmatpush1.bf16.msra.mxu0 %v4977
    %6477 = vmatprep.subr.bf16.mxu0 %v4986
    %6478 = vmatpush1.bf16.msra.mxu0 %v4985
    %6479 = vmatprep.subr.bf16.mxu0 %v4994
    %6480 = vmatpush1.bf16.msra.mxu0 %v4993
    %6481 = vmatprep.subr.bf16.mxu0 %v5002
    %6482 = vmatpush1.bf16.msra.mxu0 %v5001
    %6483 = vmatprep.subr.bf16.mxu0 %v5010
    %6484 = vmatpush1.bf16.msra.mxu0 %v5009
    %6485 = vmatprep.subr.bf16.mxu0 %v5018
    %6486 = vmatpush1.bf16.msra.mxu0 %v5017
    %6487 = vmatprep.subr.bf16.mxu0 %v5026
    %6488 = vmatpush1.bf16.msra.mxu0 %v5025
    %6489 = vmatprep.subr.bf16.mxu0 %v5034
    %6490 = vmatpush1.bf16.msra.mxu0 %v5033
    %6491 = vmatprep.subr.bf16.mxu0 %v5042
    %6492 = vmatpush1.bf16.msra.mxu0 %v5041
    %6493 = vmatprep.subr.bf16.mxu0 %v5050
    %6494 = vmatpush1.bf16.msra.mxu0 %v5049
    %6495 = vmatprep.subr.bf16.mxu0 %v5058
    %6496 = vmatpush1.bf16.msra.mxu0 %v5057
    %6497 = vmatprep.subr.bf16.mxu0 %v5066
    %6498 = vmatpush1.bf16.msra.mxu0 %v5065
    %6499 = vmatprep.subr.bf16.mxu0 %v5074
    %6500 = vmatpush1.bf16.msra.mxu0 %v5073
    %6501 = vmatprep.subr.bf16.mxu0 %v5082
    %6502 = vmatpush1.bf16.msra.mxu0 %v5081
    %6503 = vmatprep.mubr.bf16.mxu0 %v2858
    %6504 = vmatmul.mubr.bf16.gmra.mrb[0].mxu0 %v2857
    %v6505 = vpop.f32.mrb[0].mxu0
    %v6506 = vadd.f32 %v3406, %v6505
    %v6507 = vpop.f32.mrb[0].mxu0
    %v6508 = vadd.f32 %v3410, %v6507
    %v6509 = vpop.f32.mrb[0].mxu0
    %v6510 = vpop.f32.mrb[0].mxu0
    %6511 = vdwg.mxu0
    %6512 = vmatprep.subr.bf16.mxu0 %v5090
    %6513 = vmatpush1.bf16.msra.mxu0 %v5089
    %6514 = vmatprep.subr.bf16.mxu0 %v5098
    %6515 = vmatpush1.bf16.msra.mxu0 %v5097
    %6516 = vmatprep.subr.bf16.mxu0 %v5106
    %6517 = vmatpush1.bf16.msra.mxu0 %v5105
    %6518 = vmatprep.subr.bf16.mxu0 %v5114
    %6519 = vmatpush1.bf16.msra.mxu0 %v5113
    %6520 = vmatprep.subr.bf16.mxu0 %v5122
    %6521 = vmatpush1.bf16.msra.mxu0 %v5121
    %6522 = vmatprep.subr.bf16.mxu0 %v5130
    %6523 = vmatpush1.bf16.msra.mxu0 %v5129
    %6524 = vmatprep.subr.bf16.mxu0 %v5138
    %6525 = vmatpush1.bf16.msra.mxu0 %v5137
    %6526 = vmatprep.subr.bf16.mxu0 %v5146
    %6527 = vmatpush1.bf16.msra.mxu0 %v5145
    %6528 = vmatprep.subr.bf16.mxu0 %v5154
    %6529 = vmatpush1.bf16.msra.mxu0 %v5153
    %6530 = vmatprep.subr.bf16.mxu0 %v5162
    %6531 = vmatpush1.bf16.msra.mxu0 %v5161
    %6532 = vmatprep.subr.bf16.mxu0 %v5170
    %6533 = vmatpush1.bf16.msra.mxu0 %v5169
    %6534 = vmatprep.subr.bf16.mxu0 %v5178
    %6535 = vmatpush1.bf16.msra.mxu0 %v5177
    %6536 = vmatprep.subr.bf16.mxu0 %v5186
    %6537 = vmatpush1.bf16.msra.mxu0 %v5185
    %6538 = vmatprep.subr.bf16.mxu0 %v5194
    %6539 = vmatpush1.bf16.msra.mxu0 %v5193
    %6540 = vmatprep.subr.bf16.mxu0 %v5202
    %6541 = vmatpush1.bf16.msra.mxu0 %v5201
    %6542 = vmatprep.subr.bf16.mxu0 %v5210
    %6543 = vmatpush1.bf16.msra.mxu0 %v5209
    %6544 = vmatprep.mubr.bf16.mxu0 %v2860
    %6545 = vmatmul.mubr.bf16.gmra.mrb[0].mxu0 %v2859
    %v6546 = vpop.f32.mrb[0].mxu0
    %v6547 = vadd.f32 %v6506, %v6546
    %v6548 = vpop.f32.mrb[0].mxu0
    %v6549 = vadd.f32 %v6508, %v6548
    %v6550 = vpop.f32.mrb[0].mxu0
    %v6551 = vpop.f32.mrb[0].mxu0
    %6552 = vdwg.mxu0
    %6553 = vmatprep.subr.bf16.mxu0 %v5218
    %6554 = vmatpush1.bf16.msra.mxu0 %v5217
    %6555 = vmatprep.subr.bf16.mxu0 %v5226
    %6556 = vmatpush1.bf16.msra.mxu0 %v5225
    %6557 = vmatprep.subr.bf16.mxu0 %v5234
    %6558 = vmatpush1.bf16.msra.mxu0 %v5233
    %6559 = vmatprep.subr.bf16.mxu0 %v5242
    %6560 = vmatpush1.bf16.msra.mxu0 %v5241
    %6561 = vmatprep.subr.bf16.mxu0 %v5250
    %6562 = vmatpush1.bf16.msra.mxu0 %v5249
    %6563 = vmatprep.subr.bf16.mxu0 %v5258
    %6564 = vmatpush1.bf16.msra.mxu0 %v5257
    %6565 = vmatprep.subr.bf16.mxu0 %v5266
    %6566 = vmatpush1.bf16.msra.mxu0 %v5265
    %6567 = vmatprep.subr.bf16.mxu0 %v5274
    %6568 = vmatpush1.bf16.msra.mxu0 %v5273
    %6569 = vmatprep.subr.bf16.mxu0 %v5282
    %6570 = vmatpush1.bf16.msra.mxu0 %v5281
    %6571 = vmatprep.subr.bf16.mxu0 %v5290
    %6572 = vmatpush1.bf16.msra.mxu0 %v5289
    %6573 = vmatprep.subr.bf16.mxu0 %v5298
    %6574 = vmatpush1.bf16.msra.mxu0 %v5297
    %6575 = vmatprep.subr.bf16.mxu0 %v5306
    %6576 = vmatpush1.bf16.msra.mxu0 %v5305
    %6577 = vmatprep.subr.bf16.mxu0 %v5314
    %6578 = vmatpush1.bf16.msra.mxu0 %v5313
    %6579 = vmatprep.subr.bf16.mxu0 %v5322
    %6580 = vmatpush1.bf16.msra.mxu0 %v5321
    %6581 = vmatprep.subr.bf16.mxu0 %v5330
    %6582 = vmatpush1.bf16.msra.mxu0 %v5329
    %6583 = vmatprep.subr.bf16.mxu0 %v5338
    %6584 = vmatpush1.bf16.msra.mxu0 %v5337
    %6585 = vmatprep.mubr.bf16.mxu0 %v2862
    %6586 = vmatmul.mubr.bf16.gmra.mrb[0].mxu0 %v2861
    %v6587 = vpop.f32.mrb[0].mxu0
    %v6588 = vadd.f32 %v6547, %v6587
    %v6589 = vpop.f32.mrb[0].mxu0
    %v6590 = vadd.f32 %v6549, %v6589
    %v6591 = vpop.f32.mrb[0].mxu0
    %v6592 = vpop.f32.mrb[0].mxu0
    %6593 = vdwg.mxu0
    %6594 = vmatprep.subr.bf16.mxu0 %v5346
    %6595 = vmatpush1.bf16.msra.mxu0 %v5345
    %6596 = vmatprep.subr.bf16.mxu0 %v5354
    %6597 = vmatpush1.bf16.msra.mxu0 %v5353
    %6598 = vmatprep.subr.bf16.mxu0 %v5362
    %6599 = vmatpush1.bf16.msra.mxu0 %v5361
    %6600 = vmatprep.subr.bf16.mxu0 %v5370
    %6601 = vmatpush1.bf16.msra.mxu0 %v5369
    %6602 = vmatprep.subr.bf16.mxu0 %v5378
    %6603 = vmatpush1.bf16.msra.mxu0 %v5377
    %6604 = vmatprep.subr.bf16.mxu0 %v5386
    %6605 = vmatpush1.bf16.msra.mxu0 %v5385
    %6606 = vmatprep.subr.bf16.mxu0 %v5394
    %6607 = vmatpush1.bf16.msra.mxu0 %v5393
    %6608 = vmatprep.subr.bf16.mxu0 %v5402
    %6609 = vmatpush1.bf16.msra.mxu0 %v5401
    %6610 = vmatprep.subr.bf16.mxu0 %v5410
    %6611 = vmatpush1.bf16.msra.mxu0 %v5409
    %6612 = vmatprep.subr.bf16.mxu0 %v5418
    %6613 = vmatpush1.bf16.msra.mxu0 %v5417
    %6614 = vmatprep.subr.bf16.mxu0 %v5426
    %6615 = vmatpush1.bf16.msra.mxu0 %v5425
    %6616 = vmatprep.subr.bf16.mxu0 %v5434
    %6617 = vmatpush1.bf16.msra.mxu0 %v5433
    %6618 = vmatprep.subr.bf16.mxu0 %v5442
    %6619 = vmatpush1.bf16.msra.mxu0 %v5441
    %6620 = vmatprep.subr.bf16.mxu0 %v5450
    %6621 = vmatpush1.bf16.msra.mxu0 %v5449
    %6622 = vmatprep.subr.bf16.mxu0 %v5458
    %6623 = vmatpush1.bf16.msra.mxu0 %v5457
    %6624 = vmatprep.subr.bf16.mxu0 %v5466
    %6625 = vmatpush1.bf16.msra.mxu0 %v5465
    %6626 = vmatprep.mubr.bf16.mxu0 %v2864
    %6627 = vmatmul.mubr.bf16.gmra.mrb[0].mxu0 %v2863
    %v6628 = vpop.f32.mrb[0].mxu0
    %v6629 = vadd.f32 %v6588, %v6628
    %v6630 = vpop.f32.mrb[0].mxu0
    %v6631 = vadd.f32 %v6590, %v6630
    %v6632 = vpop.f32.mrb[0].mxu0
    %v6633 = vpop.f32.mrb[0].mxu0
    %6634 = vdwg.mxu0
    %v6635 = vtanh.pop %v6137
    %v6636 = vtanh.pop %v6139
    %v6637 = vtanh.pop %v6301
    %v6638 = vtanh.pop %v6303
    %v6639 = vtanh.pop %v6465
    %v6640 = vtanh.pop %v6467
    %v6641 = vtanh.pop %v6629
    %v6642 = vtanh.pop %v6631
    %6643 = vst [vmem:[#allocation20] sm:$0xff] %v6635
    %6644 = vst [vmem:[#allocation20 + $0x8] sm:$0xff] %v6636
    %6645 = vst [vmem:[#allocation20 + $0x10] sm:$0xff] %v6637
    %6646 = vst [vmem:[#allocation20 + $0x18] sm:$0xff] %v6638
    %6647 = vst [vmem:[#allocation20 + $0x20] sm:$0xff] %v6639
    %6648 = vst [vmem:[#allocation20 + $0x28] sm:$0xff] %v6640
    %6649 = vst [vmem:[#allocation20 + $0x30] sm:$0xff] %v6641
    %6650 = vst [vmem:[#allocation20 + $0x38] sm:$0xff] %v6642
    // Predicated region
    $region90: #{tpu_custom_call.1} parent=1 // pred_check
      _
    $region91: #{tpu_custom_call.1} parent=1 // pred_check_branch
      %6652 = sbr.rel (0) target = $region93
    $region92: #{tpu_custom_call.1} parent=1 // pred_region
      %s6654 = ssub.s32 1024, 1024
      %6655 = vsyncadd [#allocation4], %s6654
      %s6657 = sshll.u32 [#allocation20], 4
      %s6658 = int_to_ptr.vmem [resolvable:$true] %s6657
      %6660 = dma.vmem_to_hbm [thread:$0]  %s6658, 1024, %s11, [#allocation4]
    $region93: #{tpu_custom_call.1} parent=1 // pred_fallthru
      _
    // Predicated region
    $region94: #{tpu_custom_call.1} parent=1 // pred_check
      _
    $region95: #{tpu_custom_call.1} parent=1 // pred_check_branch
      %6662 = sbr.rel (0) target = $region97
    $region96: #{tpu_custom_call.1} parent=1 // pred_region
      %6663 = dma.done [#allocation4], 1024
    $region97: #{tpu_custom_call.1} parent=1 // pred_fallthru
      _
    %6664 = vsyncpa [#allocation3], 1
    %6665 = vsyncpa [#allocation6], 1
    %6666 = vsyncpa [#allocation9], 1
    %6667 = vsyncpa [#allocation12], 1
    %6668 = vsyncpa [#allocation15], 1
    %6669 = vsyncpa [#allocation18], 1
    %6670 = vsyncpa [#allocation4], 1

</llo_original>
